<compile_context>
chip_gen: v7x
topology: tpu7x:2x2x1
jax: 0.10.0
libtpu: 0.0.40
codegen_flags: <defaults>
</compile_context>

<pallas_src>
import functools

import numpy as np
import jax
import jax.numpy as jnp
from jax.experimental import pallas as pl
from jax.experimental.pallas import tpu as pltpu


# ------------------------------ fused block kernel ------------------------------
def _block_kernel(x_ref, wqkv_ref, bqkv_ref, wo_ref, w1_ref, w2_ref,
                  vecc_ref, b1_ref, bhm_ref, am_ref, o_ref, *, heads, eps):
    C = x_ref.shape[1]                      # hidden size
    N = x_ref.shape[2]                      # tokens = D*W*H
    NB = wo_ref.shape[0] // C               # number of attention branches (3)
    G = NB * C                              # concatenated branch width (96)
    BH = NB * heads                         # stacked (branch, head) blocks (12)
    hd = C // heads
    scale = float(hd) ** -0.5
    f32 = jnp.float32
    mxu_dt = wqkv_ref.dtype                 # bf16

    # packed (1, C) vectors: ln1_g, ln1_b, ln2_g, ln2_b, sum-of-out-proj-bias, mlp b2
    vc = vecc_ref[...]
    ln1_g, ln1_b = vc[0:1], vc[1:2]
    ln2_g, ln2_b = vc[2:3], vc[3:4]
    bo_sum, b2 = vc[4:5], vc[5:6]

    def layernorm(t, g, b):
        mu = jnp.mean(t, axis=-1, keepdims=True)
        d = t - mu
        var = jnp.mean(d * d, axis=-1, keepdims=True)
        return d * jax.lax.rsqrt(var + eps) * g + b

    # b c (d w h) -> (d w h) c   (tokens, d-major order)
    tok = jnp.transpose(x_ref[0]).astype(f32)                     # (N, C)

    # ---- attention_norm (shared by all three branches) ----
    xn = layernorm(tok, ln1_g, ln1_b)

    # ---- fused QKV for all three branches: one (N,C)@(C,9C) matmul ----
    qkv = jnp.dot(xn.astype(mxu_dt), wqkv_ref[...],
                  preferred_element_type=f32) + bqkv_ref[...]     # (N, 9C)
    q_all = qkv[:, 0 * G:1 * G]                                   # [q_v | q_h | q_w]
    k_all = qkv[:, 1 * G:2 * G]
    v_all = qkv[:, 2 * G:3 * G]

    # ---- stack heads & branches along M: block (b, h) = q masked to its lanes ----
    bhm = bhm_ref[...]                                            # (BH, G) 0/1
    q_stack = (q_all[None, :, :] * bhm[:, None, :]).reshape(BH * N, G)

    # ---- ONE score matmul for all branches/heads: (BH*N, G) @ (G, N) ----
    s = jax.lax.dot_general(q_stack.astype(mxu_dt), k_all.astype(mxu_dt),
                            (((1,), (1,)), ((), ())),
                            preferred_element_type=f32)           # (BH*N, N)
    # additive mask: cross-group -> -1e9, window branch also carries rel-pos bias
    s = s * scale + am_ref[...]

    # ---- ONE softmax over the stacked scores ----
    s = s - jnp.max(s, axis=-1, keepdims=True)
    p = jnp.exp(s)
    p = p * pl.reciprocal(jnp.sum(p, axis=-1, keepdims=True), approx=True)

    # ---- ONE P@V matmul, then recombine head/branch blocks on the VPU ----
    pv = jnp.dot(p.astype(mxu_dt), v_all.astype(mxu_dt),
                 preferred_element_type=f32)                      # (BH*N, G)
    out_cat = jnp.sum(pv.reshape(BH, N, G) * bhm[:, None, :], axis=0)   # (N, G)

    # ---- ONE output projection for all three branches + summed biases ----
    att = jnp.dot(out_cat.astype(mxu_dt), wo_ref[...],
                  preferred_element_type=f32) + bo_sum            # (N, C)
    x_att = att + tok                                             # attn sum + residual

    # ---- ffn_norm -> MLP -> residual ----
    xn2 = layernorm(x_att, ln2_g, ln2_b)
    hmid = jnp.dot(xn2.astype(mxu_dt), w1_ref[...],
                   preferred_element_type=f32) + b1_ref[...]
    hmid = jax.nn.gelu(hmid)                                      # tanh-approx GELU
    y = jnp.dot(hmid.astype(mxu_dt), w2_ref[...],
                preferred_element_type=f32) + b2
    y = y + x_att

    # (d w h) c -> c (d w h)   (matches x.transpose(-1, -2).view(...))
    o_ref[0] = jnp.transpose(y).astype(o_ref.dtype)


# ------------------------ masks / relative-position bias -------------------------
def make_relative_bias(window_size, key):
    """get_relative_distances + 3-D pos_embedding gather -> (WS, WS) intra-window bias."""
    idx = np.array([[a, b, c]
                    for a in range(window_size[0])
                    for b in range(window_size[1])
                    for c in range(window_size[2])], dtype=np.int32)
    rel = idx[None, :, :] - idx[:, None, :]
    rel = rel - rel.min()
    mx = int(rel.max())
    table = jax.random.normal(key, (mx + 1, mx + 1, mx + 1), jnp.float32)
    return table[rel[:, :, 0], rel[:, :, 1], rel[:, :, 2]]        # (WS, WS)


def build_attention_masks(D, W, H, window_size, rel_bias, neg=-1e9):
    """Additive (N, N) masks realizing the three attention groupings on d-major tokens."""
    N = D * W * H
    n = np.arange(N)
    d_i = n // (W * H)
    w_i = (n // H) % W
    h_i = n % H

    v_same = d_i[:, None] == d_i[None, :]                         # '(b d) (w h) c'
    wh = w_i * H + h_i
    h_same = wh[:, None] == wh[None, :]                           # '(b w h) d c'

    wd, ww, wh_ = window_size
    win = ((d_i // wd) * ((W // ww) * (H // wh_))
           + (w_i // ww) * (H // wh_) + (h_i // wh_))
    w_same = win[:, None] == win[None, :]
    intra = (d_i % wd) * (ww * wh_) + (w_i % ww) * wh_ + (h_i % wh_)

    v_mask = jnp.where(jnp.asarray(v_same), 0.0, neg).astype(jnp.float32)
    h_mask = jnp.where(jnp.asarray(h_same), 0.0, neg).astype(jnp.float32)
    bias_full = rel_bias[intra[:, None], intra[None, :]]          # (N, N) gather
    w_mask = jnp.where(jnp.asarray(w_same), bias_full, neg).astype(jnp.float32)
    return v_mask, h_mask, w_mask


# ------------------------------------ params -------------------------------------
def init_params(key, cfg):
    C = cfg["hidden_size"]
    M = cfg["mlp_dim"]
    heads = cfg["num_heads"]
    hd = C // heads
    D, W, H = (cfg["img_size"][i] // cfg["patch_size"][i] for i in range(3))
    keys = jax.random.split(key, 32)
    ki = iter(keys)

    def w(shape, std=0.02):
        return jax.random.normal(next(ki), shape, jnp.float32) * std

    zero_c = jnp.zeros((1, C), jnp.float32)
    # per-branch params stored (in, out); branches = [v_attention, h_attention, window]
    wq = [w((C, C)) for _ in range(3)]
    wk = [w((C, C)) for _ in range(3)]
    wv = [w((C, C)) for _ in range(3)]
    bq = [w((1, C)), w((1, C)), zero_c]       # WindowAttention.to_qkv(bias=False)
    bk = [w((1, C)), w((1, C)), zero_c]
    bv = [w((1, C)), w((1, C)), zero_c]
    wo = [w((C, C)) for _ in range(3)]
    bo = [w((1, C)) for _ in range(3)]

    # fused weights:  [Q_v|Q_h|Q_w | K_v|K_h|K_w | V_v|V_h|V_w]  and stacked out-proj
    wqkv = jnp.concatenate(wq + wk + wv, axis=1)                  # (C, 9C)
    bqkv = jnp.concatenate(bq + bk + bv, axis=1)                  # (1, 9C)
    wo_all = jnp.concatenate(wo, axis=0)                          # (3C, C)
    bo_sum = bo[0] + bo[1] + bo[2]

    w1, b1, w2, b2 = w((C, M)), w((1, M)), w((M, C)), w((1, C))

    # pack all (1, C) vectors into one operand: ln1_g, ln1_b, ln2_g, ln2_b, bo_sum, b2
    vec_c = jnp.concatenate([jnp.ones((1, C), jnp.float32), jnp.zeros((1, C), jnp.float32),
                             jnp.ones((1, C), jnp.float32), jnp.zeros((1, C), jnp.float32),
                             bo_sum, b2], axis=0)                 # (6, C)

    # stacked additive attention mask for (branch, head) blocks: (3*heads*N, N)
    rel_bias = make_relative_bias(cfg["window_size"], next(ki))
    v_mask, h_mask, w_mask = build_attention_masks(D, W, H, cfg["window_size"], rel_bias)
    att_mask = jnp.concatenate([jnp.tile(m, (heads, 1)) for m in (v_mask, h_mask, w_mask)],
                               axis=0)

    # (branch, head) lane-selection masks over the 3C concatenated channel space
    lane = np.arange(3 * C)
    rows = []
    for b in range(3):
        for h in range(heads):
            lo = b * C + h * hd
            rows.append(((lane >= lo) & (lane < lo + hd)).astype(np.float32))
    bh_mask = jnp.asarray(np.stack(rows, axis=0))                 # (3*heads, 3C)

    return {
        "wqkv": wqkv.astype(jnp.bfloat16),
        "bqkv": bqkv,
        "wo": wo_all.astype(jnp.bfloat16),
        "w1": w1.astype(jnp.bfloat16),
        "w2": w2.astype(jnp.bfloat16),
        "vec_c": vec_c,
        "b1": b1,
        "bh_mask": bh_mask,
        "att_mask": att_mask,
    }


# --------------------------------- full forward -----------------------------------
def multi_att_block(x, params, cfg):
    """x: (B, C, D, W, H) float32 -> (B, C, D, W, H).  One fused pallas_call."""
    B, C, D, W, H = x.shape
    N = D * W * H

    x_cn = x.reshape(B, C, N)                    # b c d w h -> b c (d w h): free view

    weight_args = [
        params["wqkv"], params["bqkv"], params["wo"], params["w1"], params["w2"],
        params["vec_c"], params["b1"], params["bh_mask"], params["att_mask"],
    ]
    in_specs = [pl.BlockSpec((1, C, N), lambda i: (i, 0, 0))]
    for a in weight_args:                        # full-array broadcast blocks
        in_specs.append(pl.BlockSpec(a.shape, lambda i, nd=a.ndim: (0,) * nd))

    out = pl.pallas_call(
        functools.partial(_block_kernel, heads=cfg["num_heads"], eps=1e-6),
        out_shape=jax.ShapeDtypeStruct((B, C, N), x.dtype),
        grid=(B,),
        in_specs=in_specs,
        out_specs=pl.BlockSpec((1, C, N), lambda i: (i, 0, 0)),
        compiler_params=pltpu.CompilerParams(dimension_semantics=("parallel",)),
    )(x_cn, *weight_args)

    return out.reshape(B, C, D, W, H)


# -------------------------------------- main ---------------------------------------
if __name__ == "__main__":
    cfg = dict(
        hidden_size=32,
        num_heads=4,
        window_size=(2, 2, 2),
        mlp_dim=64,
        img_size=(16, 16, 16),
        patch_size=(4, 4, 4),                   # out_size = img_size // patch_size = (4,4,4)
    )
    B, C = 2, cfg["hidden_size"]
    D, W, H = (cfg["img_size"][i] // cfg["patch_size"][i] for i in range(3))

    x = jax.random.normal(jax.random.PRNGKey(0), (B, C, D, W, H), jnp.float32)
    params = init_params(jax.random.PRNGKey(42), cfg)

    fwd = jax.jit(lambda xx, pp: multi_att_block(xx, pp, cfg))
    out = jax.block_until_ready(fwd(x, params))

    assert out.shape == (B, C, D, W, H), out.shape
    assert bool(jnp.all(jnp.isfinite(out)))
    print("KERNEL_OK")
</pallas_src>

<mosaic_0001>
module attributes {stable_mosaic.version = 11 : i64} {
  func.func @_block_kernel(%arg0: i32, %arg1: memref<1x32x64xf32, #tpu.memory_space<vmem>>, %arg2: memref<32x288xbf16, #tpu.memory_space<vmem>>, %arg3: memref<1x288xf32, #tpu.memory_space<vmem>>, %arg4: memref<96x32xbf16, #tpu.memory_space<vmem>>, %arg5: memref<32x64xbf16, #tpu.memory_space<vmem>>, %arg6: memref<64x32xbf16, #tpu.memory_space<vmem>>, %arg7: memref<6x32xf32, #tpu.memory_space<vmem>>, %arg8: memref<1x64xf32, #tpu.memory_space<vmem>>, %arg9: memref<12x96xf32, #tpu.memory_space<vmem>>, %arg10: memref<768x64xf32, #tpu.memory_space<vmem>>, %arg11: memref<1x32x64xf32, #tpu.memory_space<vmem>>) attributes {dimension_semantics = [#tpu.dimension_semantics<parallel>], iteration_bounds = array<i64: 2>, scalar_prefetch = 0 : i64, scratch_operands = 0 : i64, tpu.core_type = #tpu.core_type<tc>, window_params = [{transform_indices = @transform_0, window_bounds = array<i64: 1, 32, 64>}, {pipeline_mode = #tpu.pipeline_mode<synchronous>, transform_indices = @transform_1, window_bounds = array<i64: 32, 288>}, {pipeline_mode = #tpu.pipeline_mode<synchronous>, transform_indices = @transform_2, window_bounds = array<i64: 1, 288>}, {pipeline_mode = #tpu.pipeline_mode<synchronous>, transform_indices = @transform_3, window_bounds = array<i64: 96, 32>}, {pipeline_mode = #tpu.pipeline_mode<synchronous>, transform_indices = @transform_4, window_bounds = array<i64: 32, 64>}, {pipeline_mode = #tpu.pipeline_mode<synchronous>, transform_indices = @transform_5, window_bounds = array<i64: 64, 32>}, {pipeline_mode = #tpu.pipeline_mode<synchronous>, transform_indices = @transform_6, window_bounds = array<i64: 6, 32>}, {pipeline_mode = #tpu.pipeline_mode<synchronous>, transform_indices = @transform_7, window_bounds = array<i64: 1, 64>}, {pipeline_mode = #tpu.pipeline_mode<synchronous>, transform_indices = @transform_8, window_bounds = array<i64: 12, 96>}, {pipeline_mode = #tpu.pipeline_mode<synchronous>, transform_indices = @transform_9, window_bounds = array<i64: 768, 64>}, {transform_indices = @transform_10, window_bounds = array<i64: 1, 32, 64>}]} {
    %c0 = arith.constant 0 : index
    %c0_0 = arith.constant 0 : index
    %0 = vector.load %arg7[%c0, %c0_0] : memref<6x32xf32, #tpu.memory_space<vmem>>, vector<6x32xf32>
    %1 = vector.extract_strided_slice %0 {offsets = [0, 0], sizes = [1, 32], strides = [1, 1]} : vector<6x32xf32> to vector<1x32xf32>
    %2 = vector.extract_strided_slice %0 {offsets = [1, 0], sizes = [1, 32], strides = [1, 1]} : vector<6x32xf32> to vector<1x32xf32>
    %3 = vector.extract_strided_slice %0 {offsets = [2, 0], sizes = [1, 32], strides = [1, 1]} : vector<6x32xf32> to vector<1x32xf32>
    %4 = vector.extract_strided_slice %0 {offsets = [3, 0], sizes = [1, 32], strides = [1, 1]} : vector<6x32xf32> to vector<1x32xf32>
    %5 = vector.extract_strided_slice %0 {offsets = [4, 0], sizes = [1, 32], strides = [1, 1]} : vector<6x32xf32> to vector<1x32xf32>
    %6 = vector.extract_strided_slice %0 {offsets = [5, 0], sizes = [1, 32], strides = [1, 1]} : vector<6x32xf32> to vector<1x32xf32>
    %c0_1 = arith.constant 0 : index
    %c0_2 = arith.constant 0 : index
    %c0_3 = arith.constant 0 : index
    %7 = vector.load %arg1[%c0_1, %c0_2, %c0_3] : memref<1x32x64xf32, #tpu.memory_space<vmem>>, vector<1x32x64xf32>
    %8 = vector.shape_cast %7 : vector<1x32x64xf32> to vector<32x64xf32>
    %9 = tpu.transpose %8, [1, 0] : vector<32x64xf32> -> vector<64x32xf32>
    %cst = arith.constant dense<0.000000e+00> : vector<64xf32>
    %10 = vector.multi_reduction <add>, %9, %cst [1] : vector<64x32xf32> to vector<64xf32>
    %11 = vector.shape_cast %10 : vector<64xf32> to vector<64x1xf32>
    %cst_4 = arith.constant 3.200000e+01 : f32
    %12 = vector.broadcast %cst_4 : f32 to vector<64x1xf32>
    %13 = arith.divf %11, %12 : vector<64x1xf32>
    %14 = vector.broadcast %13 : vector<64x1xf32> to vector<64x32xf32>
    %15 = arith.subf %9, %14 : vector<64x32xf32>
    %16 = arith.mulf %15, %15 : vector<64x32xf32>
    %cst_5 = arith.constant dense<0.000000e+00> : vector<64xf32>
    %17 = vector.multi_reduction <add>, %16, %cst_5 [1] : vector<64x32xf32> to vector<64xf32>
    %18 = vector.shape_cast %17 : vector<64xf32> to vector<64x1xf32>
    %cst_6 = arith.constant 3.200000e+01 : f32
    %19 = vector.broadcast %cst_6 : f32 to vector<64x1xf32>
    %20 = arith.divf %18, %19 : vector<64x1xf32>
    %cst_7 = arith.constant 9.99999997E-7 : f32
    %21 = vector.broadcast %cst_7 : f32 to vector<64x1xf32>
    %22 = arith.addf %20, %21 : vector<64x1xf32>
    %23 = math.rsqrt %22 : vector<64x1xf32>
    %24 = vector.broadcast %23 : vector<64x1xf32> to vector<64x32xf32>
    %25 = arith.mulf %15, %24 : vector<64x32xf32>
    %26 = vector.broadcast %1 : vector<1x32xf32> to vector<64x32xf32>
    %27 = arith.mulf %25, %26 : vector<64x32xf32>
    %28 = vector.broadcast %2 : vector<1x32xf32> to vector<64x32xf32>
    %29 = arith.addf %27, %28 : vector<64x32xf32>
    %30 = arith.truncf %29 : vector<64x32xf32> to vector<64x32xbf16>
    %c0_8 = arith.constant 0 : index
    %c0_9 = arith.constant 0 : index
    %31 = vector.load %arg2[%c0_8, %c0_9] : memref<32x288xbf16, #tpu.memory_space<vmem>>, vector<32x288xbf16>
    %cst_10 = arith.constant dense<0.000000e+00> : vector<64x288xf32>
    %32 = tpu.matmul %30, %31, %cst_10 {dimension_numbers = #tpu.dot_dimension_numbers<[1], [0], [0], [1], [0, 0, 1, 1], [], []>} : vector<64x32xbf16>, vector<32x288xbf16>, vector<64x288xf32> -> vector<64x288xf32>
    %c0_11 = arith.constant 0 : index
    %c0_12 = arith.constant 0 : index
    %33 = vector.load %arg3[%c0_11, %c0_12] : memref<1x288xf32, #tpu.memory_space<vmem>>, vector<1x288xf32>
    %34 = vector.broadcast %33 : vector<1x288xf32> to vector<64x288xf32>
    %35 = arith.addf %32, %34 : vector<64x288xf32>
    %36 = vector.extract_strided_slice %35 {offsets = [0, 0], sizes = [64, 96], strides = [1, 1]} : vector<64x288xf32> to vector<64x96xf32>
    %37 = vector.extract_strided_slice %35 {offsets = [0, 96], sizes = [64, 96], strides = [1, 1]} : vector<64x288xf32> to vector<64x96xf32>
    %38 = vector.extract_strided_slice %35 {offsets = [0, 192], sizes = [64, 96], strides = [1, 1]} : vector<64x288xf32> to vector<64x96xf32>
    %c0_13 = arith.constant 0 : index
    %c0_14 = arith.constant 0 : index
    %39 = vector.load %arg9[%c0_13, %c0_14] : memref<12x96xf32, #tpu.memory_space<vmem>>, vector<12x96xf32>
    %40 = vector.shape_cast %36 : vector<64x96xf32> to vector<1x64x96xf32>
    %41 = vector.shape_cast %39 : vector<12x96xf32> to vector<12x1x96xf32>
    %42 = vector.broadcast %40 : vector<1x64x96xf32> to vector<12x64x96xf32>
    %43 = vector.broadcast %41 : vector<12x1x96xf32> to vector<12x64x96xf32>
    %44 = arith.mulf %42, %43 : vector<12x64x96xf32>
    %45 = vector.shape_cast %44 : vector<12x64x96xf32> to vector<768x96xf32>
    %46 = arith.truncf %45 : vector<768x96xf32> to vector<768x96xbf16>
    %47 = arith.truncf %37 : vector<64x96xf32> to vector<64x96xbf16>
    %cst_15 = arith.constant dense<0.000000e+00> : vector<768x64xf32>
    %48 = tpu.matmul %46, %47, %cst_15 {dimension_numbers = #tpu.dot_dimension_numbers<[1], [1], [0], [0], [0, 0, 1, 0], [], []>} : vector<768x96xbf16>, vector<64x96xbf16>, vector<768x64xf32> -> vector<768x64xf32>
    %cst_16 = arith.constant 0.353553385 : f32
    %49 = vector.broadcast %cst_16 : f32 to vector<768x64xf32>
    %50 = arith.mulf %48, %49 : vector<768x64xf32>
    %c0_17 = arith.constant 0 : index
    %c0_18 = arith.constant 0 : index
    %51 = vector.load %arg10[%c0_17, %c0_18] : memref<768x64xf32, #tpu.memory_space<vmem>>, vector<768x64xf32>
    %52 = arith.addf %50, %51 : vector<768x64xf32>
    %cst_19 = arith.constant dense<0xFF800000> : vector<768xf32>
    %53 = vector.multi_reduction <maximumf>, %52, %cst_19 [1] : vector<768x64xf32> to vector<768xf32>
    %54 = vector.shape_cast %53 : vector<768xf32> to vector<768x1xf32>
    %55 = vector.broadcast %54 : vector<768x1xf32> to vector<768x64xf32>
    %56 = arith.subf %52, %55 : vector<768x64xf32>
    %57 = math.exp %56 : vector<768x64xf32>
    %cst_20 = arith.constant dense<0.000000e+00> : vector<768xf32>
    %58 = vector.multi_reduction <add>, %57, %cst_20 [1] : vector<768x64xf32> to vector<768xf32>
    %59 = vector.shape_cast %58 : vector<768xf32> to vector<768x1xf32>
    %60 = tpu.reciprocal %59 {approx = true} : vector<768x1xf32> -> vector<768x1xf32>
    %61 = vector.broadcast %60 : vector<768x1xf32> to vector<768x64xf32>
    %62 = arith.mulf %57, %61 : vector<768x64xf32>
    %63 = arith.truncf %62 : vector<768x64xf32> to vector<768x64xbf16>
    %64 = arith.truncf %38 : vector<64x96xf32> to vector<64x96xbf16>
    %cst_21 = arith.constant dense<0.000000e+00> : vector<768x96xf32>
    %65 = tpu.matmul %63, %64, %cst_21 {dimension_numbers = #tpu.dot_dimension_numbers<[1], [0], [0], [1], [0, 0, 1, 1], [], []>} : vector<768x64xbf16>, vector<64x96xbf16>, vector<768x96xf32> -> vector<768x96xf32>
    %66 = vector.shape_cast %65 : vector<768x96xf32> to vector<12x64x96xf32>
    %67 = vector.shape_cast %39 : vector<12x96xf32> to vector<12x1x96xf32>
    %68 = vector.broadcast %67 : vector<12x1x96xf32> to vector<12x64x96xf32>
    %69 = arith.mulf %66, %68 : vector<12x64x96xf32>
    %cst_22 = arith.constant dense<0.000000e+00> : vector<64x96xf32>
    %70 = vector.multi_reduction <add>, %69, %cst_22 [0] : vector<12x64x96xf32> to vector<64x96xf32>
    %71 = arith.truncf %70 : vector<64x96xf32> to vector<64x96xbf16>
    %c0_23 = arith.constant 0 : index
    %c0_24 = arith.constant 0 : index
    %72 = vector.load %arg4[%c0_23, %c0_24] : memref<96x32xbf16, #tpu.memory_space<vmem>>, vector<96x32xbf16>
    %cst_25 = arith.constant dense<0.000000e+00> : vector<64x32xf32>
    %73 = tpu.matmul %71, %72, %cst_25 {dimension_numbers = #tpu.dot_dimension_numbers<[1], [0], [0], [1], [0, 0, 1, 1], [], []>} : vector<64x96xbf16>, vector<96x32xbf16>, vector<64x32xf32> -> vector<64x32xf32>
    %74 = vector.broadcast %5 : vector<1x32xf32> to vector<64x32xf32>
    %75 = arith.addf %73, %74 : vector<64x32xf32>
    %76 = arith.addf %75, %9 : vector<64x32xf32>
    %cst_26 = arith.constant dense<0.000000e+00> : vector<64xf32>
    %77 = vector.multi_reduction <add>, %76, %cst_26 [1] : vector<64x32xf32> to vector<64xf32>
    %78 = vector.shape_cast %77 : vector<64xf32> to vector<64x1xf32>
    %cst_27 = arith.constant 3.200000e+01 : f32
    %79 = vector.broadcast %cst_27 : f32 to vector<64x1xf32>
    %80 = arith.divf %78, %79 : vector<64x1xf32>
    %81 = vector.broadcast %80 : vector<64x1xf32> to vector<64x32xf32>
    %82 = arith.subf %76, %81 : vector<64x32xf32>
    %83 = arith.mulf %82, %82 : vector<64x32xf32>
    %cst_28 = arith.constant dense<0.000000e+00> : vector<64xf32>
    %84 = vector.multi_reduction <add>, %83, %cst_28 [1] : vector<64x32xf32> to vector<64xf32>
    %85 = vector.shape_cast %84 : vector<64xf32> to vector<64x1xf32>
    %cst_29 = arith.constant 3.200000e+01 : f32
    %86 = vector.broadcast %cst_29 : f32 to vector<64x1xf32>
    %87 = arith.divf %85, %86 : vector<64x1xf32>
    %cst_30 = arith.constant 9.99999997E-7 : f32
    %88 = vector.broadcast %cst_30 : f32 to vector<64x1xf32>
    %89 = arith.addf %87, %88 : vector<64x1xf32>
    %90 = math.rsqrt %89 : vector<64x1xf32>
    %91 = vector.broadcast %90 : vector<64x1xf32> to vector<64x32xf32>
    %92 = arith.mulf %82, %91 : vector<64x32xf32>
    %93 = vector.broadcast %3 : vector<1x32xf32> to vector<64x32xf32>
    %94 = arith.mulf %92, %93 : vector<64x32xf32>
    %95 = vector.broadcast %4 : vector<1x32xf32> to vector<64x32xf32>
    %96 = arith.addf %94, %95 : vector<64x32xf32>
    %97 = arith.truncf %96 : vector<64x32xf32> to vector<64x32xbf16>
    %c0_31 = arith.constant 0 : index
    %c0_32 = arith.constant 0 : index
    %98 = vector.load %arg5[%c0_31, %c0_32] : memref<32x64xbf16, #tpu.memory_space<vmem>>, vector<32x64xbf16>
    %cst_33 = arith.constant dense<0.000000e+00> : vector<64x64xf32>
    %99 = tpu.matmul %97, %98, %cst_33 {dimension_numbers = #tpu.dot_dimension_numbers<[1], [0], [0], [1], [0, 0, 1, 1], [], []>} : vector<64x32xbf16>, vector<32x64xbf16>, vector<64x64xf32> -> vector<64x64xf32>
    %c0_34 = arith.constant 0 : index
    %c0_35 = arith.constant 0 : index
    %100 = vector.load %arg8[%c0_34, %c0_35] : memref<1x64xf32, #tpu.memory_space<vmem>>, vector<1x64xf32>
    %101 = vector.broadcast %100 : vector<1x64xf32> to vector<64x64xf32>
    %102 = arith.addf %99, %101 : vector<64x64xf32>
    %103 = arith.mulf %102, %102 : vector<64x64xf32>
    %104 = arith.mulf %102, %103 : vector<64x64xf32>
    %cst_36 = arith.constant 4.471500e-02 : f32
    %105 = vector.broadcast %cst_36 : f32 to vector<64x64xf32>
    %106 = arith.mulf %105, %104 : vector<64x64xf32>
    %107 = arith.addf %102, %106 : vector<64x64xf32>
    %cst_37 = arith.constant 0.797884583 : f32
    %108 = vector.broadcast %cst_37 : f32 to vector<64x64xf32>
    %109 = arith.mulf %108, %107 : vector<64x64xf32>
    %110 = math.tanh %109 : vector<64x64xf32>
    %cst_38 = arith.constant 1.000000e+00 : f32
    %111 = vector.broadcast %cst_38 : f32 to vector<64x64xf32>
    %112 = arith.addf %111, %110 : vector<64x64xf32>
    %cst_39 = arith.constant 5.000000e-01 : f32
    %113 = vector.broadcast %cst_39 : f32 to vector<64x64xf32>
    %114 = arith.mulf %113, %112 : vector<64x64xf32>
    %115 = arith.mulf %102, %114 : vector<64x64xf32>
    %116 = arith.truncf %115 : vector<64x64xf32> to vector<64x64xbf16>
    %c0_40 = arith.constant 0 : index
    %c0_41 = arith.constant 0 : index
    %117 = vector.load %arg6[%c0_40, %c0_41] : memref<64x32xbf16, #tpu.memory_space<vmem>>, vector<64x32xbf16>
    %cst_42 = arith.constant dense<0.000000e+00> : vector<64x32xf32>
    %118 = tpu.matmul %116, %117, %cst_42 {dimension_numbers = #tpu.dot_dimension_numbers<[1], [0], [0], [1], [0, 0, 1, 1], [], []>} : vector<64x64xbf16>, vector<64x32xbf16>, vector<64x32xf32> -> vector<64x32xf32>
    %119 = vector.broadcast %6 : vector<1x32xf32> to vector<64x32xf32>
    %120 = arith.addf %118, %119 : vector<64x32xf32>
    %121 = arith.addf %120, %76 : vector<64x32xf32>
    %122 = tpu.transpose %121, [1, 0] : vector<64x32xf32> -> vector<32x64xf32>
    %c0_43 = arith.constant 0 : index
    %c0_44 = arith.constant 0 : index
    %c0_45 = arith.constant 0 : index
    %123 = vector.load %arg11[%c0_43, %c0_44, %c0_45] : memref<1x32x64xf32, #tpu.memory_space<vmem>>, vector<1x32x64xf32>
    %124 = vector.shape_cast %123 : vector<1x32x64xf32> to vector<32x64xf32>
    %125 = vector.shape_cast %122 : vector<32x64xf32> to vector<1x32x64xf32>
    tpu.vector_store %arg11[%c0_43, %c0_44, %c0_45], %125 {strides = array<i32>} : memref<1x32x64xf32, #tpu.memory_space<vmem>>, vector<1x32x64xf32>,
    return
  }
  func.func @transform_0(%arg0: i32) -> (i32, i32, i32) {
    %c0_i32 = arith.constant 0 : i32
    %c0_i32_0 = arith.constant 0 : i32
    %c0_i32_1 = arith.constant 0 : i32
    return %arg0, %c0_i32, %c0_i32_0 : i32, i32, i32
  }
  func.func @transform_1(%arg0: i32) -> (i32, i32) {
    %c0_i32 = arith.constant 0 : i32
    %c0_i32_0 = arith.constant 0 : i32
    %c0_i32_1 = arith.constant 0 : i32
    return %c0_i32, %c0_i32_0 : i32, i32
  }
  func.func @transform_2(%arg0: i32) -> (i32, i32) {
    %c0_i32 = arith.constant 0 : i32
    %c0_i32_0 = arith.constant 0 : i32
    %c0_i32_1 = arith.constant 0 : i32
    return %c0_i32, %c0_i32_0 : i32, i32
  }
  func.func @transform_3(%arg0: i32) -> (i32, i32) {
    %c0_i32 = arith.constant 0 : i32
    %c0_i32_0 = arith.constant 0 : i32
    %c0_i32_1 = arith.constant 0 : i32
    return %c0_i32, %c0_i32_0 : i32, i32
  }
  func.func @transform_4(%arg0: i32) -> (i32, i32) {
    %c0_i32 = arith.constant 0 : i32
    %c0_i32_0 = arith.constant 0 : i32
    %c0_i32_1 = arith.constant 0 : i32
    return %c0_i32, %c0_i32_0 : i32, i32
  }
  func.func @transform_5(%arg0: i32) -> (i32, i32) {
    %c0_i32 = arith.constant 0 : i32
    %c0_i32_0 = arith.constant 0 : i32
    %c0_i32_1 = arith.constant 0 : i32
    return %c0_i32, %c0_i32_0 : i32, i32
  }
  func.func @transform_6(%arg0: i32) -> (i32, i32) {
    %c0_i32 = arith.constant 0 : i32
    %c0_i32_0 = arith.constant 0 : i32
    %c0_i32_1 = arith.constant 0 : i32
    return %c0_i32, %c0_i32_0 : i32, i32
  }
  func.func @transform_7(%arg0: i32) -> (i32, i32) {
    %c0_i32 = arith.constant 0 : i32
    %c0_i32_0 = arith.constant 0 : i32
    %c0_i32_1 = arith.constant 0 : i32
    return %c0_i32, %c0_i32_0 : i32, i32
  }
  func.func @transform_8(%arg0: i32) -> (i32, i32) {
    %c0_i32 = arith.constant 0 : i32
    %c0_i32_0 = arith.constant 0 : i32
    %c0_i32_1 = arith.constant 0 : i32
    return %c0_i32, %c0_i32_0 : i32, i32
  }
  func.func @transform_9(%arg0: i32) -> (i32, i32) {
    %c0_i32 = arith.constant 0 : i32
    %c0_i32_0 = arith.constant 0 : i32
    %c0_i32_1 = arith.constant 0 : i32
    return %c0_i32, %c0_i32_0 : i32, i32
  }
  func.func @transform_10(%arg0: i32) -> (i32, i32, i32) {
    %c0_i32 = arith.constant 0 : i32
    %c0_i32_0 = arith.constant 0 : i32
    %c0_i32_1 = arith.constant 0 : i32
    return %arg0, %c0_i32, %c0_i32_0 : i32, i32, i32
  }
}

</mosaic_0001>

<llo_original>
// kernel: _lambda_.1
$region0: #{_lambda_.1}
  #allocation0 [shape = 'u32[]', space=smem, size = 0x4, offset = 0x4, fixed_abs, tag = 'smem constant byte address 0x4 - core index']
  #allocation1 [shape = 'u32[144,128]{1,0:T(1,128)}', space=vmem, size = 0x12000, scoped, tag = 'internal scratch']
  %s0 = inlined_call_operand.vmem [shape: f32[2,32,64], index: 0, kind: input, shape index: {}]
  %s1 = inlined_call_operand.vmem [shape: bf16[32,288], index: 1, kind: input, shape index: {}]
  %s2 = inlined_call_operand.vmem [shape: f32[1,288], index: 2, kind: input, shape index: {}]
  %s3 = inlined_call_operand.vmem [shape: bf16[96,32], index: 3, kind: input, shape index: {}]
  %s4 = inlined_call_operand.vmem [shape: bf16[32,64], index: 4, kind: input, shape index: {}]
  %s5 = inlined_call_operand.vmem [shape: bf16[64,32], index: 5, kind: input, shape index: {}]
  %s6 = inlined_call_operand.vmem [shape: f32[6,32], index: 6, kind: input, shape index: {}]
  %s7 = inlined_call_operand.vmem [shape: f32[1,64], index: 7, kind: input, shape index: {}]
  %s8 = inlined_call_operand.vmem [shape: f32[12,96], index: 8, kind: input, shape index: {}]
  %s9 = inlined_call_operand.vmem [shape: f32[768,64], index: 9, kind: input, shape index: {}]
  %s10 = inlined_call_operand.vmem [shape: f32[2,32,64], index: 10, kind: output, shape index: {}]
  %s11 = sld [smem:[#allocation0]]
  $region73: #{_lambda_.1} parent=0
    _
  %s13 = ssub.s32 1, %s11
  %s14 = scalar_select 0, %s13, %s11
  loop: start=0, step=1, limit=4
  $region2: #{_lambda_.1} parent=0 // loop_pre_header
    _
  $region3: #{_lambda_.1} parent=0 // loop_header
    %s16 = sphi 0, %s20
    %p17 = scmp.ge.s32.totalorder %s16, 4
    %s26 = sphi 0, %s28
    %s29 = sphi 0, %s26
    %s30 = sphi 0, %s29
    %s46 = sphi 0, %s30
    %s50 = sphi 0, %s50
    %s52 = sphi 0, %s50
    %s53 = sphi 0, %s52
    %s67 = sphi 0, %s53
    %s71 = sphi 0, %s71
    %s73 = sphi 0, %s71
    %s74 = sphi 0, %s73
    %s88 = sphi 0, %s74
    %s92 = sphi 0, %s92
    %s94 = sphi 0, %s92
    %s95 = sphi 0, %s94
    %s109 = sphi 0, %s95
    %s113 = sphi 0, %s113
    %s115 = sphi 0, %s113
    %s116 = sphi 0, %s115
    %s130 = sphi 0, %s116
    %s134 = sphi 0, %s134
    %s136 = sphi 0, %s134
    %s137 = sphi 0, %s136
    %s151 = sphi 0, %s137
    %s155 = sphi 0, %s155
    %s157 = sphi 0, %s155
    %s158 = sphi 0, %s157
    %s172 = sphi 0, %s158
    %s176 = sphi 0, %s176
    %s178 = sphi 0, %s176
    %s179 = sphi 0, %s178
    %s193 = sphi 0, %s179
    %s197 = sphi 0, %s197
    %s199 = sphi 0, %s197
    %s200 = sphi 0, %s199
    %s214 = sphi 0, %s200
    %s218 = sphi 0, %s218
    %s220 = sphi 0, %s218
    %s221 = sphi 0, %s220
    %s235 = sphi 0, %s221
    %s241 = sphi 0, %s243
    %s244 = sphi 0, %s241
    %s245 = sphi 0, %s244
    %s261 = sphi 0, %s245
  $region4: #{_lambda_.1} parent=0 // loop_header_branch
    %19 = sbr.rel (%p17) target = $region8
  $region5: #{_lambda_.1} parent=0 // loop_body
    %s21 = ssub.s32 %s16, 1
    %s22 = ssub.s32 %s16, 2
    %s23 = sadd.s32 %s16, 1
    %s24 = ssub.s32 %s16, %s23
    %p25 = scmp.eq.s32.totalorder %s24, 0
    %s27 = sadd.s32 %s26, 1
    %s28 = scalar_select %p25, %s26, %s27
    %p31 = pneg %p25
    %p32 = scmp.eq.s32.totalorder %s16, 1
    %p33 = por %p31, %p32
    %p34 = scmp.ne.s32.totalorder %s26, %s29
    %p35 = scmp.eq.s32.totalorder %s16, 0
    %p36 = por %p34, %p35
    %p37 = scmp.ne.s32.totalorder %s26, %s29
    %p38 = scmp.eq.s32.totalorder %s21, 1
    %p39 = por %p37, %p38
    %p40 = scmp.ne.s32.totalorder %s29, %s30
    %p41 = scmp.eq.s32.totalorder %s21, 0
    %p42 = por %p40, %p41
    %p43 = scmp.ne.s32.totalorder %s29, %s30
    %p44 = scmp.eq.s32.totalorder %s22, 1
    %p45 = por %p43, %p44
    %p47 = scmp.ne.s32.totalorder %s30, %s46
    %p48 = scmp.eq.s32.totalorder %s22, 0
    %p49 = por %p47, %p48
    %s51 = sadd.s32 %s50, 1
    %p54 = scmp.eq.s32.totalorder %s16, 1
    %p55 = scmp.ne.s32.totalorder %s50, %s52
    %p56 = scmp.eq.s32.totalorder %s16, 0
    %p57 = por %p55, %p56
    %p58 = scmp.ne.s32.totalorder %s50, %s52
    %p59 = scmp.eq.s32.totalorder %s21, 1
    %p60 = por %p58, %p59
    %p61 = scmp.ne.s32.totalorder %s52, %s53
    %p62 = scmp.eq.s32.totalorder %s21, 0
    %p63 = por %p61, %p62
    %p64 = scmp.ne.s32.totalorder %s52, %s53
    %p65 = scmp.eq.s32.totalorder %s22, 1
    %p66 = por %p64, %p65
    %p68 = scmp.ne.s32.totalorder %s53, %s67
    %p69 = scmp.eq.s32.totalorder %s22, 0
    %p70 = por %p68, %p69
    %s72 = sadd.s32 %s71, 1
    %p75 = scmp.eq.s32.totalorder %s16, 1
    %p76 = scmp.ne.s32.totalorder %s71, %s73
    %p77 = scmp.eq.s32.totalorder %s16, 0
    %p78 = por %p76, %p77
    %p79 = scmp.ne.s32.totalorder %s71, %s73
    %p80 = scmp.eq.s32.totalorder %s21, 1
    %p81 = por %p79, %p80
    %p82 = scmp.ne.s32.totalorder %s73, %s74
    %p83 = scmp.eq.s32.totalorder %s21, 0
    %p84 = por %p82, %p83
    %p85 = scmp.ne.s32.totalorder %s73, %s74
    %p86 = scmp.eq.s32.totalorder %s22, 1
    %p87 = por %p85, %p86
    %p89 = scmp.ne.s32.totalorder %s74, %s88
    %p90 = scmp.eq.s32.totalorder %s22, 0
    %p91 = por %p89, %p90
    %s93 = sadd.s32 %s92, 1
    %p96 = scmp.eq.s32.totalorder %s16, 1
    %p97 = scmp.ne.s32.totalorder %s92, %s94
    %p98 = scmp.eq.s32.totalorder %s16, 0
    %p99 = por %p97, %p98
    %p100 = scmp.ne.s32.totalorder %s92, %s94
    %p101 = scmp.eq.s32.totalorder %s21, 1
    %p102 = por %p100, %p101
    %p103 = scmp.ne.s32.totalorder %s94, %s95
    %p104 = scmp.eq.s32.totalorder %s21, 0
    %p105 = por %p103, %p104
    %p106 = scmp.ne.s32.totalorder %s94, %s95
    %p107 = scmp.eq.s32.totalorder %s22, 1
    %p108 = por %p106, %p107
    %p110 = scmp.ne.s32.totalorder %s95, %s109
    %p111 = scmp.eq.s32.totalorder %s22, 0
    %p112 = por %p110, %p111
    %s114 = sadd.s32 %s113, 1
    %p117 = scmp.eq.s32.totalorder %s16, 1
    %p118 = scmp.ne.s32.totalorder %s113, %s115
    %p119 = scmp.eq.s32.totalorder %s16, 0
    %p120 = por %p118, %p119
    %p121 = scmp.ne.s32.totalorder %s113, %s115
    %p122 = scmp.eq.s32.totalorder %s21, 1
    %p123 = por %p121, %p122
    %p124 = scmp.ne.s32.totalorder %s115, %s116
    %p125 = scmp.eq.s32.totalorder %s21, 0
    %p126 = por %p124, %p125
    %p127 = scmp.ne.s32.totalorder %s115, %s116
    %p128 = scmp.eq.s32.totalorder %s22, 1
    %p129 = por %p127, %p128
    %p131 = scmp.ne.s32.totalorder %s116, %s130
    %p132 = scmp.eq.s32.totalorder %s22, 0
    %p133 = por %p131, %p132
    %s135 = sadd.s32 %s134, 1
    %p138 = scmp.eq.s32.totalorder %s16, 1
    %p139 = scmp.ne.s32.totalorder %s134, %s136
    %p140 = scmp.eq.s32.totalorder %s16, 0
    %p141 = por %p139, %p140
    %p142 = scmp.ne.s32.totalorder %s134, %s136
    %p143 = scmp.eq.s32.totalorder %s21, 1
    %p144 = por %p142, %p143
    %p145 = scmp.ne.s32.totalorder %s136, %s137
    %p146 = scmp.eq.s32.totalorder %s21, 0
    %p147 = por %p145, %p146
    %p148 = scmp.ne.s32.totalorder %s136, %s137
    %p149 = scmp.eq.s32.totalorder %s22, 1
    %p150 = por %p148, %p149
    %p152 = scmp.ne.s32.totalorder %s137, %s151
    %p153 = scmp.eq.s32.totalorder %s22, 0
    %p154 = por %p152, %p153
    %s156 = sadd.s32 %s155, 1
    %p159 = scmp.eq.s32.totalorder %s16, 1
    %p160 = scmp.ne.s32.totalorder %s155, %s157
    %p161 = scmp.eq.s32.totalorder %s16, 0
    %p162 = por %p160, %p161
    %p163 = scmp.ne.s32.totalorder %s155, %s157
    %p164 = scmp.eq.s32.totalorder %s21, 1
    %p165 = por %p163, %p164
    %p166 = scmp.ne.s32.totalorder %s157, %s158
    %p167 = scmp.eq.s32.totalorder %s21, 0
    %p168 = por %p166, %p167
    %p169 = scmp.ne.s32.totalorder %s157, %s158
    %p170 = scmp.eq.s32.totalorder %s22, 1
    %p171 = por %p169, %p170
    %p173 = scmp.ne.s32.totalorder %s158, %s172
    %p174 = scmp.eq.s32.totalorder %s22, 0
    %p175 = por %p173, %p174
    %s177 = sadd.s32 %s176, 1
    %p180 = scmp.eq.s32.totalorder %s16, 1
    %p181 = scmp.ne.s32.totalorder %s176, %s178
    %p182 = scmp.eq.s32.totalorder %s16, 0
    %p183 = por %p181, %p182
    %p184 = scmp.ne.s32.totalorder %s176, %s178
    %p185 = scmp.eq.s32.totalorder %s21, 1
    %p186 = por %p184, %p185
    %p187 = scmp.ne.s32.totalorder %s178, %s179
    %p188 = scmp.eq.s32.totalorder %s21, 0
    %p189 = por %p187, %p188
    %p190 = scmp.ne.s32.totalorder %s178, %s179
    %p191 = scmp.eq.s32.totalorder %s22, 1
    %p192 = por %p190, %p191
    %p194 = scmp.ne.s32.totalorder %s179, %s193
    %p195 = scmp.eq.s32.totalorder %s22, 0
    %p196 = por %p194, %p195
    %s198 = sadd.s32 %s197, 1
    %p201 = scmp.eq.s32.totalorder %s16, 1
    %p202 = scmp.ne.s32.totalorder %s197, %s199
    %p203 = scmp.eq.s32.totalorder %s16, 0
    %p204 = por %p202, %p203
    %p205 = scmp.ne.s32.totalorder %s197, %s199
    %p206 = scmp.eq.s32.totalorder %s21, 1
    %p207 = por %p205, %p206
    %p208 = scmp.ne.s32.totalorder %s199, %s200
    %p209 = scmp.eq.s32.totalorder %s21, 0
    %p210 = por %p208, %p209
    %p211 = scmp.ne.s32.totalorder %s199, %s200
    %p212 = scmp.eq.s32.totalorder %s22, 1
    %p213 = por %p211, %p212
    %p215 = scmp.ne.s32.totalorder %s200, %s214
    %p216 = scmp.eq.s32.totalorder %s22, 0
    %p217 = por %p215, %p216
    %s219 = sadd.s32 %s218, 1
    %p222 = scmp.eq.s32.totalorder %s16, 1
    %p223 = scmp.ne.s32.totalorder %s218, %s220
    %p224 = scmp.eq.s32.totalorder %s16, 0
    %p225 = por %p223, %p224
    %p226 = scmp.ne.s32.totalorder %s218, %s220
    %p227 = scmp.eq.s32.totalorder %s21, 1
    %p228 = por %p226, %p227
    %p229 = scmp.ne.s32.totalorder %s220, %s221
    %p230 = scmp.eq.s32.totalorder %s21, 0
    %p231 = por %p229, %p230
    %p232 = scmp.ne.s32.totalorder %s220, %s221
    %p233 = scmp.eq.s32.totalorder %s22, 1
    %p234 = por %p232, %p233
    %p236 = scmp.ne.s32.totalorder %s221, %s235
    %p237 = scmp.eq.s32.totalorder %s22, 0
    %p238 = por %p236, %p237
    %s239 = ssub.s32 %s16, %s23
    %p240 = scmp.eq.s32.totalorder %s239, 0
    %s242 = sadd.s32 %s241, 1
    %s243 = scalar_select %p240, %s241, %s242
    %p246 = pneg %p240
    %p247 = scmp.eq.s32.totalorder %s16, 1
    %p248 = por %p246, %p247
    %p249 = scmp.ne.s32.totalorder %s241, %s244
    %p250 = scmp.eq.s32.totalorder %s16, 0
    %p251 = por %p249, %p250
    %p252 = scmp.ne.s32.totalorder %s241, %s244
    %p253 = scmp.eq.s32.totalorder %s21, 1
    %p254 = por %p252, %p253
    %p255 = scmp.ne.s32.totalorder %s244, %s245
    %p256 = scmp.eq.s32.totalorder %s21, 0
    %p257 = por %p255, %p256
    %p258 = scmp.ne.s32.totalorder %s244, %s245
    %p259 = scmp.eq.s32.totalorder %s22, 1
    %p260 = por %p258, %p259
    %p262 = scmp.ne.s32.totalorder %s245, %s261
    %p263 = scmp.eq.s32.totalorder %s22, 0
    %p264 = por %p262, %p263
    %p265 = scmp.le.s32.totalorder 1, %s16
    %p266 = scmp.lt.s32.totalorder %s16, 3
    %p267 = pnand %p265, %p266
    %p268 = pneg %p267
    // Predicated region
    $region9: #{_lambda_.1} parent=5 // pred_check
      _
    $region10: #{_lambda_.1} parent=5 // pred_check_branch
      %270 = sbr.rel (%p267) target = $region12
    $region11: #{_lambda_.1} parent=5 // pred_region
      %s271 = ssub.s32 %s16, 1
      // Predicated region
      $region13: #{_lambda_.1} parent=11 // pred_check
        %p272 = pneg %p63
      $region14: #{_lambda_.1} parent=11 // pred_check_branch
        %274 = sbr.rel (%p272) target = $region16
      $region15: #{_lambda_.1} parent=11 // pred_region
        _
      $region16: #{_lambda_.1} parent=11 // pred_fallthru
        _
      // Predicated region
      $region17: #{_lambda_.1} parent=11 // pred_check
        %p275 = pneg %p84
      $region18: #{_lambda_.1} parent=11 // pred_check_branch
        %277 = sbr.rel (%p275) target = $region20
      $region19: #{_lambda_.1} parent=11 // pred_region
        _
      $region20: #{_lambda_.1} parent=11 // pred_fallthru
        _
      // Predicated region
      $region21: #{_lambda_.1} parent=11 // pred_check
        %p278 = pneg %p105
      $region22: #{_lambda_.1} parent=11 // pred_check_branch
        %280 = sbr.rel (%p278) target = $region24
      $region23: #{_lambda_.1} parent=11 // pred_region
        _
      $region24: #{_lambda_.1} parent=11 // pred_fallthru
        _
      // Predicated region
      $region25: #{_lambda_.1} parent=11 // pred_check
        %p281 = pneg %p126
      $region26: #{_lambda_.1} parent=11 // pred_check_branch
        %283 = sbr.rel (%p281) target = $region28
      $region27: #{_lambda_.1} parent=11 // pred_region
        _
      $region28: #{_lambda_.1} parent=11 // pred_fallthru
        _
      // Predicated region
      $region29: #{_lambda_.1} parent=11 // pred_check
        %p284 = pneg %p147
      $region30: #{_lambda_.1} parent=11 // pred_check_branch
        %286 = sbr.rel (%p284) target = $region32
      $region31: #{_lambda_.1} parent=11 // pred_region
        _
      $region32: #{_lambda_.1} parent=11 // pred_fallthru
        _
      // Predicated region
      $region33: #{_lambda_.1} parent=11 // pred_check
        %p287 = pneg %p168
      $region34: #{_lambda_.1} parent=11 // pred_check_branch
        %289 = sbr.rel (%p287) target = $region36
      $region35: #{_lambda_.1} parent=11 // pred_region
        _
      $region36: #{_lambda_.1} parent=11 // pred_fallthru
        _
      // Predicated region
      $region37: #{_lambda_.1} parent=11 // pred_check
        %p290 = pneg %p189
      $region38: #{_lambda_.1} parent=11 // pred_check_branch
        %292 = sbr.rel (%p290) target = $region40
      $region39: #{_lambda_.1} parent=11 // pred_region
        _
      $region40: #{_lambda_.1} parent=11 // pred_fallthru
        _
      // Predicated region
      $region41: #{_lambda_.1} parent=11 // pred_check
        %p293 = pneg %p210
      $region42: #{_lambda_.1} parent=11 // pred_check_branch
        %295 = sbr.rel (%p293) target = $region44
      $region43: #{_lambda_.1} parent=11 // pred_region
        _
      $region44: #{_lambda_.1} parent=11 // pred_fallthru
        _
      // Predicated region
      $region45: #{_lambda_.1} parent=11 // pred_check
        %p296 = pneg %p231
      $region46: #{_lambda_.1} parent=11 // pred_check_branch
        %298 = sbr.rel (%p296) target = $region48
      $region47: #{_lambda_.1} parent=11 // pred_region
        _
      $region48: #{_lambda_.1} parent=11 // pred_fallthru
        _
    $region12: #{_lambda_.1} parent=5 // pred_fallthru
      _
    %p299 = scmp.lt.s32.totalorder %s16, 2
    // Predicated region
    $region49: #{_lambda_.1} parent=5 // pred_check
      %p300 = pneg %p299
    $region50: #{_lambda_.1} parent=5 // pred_check_branch
      %302 = sbr.rel (%p300) target = $region52
    $region51: #{_lambda_.1} parent=5 // pred_region
      // Predicated region
      $region53: #{_lambda_.1} parent=51 // pred_check
        %p303 = pneg %p36
      $region54: #{_lambda_.1} parent=51 // pred_check_branch
        %305 = sbr.rel (%p303) target = $region56
      $region55: #{_lambda_.1} parent=51 // pred_region
        %p306 = scmp.lt.s32.totalorder %s16, 1
        %s307 = scalar_select %p306, %s16, 1
        %s308 = smul.addr %s307, 4
        %s309 = smul.addr %s308, 8
        %s310 = scalar_lea.vmem %s0, %s309
      $region56: #{_lambda_.1} parent=51 // pred_fallthru
        _
    $region52: #{_lambda_.1} parent=5 // pred_fallthru
      _
    %p311 = scmp.le.s32.totalorder 1, %s16
    %p312 = scmp.lt.s32.totalorder %s16, 3
    %p313 = pnand %p311, %p312
    %p314 = pneg %p313
    // Predicated region
    $region57: #{_lambda_.1} parent=5 // pred_check
      _
    $region58: #{_lambda_.1} parent=5 // pred_check_branch
      %316 = sbr.rel (%p313) target = $region60
    $region59: #{_lambda_.1} parent=5 // pred_region
      %s317 = ssub.s32 %s16, 1
      %p318 = scmp.lt.s32.totalorder %s21, 1
      %s319 = scalar_select %p318, %s21, 1
      %s320 = smul.addr %s319, 4
      %s321 = smul.addr %s320, 8
      %s322 = scalar_lea.vmem %s0, %s321
      %p323 = pneg %p42
      %p324 = pneg %p39
      %p325 = pneg %p63
      %p326 = pneg %p60
      %p327 = pneg %p84
      %p328 = pneg %p81
      %p329 = pneg %p105
      %p330 = pneg %p102
      %p331 = pneg %p126
      %p332 = pneg %p123
      %p333 = pneg %p147
      %p334 = pneg %p144
      %p335 = pneg %p168
      %p336 = pneg %p165
      %p337 = pneg %p189
      %p338 = pneg %p186
      %p339 = pneg %p210
      %p340 = pneg %p207
      %p341 = pneg %p231
      %p342 = pneg %p228
      %p343 = pneg %p257
      %p344 = pneg %p254
      %p345 = scmp.lt.s32.totalorder %s21, 1
      %s346 = scalar_select %p345, %s21, 1
      %s347 = smul.addr %s346, 4
      %s348 = smul.addr %s347, 8
      %s349 = scalar_lea.vmem %s10, %s348
      %p350 = scmp.lt.s32.totalorder %s21, 1
      %s351 = scalar_select %p350, %s21, 1
      %s352 = smul.addr %s351, 4
      %s353 = smul.addr %s352, 8
      %s354 = scalar_lea.vmem %s0, %s353
      %p355 = scmp.lt.s32.totalorder %s21, 1
      %s356 = scalar_select %p355, %s21, 1
      %s357 = smul.addr %s356, 4
      %s358 = smul.addr %s357, 8
      %s359 = scalar_lea.vmem %s10, %s358
      %v361 = vld [vmem:[%s6] sm:$0x3f]
      %v362 = vld [vmem:[%s354] sm:$0xff]
      %v363 = vld [vmem:[%s354 + $0x8] sm:$0xff]
      %v364 = vld [vmem:[%s354 + $0x10] sm:$0xff]
      %v365 = vld [vmem:[%s354 + $0x18] sm:$0xff]
      %366 = vxpose.xlu0.b32.start [1/16] %v362, 128
      %367 = vxpose.xlu0.b32.cont [2/16] %v363, 128
      %368 = vxpose.xlu0.b32.cont [3/16] %v364, 128
      %369 = vxpose.xlu0.b32.cont [4/16] %v365, 128
      %370 = vxpose.xlu0.b32.cont [5/16] 0.0, 128
      %371 = vxpose.xlu0.b32.cont [6/16] 0.0, 128
      %372 = vxpose.xlu0.b32.cont [7/16] 0.0, 128
      %373 = vxpose.xlu0.b32.cont [8/16] 0.0, 128
      %374 = vxpose.xlu0.b32.cont [9/16] 0.0, 128
      %375 = vxpose.xlu0.b32.cont [10/16] 0.0, 128
      %376 = vxpose.xlu0.b32.cont [11/16] 0.0, 128
      %377 = vxpose.xlu0.b32.cont [12/16] 0.0, 128
      %378 = vxpose.xlu0.b32.cont [13/16] 0.0, 128
      %379 = vxpose.xlu0.b32.cont [14/16] 0.0, 128
      %380 = vxpose.xlu0.b32.cont [15/16] 0.0, 128
      %381 = vxpose.xlu0.b32.end [16/16] 0.0, 128
      %v382 = vpop.trf.xlu0
      %v383 = vpop.trf.xlu0
      %v384 = vpop.trf.xlu0
      %v385 = vpop.trf.xlu0
      %v386 = vpop.trf.xlu0
      %v387 = vpop.trf.xlu0
      %v388 = vpop.trf.xlu0
      %v389 = vpop.trf.xlu0
      %v390 = vpop.trf.xlu0
      %v391 = vpop.trf.xlu0
      %v392 = vpop.trf.xlu0
      %v393 = vpop.trf.xlu0
      %v394 = vpop.trf.xlu0
      %v395 = vpop.trf.xlu0
      %v396 = vpop.trf.xlu0
      %v397 = vpop.trf.xlu0
      %vm398 = vcmask 261120
      %v399 = vsel %vm398, %v382, 0.0
      %400 = vadd.xlane.f32.xlu0 %v399
      %v401 = vpop.xlane.xlu0 %400
      %v402 = vsel %vm398, %v383, 0.0
      %403 = vadd.xlane.f32.xlu0 %v402
      %v404 = vpop.xlane.xlu0 %403
      %v405 = vsel %vm398, %v384, 0.0
      %406 = vadd.xlane.f32.xlu0 %v405
      %v407 = vpop.xlane.xlu0 %406
      %v408 = vsel %vm398, %v385, 0.0
      %409 = vadd.xlane.f32.xlu0 %v408
      %v410 = vpop.xlane.xlu0 %409
      %v411 = vsel %vm398, %v386, 0.0
      %412 = vadd.xlane.f32.xlu0 %v411
      %v413 = vpop.xlane.xlu0 %412
      %v414 = vsel %vm398, %v387, 0.0
      %415 = vadd.xlane.f32.xlu0 %v414
      %v416 = vpop.xlane.xlu0 %415
      %v417 = vsel %vm398, %v388, 0.0
      %418 = vadd.xlane.f32.xlu0 %v417
      %v419 = vpop.xlane.xlu0 %418
      %v420 = vsel %vm398, %v389, 0.0
      %421 = vadd.xlane.f32.xlu0 %v420
      %v422 = vpop.xlane.xlu0 %421
      %v423 = vrcp.pop 32.0
      %v424 = vmul.f32 %v401, %v423
      %v425 = vmul.f32 %v404, %v423
      %v426 = vmul.f32 %v407, %v423
      %v427 = vmul.f32 %v410, %v423
      %v428 = vmul.f32 %v413, %v423
      %v429 = vmul.f32 %v416, %v423
      %v430 = vmul.f32 %v419, %v423
      %v431 = vmul.f32 %v422, %v423
      %v432 = vsub.f32 %v382, %v424
      %v433 = vsub.f32 %v383, %v425
      %v434 = vsub.f32 %v384, %v426
      %v435 = vsub.f32 %v385, %v427
      %v436 = vsub.f32 %v386, %v428
      %v437 = vsub.f32 %v387, %v429
      %v438 = vsub.f32 %v388, %v430
      %v439 = vsub.f32 %v389, %v431
      %v440 = vmul.f32 %v432, %v432
      %v441 = vmul.f32 %v433, %v433
      %v442 = vmul.f32 %v434, %v434
      %v443 = vmul.f32 %v435, %v435
      %v444 = vmul.f32 %v436, %v436
      %v445 = vmul.f32 %v437, %v437
      %v446 = vmul.f32 %v438, %v438
      %v447 = vmul.f32 %v439, %v439
      %v448 = vsel %vm398, %v440, 0.0
      %449 = vadd.xlane.f32.xlu0 %v448
      %v450 = vpop.xlane.xlu0 %449
      %v451 = vsel %vm398, %v441, 0.0
      %452 = vadd.xlane.f32.xlu0 %v451
      %v453 = vpop.xlane.xlu0 %452
      %v454 = vsel %vm398, %v442, 0.0
      %455 = vadd.xlane.f32.xlu0 %v454
      %v456 = vpop.xlane.xlu0 %455
      %v457 = vsel %vm398, %v443, 0.0
      %458 = vadd.xlane.f32.xlu0 %v457
      %v459 = vpop.xlane.xlu0 %458
      %v460 = vsel %vm398, %v444, 0.0
      %461 = vadd.xlane.f32.xlu0 %v460
      %v462 = vpop.xlane.xlu0 %461
      %v463 = vsel %vm398, %v445, 0.0
      %464 = vadd.xlane.f32.xlu0 %v463
      %v465 = vpop.xlane.xlu0 %464
      %v466 = vsel %vm398, %v446, 0.0
      %467 = vadd.xlane.f32.xlu0 %v466
      %v468 = vpop.xlane.xlu0 %467
      %v469 = vsel %vm398, %v447, 0.0
      %470 = vadd.xlane.f32.xlu0 %v469
      %v471 = vpop.xlane.xlu0 %470
      %v472 = vmul.f32 %v450, %v423
      %v473 = vmul.f32 %v453, %v423
      %v474 = vmul.f32 %v456, %v423
      %v475 = vmul.f32 %v459, %v423
      %v476 = vmul.f32 %v462, %v423
      %v477 = vmul.f32 %v465, %v423
      %v478 = vmul.f32 %v468, %v423
      %v479 = vmul.f32 %v471, %v423
      %v480 = vadd.f32 %v472, 1e-06
      %v481 = vadd.f32 %v473, 1e-06
      %v482 = vadd.f32 %v474, 1e-06
      %v483 = vadd.f32 %v475, 1e-06
      %v484 = vadd.f32 %v476, 1e-06
      %v485 = vadd.f32 %v477, 1e-06
      %v486 = vadd.f32 %v478, 1e-06
      %v487 = vadd.f32 %v479, 1e-06
      %v488 = vrsqrt.pop %v480
      %v489 = vrsqrt.pop %v481
      %v490 = vrsqrt.pop %v482
      %v491 = vrsqrt.pop %v483
      %v492 = vrsqrt.pop %v484
      %v493 = vrsqrt.pop %v485
      %v494 = vrsqrt.pop %v486
      %v495 = vrsqrt.pop %v487
      %v496 = vmul.f32 %v432, %v488
      %v497 = vmul.f32 %v433, %v489
      %v498 = vmul.f32 %v434, %v490
      %v499 = vmul.f32 %v435, %v491
      %v500 = vmul.f32 %v436, %v492
      %v501 = vmul.f32 %v437, %v493
      %v502 = vmul.f32 %v438, %v494
      %v503 = vmul.f32 %v439, %v495
      %v504 = vlaneseq
      %v505 = vshrl.u32 %v504, 7
      %v506 = vsub.s32 0, %v505
      %v507 = vrot.slane %v361, %v506
      %v508 = vmul.f32 %v496, %v507
      %v509 = vmul.f32 %v497, %v507
      %v510 = vmul.f32 %v498, %v507
      %v511 = vmul.f32 %v499, %v507
      %v512 = vmul.f32 %v500, %v507
      %v513 = vmul.f32 %v501, %v507
      %v514 = vmul.f32 %v502, %v507
      %v515 = vmul.f32 %v503, %v507
      %v516 = vlaneseq
      %v517 = vshrl.u32 %v516, 7
      %v518 = vsub.s32 1, %v517
      %v519 = vrot.slane %v361, %v518
      %v520 = vadd.f32 %v508, %v519
      %v521 = vadd.f32 %v509, %v519
      %v522 = vadd.f32 %v510, %v519
      %v523 = vadd.f32 %v511, %v519
      %v524 = vadd.f32 %v512, %v519
      %v525 = vadd.f32 %v513, %v519
      %v526 = vadd.f32 %v514, %v519
      %v527 = vadd.f32 %v515, %v519
      %v528 = vpack.c.bf16 %v521, %v520
      %v529 = vpack.c.bf16 %v523, %v522
      %v530 = vpack.c.bf16 %v525, %v524
      %v531 = vpack.c.bf16 %v527, %v526
      %v532 = vld [vmem:[%s1] sm:$0xff]
      %v533 = vld [vmem:[%s1 + $0x8] sm:$0xf]
      %v534 = vld [vmem:[%s1 + $0xc] sm:$0xff]
      %v535 = vld [vmem:[%s1 + $0x14] sm:$0xf]
      %v536 = vld [vmem:[%s1 + $0x18] sm:$0xff]
      %v537 = vld [vmem:[%s1 + $0x20] sm:$0xf]
      %v538 = vld [vmem:[%s1 + $0x24] sm:$0xff]
      %v539 = vld [vmem:[%s1 + $0x2c] sm:$0xf]
      %v540 = vld [vmem:[%s2] sm:$0x7]
      %v542 = vlaneseq
      %v543 = vshrl.u32 %v542, 7
      %v544 = vsub.s32 0, %v543
      %v545 = vrot.slane %v540, %v544
      %v546 = vlaneseq
      %v547 = vshrl.u32 %v546, 7
      %v548 = vsub.s32 1, %v547
      %v549 = vrot.slane %v540, %v548
      %v550 = vlaneseq
      %v551 = vshrl.u32 %v550, 7
      %v552 = vsub.s32 2, %v551
      %v553 = vrot.slane %v540, %v552
      %v565 = vunpack.c.l.b16 %v532
      %v566 = vunpack.c.h.b16 %v532
      %v567 = vunpack.c.l.b16 %v533
      %v568 = vunpack.c.l.b16 %v534
      %v569 = vunpack.c.h.b16 %v534
      %v570 = vunpack.c.l.b16 %v535
      %v571 = vunpack.c.l.b16 %v536
      %v572 = vunpack.c.h.b16 %v536
      %v573 = vunpack.c.l.b16 %v537
      %v574 = vunpack.c.l.b16 %v538
      %v575 = vunpack.c.h.b16 %v538
      %v576 = vunpack.c.l.b16 %v539
      %v577 = vpack.c.b16 %v568, %v565
      %v578 = vpack.c.b16 %v569, %v566
      %v579 = vpack.c.b16 %v570, %v567
      %v580 = vpack.c.b16 %v574, %v571
      %v581 = vpack.c.b16 %v575, %v572
      %v582 = vpack.c.b16 %v576, %v573
      %v590 = vsel %vm398, %v528, 0
      %v593 = vsel %vm398, %v529, 0
      %v596 = vsel %vm398, %v530, 0
      %v599 = vsel %vm398, %v531, 0
      %601 = vmatprep.subr.bf16.mxu0 %v578
      %602 = vmatpush1.bf16.msra.mxu0 %v577
      %603 = vmatprep.subr.bf16.mxu0 %v581
      %604 = vmatpush1.bf16.msra.mxu0 %v580
      %605 = vmatprep.subr.bf16.mxu0 0
      %606 = vmatpush1.bf16.msra.mxu0 0
      %607 = vmatprep.subr.bf16.mxu0 0
      %608 = vmatpush1.bf16.msra.mxu0 0
      %609 = vmatprep.subr.bf16.mxu0 0
      %610 = vmatpush1.bf16.msra.mxu0 0
      %611 = vmatprep.subr.bf16.mxu0 0
      %612 = vmatpush1.bf16.msra.mxu0 0
      %613 = vmatprep.subr.bf16.mxu0 0
      %614 = vmatpush1.bf16.msra.mxu0 0
      %615 = vmatprep.subr.bf16.mxu0 0
      %616 = vmatpush1.bf16.msra.mxu0 0
      %617 = vmatprep.subr.bf16.mxu0 0
      %618 = vmatpush1.bf16.msra.mxu0 0
      %619 = vmatprep.subr.bf16.mxu0 0
      %620 = vmatpush1.bf16.msra.mxu0 0
      %621 = vmatprep.subr.bf16.mxu0 0
      %622 = vmatpush1.bf16.msra.mxu0 0
      %623 = vmatprep.subr.bf16.mxu0 0
      %624 = vmatpush1.bf16.msra.mxu0 0
      %625 = vmatprep.subr.bf16.mxu0 0
      %626 = vmatpush1.bf16.msra.mxu0 0
      %627 = vmatprep.subr.bf16.mxu0 0
      %628 = vmatpush1.bf16.msra.mxu0 0
      %629 = vmatprep.subr.bf16.mxu0 0
      %630 = vmatpush1.bf16.msra.mxu0 0
      %631 = vmatprep.subr.bf16.mxu0 0
      %632 = vmatpush1.bf16.msra.mxu0 0
      %633 = vmatprep.mubr.bf16.mxu0 0
      %634 = vmatmul.mubr.bf16.gmra.mrb[0].mxu0 %v590
      %v635 = vpop.f32.mrb[0].mxu0
      %v636 = vadd.f32 %v545, %v635
      %v637 = vpop.f32.mrb[0].mxu0
      %v638 = vadd.f32 %v549, %v637
      %v639 = vpop.f32.mrb[0].mxu0
      %v640 = vadd.f32 %v545, %v639
      %v641 = vpop.f32.mrb[0].mxu0
      %v642 = vadd.f32 %v549, %v641
      %643 = vmatprep.mubr.bf16.mxu0 0
      %644 = vmatmul.mubr.bf16.gmra.mrb[0].mxu0 %v593
      %v645 = vpop.f32.mrb[0].mxu0
      %v646 = vadd.f32 %v545, %v645
      %v647 = vpop.f32.mrb[0].mxu0
      %v648 = vadd.f32 %v549, %v647
      %v649 = vpop.f32.mrb[0].mxu0
      %v650 = vadd.f32 %v545, %v649
      %v651 = vpop.f32.mrb[0].mxu0
      %v652 = vadd.f32 %v549, %v651
      %653 = vmatprep.mubr.bf16.mxu0 0
      %654 = vmatmul.mubr.bf16.gmra.mrb[0].mxu0 %v596
      %v655 = vpop.f32.mrb[0].mxu0
      %v656 = vadd.f32 %v545, %v655
      %v657 = vpop.f32.mrb[0].mxu0
      %v658 = vadd.f32 %v549, %v657
      %v659 = vpop.f32.mrb[0].mxu0
      %v660 = vadd.f32 %v545, %v659
      %v661 = vpop.f32.mrb[0].mxu0
      %v662 = vadd.f32 %v549, %v661
      %663 = vmatprep.mubr.bf16.mxu0 0
      %664 = vmatmul.mubr.bf16.gmra.mrb[0].mxu0 %v599
      %v665 = vpop.f32.mrb[0].mxu0
      %v666 = vadd.f32 %v545, %v665
      %v667 = vpop.f32.mrb[0].mxu0
      %v668 = vadd.f32 %v549, %v667
      %v669 = vpop.f32.mrb[0].mxu0
      %v670 = vadd.f32 %v545, %v669
      %v671 = vpop.f32.mrb[0].mxu0
      %v672 = vadd.f32 %v549, %v671
      %673 = vdwg.mxu0
      %674 = vmatprep.subr.bf16.mxu0 0
      %675 = vmatpush1.bf16.msra.mxu0 %v579
      %676 = vmatprep.subr.bf16.mxu0 0
      %677 = vmatpush1.bf16.msra.mxu0 %v582
      %678 = vmatprep.subr.bf16.mxu0 0
      %679 = vmatpush1.bf16.msra.mxu0 0
      %680 = vmatprep.subr.bf16.mxu0 0
      %681 = vmatpush1.bf16.msra.mxu0 0
      %682 = vmatprep.subr.bf16.mxu0 0
      %683 = vmatpush1.bf16.msra.mxu0 0
      %684 = vmatprep.subr.bf16.mxu0 0
      %685 = vmatpush1.bf16.msra.mxu0 0
      %686 = vmatprep.subr.bf16.mxu0 0
      %687 = vmatpush1.bf16.msra.mxu0 0
      %688 = vmatprep.subr.bf16.mxu0 0
      %689 = vmatpush1.bf16.msra.mxu0 0
      %690 = vmatprep.subr.bf16.mxu0 0
      %691 = vmatpush1.bf16.msra.mxu0 0
      %692 = vmatprep.subr.bf16.mxu0 0
      %693 = vmatpush1.bf16.msra.mxu0 0
      %694 = vmatprep.subr.bf16.mxu0 0
      %695 = vmatpush1.bf16.msra.mxu0 0
      %696 = vmatprep.subr.bf16.mxu0 0
      %697 = vmatpush1.bf16.msra.mxu0 0
      %698 = vmatprep.subr.bf16.mxu0 0
      %699 = vmatpush1.bf16.msra.mxu0 0
      %700 = vmatprep.subr.bf16.mxu0 0
      %701 = vmatpush1.bf16.msra.mxu0 0
      %702 = vmatprep.subr.bf16.mxu0 0
      %703 = vmatpush1.bf16.msra.mxu0 0
      %704 = vmatprep.subr.bf16.mxu0 0
      %705 = vmatpush1.bf16.msra.mxu0 0
      %706 = vmatprep.mubr.bf16.mxu0 0
      %707 = vmatmul.mubr.bf16.gmra.mrb[0].mxu0 %v590
      %v708 = vpop.f32.mrb[0].mxu0
      %v709 = vadd.f32 %v553, %v708
      %v710 = vpop.f32.mrb[0].mxu0
      %v711 = vpop.f32.mrb[0].mxu0
      %v712 = vadd.f32 %v553, %v711
      %v713 = vpop.f32.mrb[0].mxu0
      %714 = vmatprep.mubr.bf16.mxu0 0
      %715 = vmatmul.mubr.bf16.gmra.mrb[0].mxu0 %v593
      %v716 = vpop.f32.mrb[0].mxu0
      %v717 = vadd.f32 %v553, %v716
      %v718 = vpop.f32.mrb[0].mxu0
      %v719 = vpop.f32.mrb[0].mxu0
      %v720 = vadd.f32 %v553, %v719
      %v721 = vpop.f32.mrb[0].mxu0
      %722 = vmatprep.mubr.bf16.mxu0 0
      %723 = vmatmul.mubr.bf16.gmra.mrb[0].mxu0 %v596
      %v724 = vpop.f32.mrb[0].mxu0
      %v725 = vadd.f32 %v553, %v724
      %v726 = vpop.f32.mrb[0].mxu0
      %v727 = vpop.f32.mrb[0].mxu0
      %v728 = vadd.f32 %v553, %v727
      %v729 = vpop.f32.mrb[0].mxu0
      %730 = vmatprep.mubr.bf16.mxu0 0
      %731 = vmatmul.mubr.bf16.gmra.mrb[0].mxu0 %v599
      %v732 = vpop.f32.mrb[0].mxu0
      %v733 = vadd.f32 %v553, %v732
      %v734 = vpop.f32.mrb[0].mxu0
      %v735 = vpop.f32.mrb[0].mxu0
      %v736 = vadd.f32 %v553, %v735
      %v737 = vpop.f32.mrb[0].mxu0
      %738 = vdwg.mxu0
      %v739 = vld [vmem:[%s8] sm:$0xff]
      %v740 = vld [vmem:[%s8 + $0x8] sm:$0xf]
      %v743 = vcombine.high %v739, %v739
      %v745 = vunpack.c.l.s4 1966171168
      %v746 = vunpack.c.0.s8 %v745
      %v747 = vlaneseq
      %v748 = vshrl.u32 %v747, 7
      %v749 = vsub.s32 %v746, %v748
      %v750 = vrot.slane %v739, %v749
      %v752 = vunpack.c.l.s4 1966171168
      %v753 = vunpack.c.0.s8 %v752
      %v754 = vlaneseq
      %v755 = vshrl.u32 %v754, 7
      %v756 = vsub.s32 %v753, %v755
      %v757 = vrot.slane %v743, %v756
      %v758 = vcombine.high %v750, %v750
      %v759 = vcombine.high %v757, %v757
      %v761 = vunpack.c.l.s4 1966171168
      %v762 = vunpack.c.0.s8 %v761
      %v763 = vlaneseq
      %v764 = vshrl.u32 %v763, 7
      %v765 = vsub.s32 %v762, %v764
      %v766 = vrot.slane %v750, %v765
      %v768 = vunpack.c.l.s4 1966171168
      %v769 = vunpack.c.0.s8 %v768
      %v770 = vlaneseq
      %v771 = vshrl.u32 %v770, 7
      %v772 = vsub.s32 %v769, %v771
      %v773 = vrot.slane %v757, %v772
      %v775 = vunpack.c.l.s4 1966171168
      %v776 = vunpack.c.0.s8 %v775
      %v777 = vlaneseq
      %v778 = vshrl.u32 %v777, 7
      %v779 = vsub.s32 %v776, %v778
      %v780 = vrot.slane %v758, %v779
      %v782 = vunpack.c.l.s4 1966171168
      %v783 = vunpack.c.0.s8 %v782
      %v784 = vlaneseq
      %v785 = vshrl.u32 %v784, 7
      %v786 = vsub.s32 %v783, %v785
      %v787 = vrot.slane %v759, %v786
      %v788 = vcombine.high %v766, %v766
      %v789 = vcombine.high %v773, %v773
      %v790 = vcombine.high %v780, %v780
      %v791 = vcombine.high %v787, %v787
      %v793 = vunpack.c.l.s4 1966171168
      %v794 = vunpack.c.0.s8 %v793
      %v795 = vlaneseq
      %v796 = vshrl.u32 %v795, 7
      %v797 = vsub.s32 %v794, %v796
      %v798 = vrot.slane %v740, %v797
      %v799 = vcombine.high %v798, %v798
      %v801 = vunpack.c.l.s4 1966171168
      %v802 = vunpack.c.0.s8 %v801
      %v803 = vlaneseq
      %v804 = vshrl.u32 %v803, 7
      %v805 = vsub.s32 %v802, %v804
      %v806 = vrot.slane %v798, %v805
      %v808 = vunpack.c.l.s4 1966171168
      %v809 = vunpack.c.0.s8 %v808
      %v810 = vlaneseq
      %v811 = vshrl.u32 %v810, 7
      %v812 = vsub.s32 %v809, %v811
      %v813 = vrot.slane %v799, %v812
      %v814 = vcombine.high %v806, %v806
      %v815 = vcombine.high %v813, %v813
      %v816 = vlaneseq
      %v817 = vshrl.u32 %v816, 7
      %v818 = vsub.s32 0, %v817
      %v819 = vrot.slane %v766, %v818
      %v820 = vlaneseq
      %v821 = vshrl.u32 %v820, 7
      %v822 = vsub.s32 0, %v821
      %v823 = vrot.slane %v780, %v822
      %v824 = vlaneseq
      %v825 = vshrl.u32 %v824, 7
      %v826 = vsub.s32 0, %v825
      %v827 = vrot.slane %v788, %v826
      %v828 = vlaneseq
      %v829 = vshrl.u32 %v828, 7
      %v830 = vsub.s32 0, %v829
      %v831 = vrot.slane %v790, %v830
      %v832 = vlaneseq
      %v833 = vshrl.u32 %v832, 7
      %v834 = vsub.s32 0, %v833
      %v835 = vrot.slane %v773, %v834
      %v836 = vlaneseq
      %v837 = vshrl.u32 %v836, 7
      %v838 = vsub.s32 0, %v837
      %v839 = vrot.slane %v787, %v838
      %v840 = vlaneseq
      %v841 = vshrl.u32 %v840, 7
      %v842 = vsub.s32 0, %v841
      %v843 = vrot.slane %v789, %v842
      %v844 = vlaneseq
      %v845 = vshrl.u32 %v844, 7
      %v846 = vsub.s32 0, %v845
      %v847 = vrot.slane %v791, %v846
      %v848 = vlaneseq
      %v849 = vshrl.u32 %v848, 7
      %v850 = vsub.s32 0, %v849
      %v851 = vrot.slane %v806, %v850
      %v852 = vlaneseq
      %v853 = vshrl.u32 %v852, 7
      %v854 = vsub.s32 0, %v853
      %v855 = vrot.slane %v813, %v854
      %v856 = vlaneseq
      %v857 = vshrl.u32 %v856, 7
      %v858 = vsub.s32 0, %v857
      %v859 = vrot.slane %v814, %v858
      %v860 = vlaneseq
      %v861 = vshrl.u32 %v860, 7
      %v862 = vsub.s32 0, %v861
      %v863 = vrot.slane %v815, %v862
      %v876 = vmul.f32 %v636, %v819
      %v877 = vmul.f32 %v640, %v819
      %v878 = vmul.f32 %v646, %v819
      %v879 = vmul.f32 %v650, %v819
      %v880 = vmul.f32 %v656, %v819
      %v881 = vmul.f32 %v660, %v819
      %v882 = vmul.f32 %v666, %v819
      %v883 = vmul.f32 %v670, %v819
      %v884 = vmul.f32 %v636, %v823
      %v885 = vmul.f32 %v640, %v823
      %v886 = vmul.f32 %v646, %v823
      %v887 = vmul.f32 %v650, %v823
      %v888 = vmul.f32 %v656, %v823
      %v889 = vmul.f32 %v660, %v823
      %v890 = vmul.f32 %v666, %v823
      %v891 = vmul.f32 %v670, %v823
      %v892 = vmul.f32 %v636, %v827
      %v893 = vmul.f32 %v640, %v827
      %v894 = vmul.f32 %v646, %v827
      %v895 = vmul.f32 %v650, %v827
      %v896 = vmul.f32 %v656, %v827
      %v897 = vmul.f32 %v660, %v827
      %v898 = vmul.f32 %v666, %v827
      %v899 = vmul.f32 %v670, %v827
      %v900 = vmul.f32 %v636, %v831
      %v901 = vmul.f32 %v640, %v831
      %v902 = vmul.f32 %v646, %v831
      %v903 = vmul.f32 %v650, %v831
      %v904 = vmul.f32 %v656, %v831
      %v905 = vmul.f32 %v660, %v831
      %v906 = vmul.f32 %v666, %v831
      %v907 = vmul.f32 %v670, %v831
      %v908 = vmul.f32 %v636, %v835
      %v909 = vmul.f32 %v640, %v835
      %v910 = vmul.f32 %v646, %v835
      %v911 = vmul.f32 %v650, %v835
      %v912 = vmul.f32 %v656, %v835
      %v913 = vmul.f32 %v660, %v835
      %v914 = vmul.f32 %v666, %v835
      %v915 = vmul.f32 %v670, %v835
      %v916 = vmul.f32 %v636, %v839
      %v917 = vmul.f32 %v640, %v839
      %v918 = vmul.f32 %v646, %v839
      %v919 = vmul.f32 %v650, %v839
      %v920 = vmul.f32 %v656, %v839
      %v921 = vmul.f32 %v660, %v839
      %v922 = vmul.f32 %v666, %v839
      %v923 = vmul.f32 %v670, %v839
      %v924 = vmul.f32 %v636, %v843
      %v925 = vmul.f32 %v640, %v843
      %v926 = vmul.f32 %v646, %v843
      %v927 = vmul.f32 %v650, %v843
      %v928 = vmul.f32 %v656, %v843
      %v929 = vmul.f32 %v660, %v843
      %v930 = vmul.f32 %v666, %v843
      %v931 = vmul.f32 %v670, %v843
      %v932 = vmul.f32 %v636, %v847
      %v933 = vmul.f32 %v640, %v847
      %v934 = vmul.f32 %v646, %v847
      %v935 = vmul.f32 %v650, %v847
      %v936 = vmul.f32 %v656, %v847
      %v937 = vmul.f32 %v660, %v847
      %v938 = vmul.f32 %v666, %v847
      %v939 = vmul.f32 %v670, %v847
      %v940 = vmul.f32 %v636, %v851
      %v941 = vmul.f32 %v640, %v851
      %v942 = vmul.f32 %v646, %v851
      %v943 = vmul.f32 %v650, %v851
      %v944 = vmul.f32 %v656, %v851
      %v945 = vmul.f32 %v660, %v851
      %v946 = vmul.f32 %v666, %v851
      %v947 = vmul.f32 %v670, %v851
      %v948 = vmul.f32 %v636, %v855
      %v949 = vmul.f32 %v640, %v855
      %v950 = vmul.f32 %v646, %v855
      %v951 = vmul.f32 %v650, %v855
      %v952 = vmul.f32 %v656, %v855
      %v953 = vmul.f32 %v660, %v855
      %v954 = vmul.f32 %v666, %v855
      %v955 = vmul.f32 %v670, %v855
      %v956 = vmul.f32 %v636, %v859
      %v957 = vmul.f32 %v640, %v859
      %v958 = vmul.f32 %v646, %v859
      %v959 = vmul.f32 %v650, %v859
      %v960 = vmul.f32 %v656, %v859
      %v961 = vmul.f32 %v660, %v859
      %v962 = vmul.f32 %v666, %v859
      %v963 = vmul.f32 %v670, %v859
      %v964 = vmul.f32 %v636, %v863
      %v965 = vmul.f32 %v640, %v863
      %v966 = vmul.f32 %v646, %v863
      %v967 = vmul.f32 %v650, %v863
      %v968 = vmul.f32 %v656, %v863
      %v969 = vmul.f32 %v660, %v863
      %v970 = vmul.f32 %v666, %v863
      %v971 = vmul.f32 %v670, %v863
      %v972 = vpack.c.bf16 %v877, %v876
      %v973 = vpack.c.bf16 %v879, %v878
      %v974 = vpack.c.bf16 %v881, %v880
      %v975 = vpack.c.bf16 %v883, %v882
      %v976 = vpack.c.bf16 %v885, %v884
      %v977 = vpack.c.bf16 %v887, %v886
      %v978 = vpack.c.bf16 %v889, %v888
      %v979 = vpack.c.bf16 %v891, %v890
      %v980 = vpack.c.bf16 %v893, %v892
      %v981 = vpack.c.bf16 %v895, %v894
      %v982 = vpack.c.bf16 %v897, %v896
      %v983 = vpack.c.bf16 %v899, %v898
      %v984 = vpack.c.bf16 %v901, %v900
      %v985 = vpack.c.bf16 %v903, %v902
      %v986 = vpack.c.bf16 %v905, %v904
      %v987 = vpack.c.bf16 %v907, %v906
      %v988 = vpack.c.bf16 %v909, %v908
      %v989 = vpack.c.bf16 %v911, %v910
      %v990 = vpack.c.bf16 %v913, %v912
      %v991 = vpack.c.bf16 %v915, %v914
      %v992 = vpack.c.bf16 %v917, %v916
      %v993 = vpack.c.bf16 %v919, %v918
      %v994 = vpack.c.bf16 %v921, %v920
      %v995 = vpack.c.bf16 %v923, %v922
      %v996 = vpack.c.bf16 %v925, %v924
      %v997 = vpack.c.bf16 %v927, %v926
      %v998 = vpack.c.bf16 %v929, %v928
      %v999 = vpack.c.bf16 %v931, %v930
      %v1000 = vpack.c.bf16 %v933, %v932
      %v1001 = vpack.c.bf16 %v935, %v934
      %v1002 = vpack.c.bf16 %v937, %v936
      %v1003 = vpack.c.bf16 %v939, %v938
      %v1004 = vpack.c.bf16 %v941, %v940
      %v1005 = vpack.c.bf16 %v943, %v942
      %v1006 = vpack.c.bf16 %v945, %v944
      %v1007 = vpack.c.bf16 %v947, %v946
      %v1008 = vpack.c.bf16 %v949, %v948
      %v1009 = vpack.c.bf16 %v951, %v950
      %v1010 = vpack.c.bf16 %v953, %v952
      %v1011 = vpack.c.bf16 %v955, %v954
      %v1012 = vpack.c.bf16 %v957, %v956
      %v1013 = vpack.c.bf16 %v959, %v958
      %v1014 = vpack.c.bf16 %v961, %v960
      %v1015 = vpack.c.bf16 %v963, %v962
      %v1016 = vpack.c.bf16 %v965, %v964
      %v1017 = vpack.c.bf16 %v967, %v966
      %v1018 = vpack.c.bf16 %v969, %v968
      %v1019 = vpack.c.bf16 %v971, %v970
      %v1020 = vpack.c.bf16 %v640, %v636
      %v1021 = vpack.c.bf16 %v642, %v638
      %v1022 = vpack.c.bf16 %v650, %v646
      %v1023 = vpack.c.bf16 %v652, %v648
      %v1024 = vpack.c.bf16 %v660, %v656
      %v1025 = vpack.c.bf16 %v662, %v658
      %v1026 = vpack.c.bf16 %v670, %v666
      %v1027 = vpack.c.bf16 %v672, %v668
      %1036 = vrot.lane.b32.xlu0 %v1020, 32
      %v1037 = vpop.permute.xlu0 %1036
      %1038 = vrot.lane.b32.xlu0 %v1021, 32
      %v1039 = vpop.permute.xlu0 %1038
      %1040 = vrot.lane.b32.xlu0 %v1022, 32
      %v1041 = vpop.permute.xlu0 %1040
      %1042 = vrot.lane.b32.xlu0 %v1023, 32
      %v1043 = vpop.permute.xlu0 %1042
      %1044 = vrot.lane.b32.xlu0 %v1024, 32
      %v1045 = vpop.permute.xlu0 %1044
      %1046 = vrot.lane.b32.xlu0 %v1025, 32
      %v1047 = vpop.permute.xlu0 %1046
      %1048 = vrot.lane.b32.xlu0 %v1026, 32
      %v1049 = vpop.permute.xlu0 %1048
      %1050 = vrot.lane.b32.xlu0 %v1027, 32
      %v1051 = vpop.permute.xlu0 %1050
      %vm1052 = vcmask 261120
      %v1053 = vsel %vm1052, %v1037, %v1039
      %v1054 = vsel %vm1052, %v1041, %v1043
      %v1055 = vsel %vm1052, %v1045, %v1047
      %v1056 = vsel %vm1052, %v1049, %v1051
      %vm1057 = vcmask 785408
      %v1059 = vsel %vm1057, %v972, 0
      %v1062 = vsel %vm1057, %v973, 0
      %v1065 = vsel %vm1057, %v974, 0
      %v1068 = vsel %vm1057, %v975, 0
      %v1071 = vsel %vm1057, %v976, 0
      %v1074 = vsel %vm1057, %v977, 0
      %v1077 = vsel %vm1057, %v978, 0
      %v1080 = vsel %vm1057, %v979, 0
      %v1083 = vsel %vm1057, %v980, 0
      %v1086 = vsel %vm1057, %v981, 0
      %v1089 = vsel %vm1057, %v982, 0
      %v1092 = vsel %vm1057, %v983, 0
      %v1095 = vsel %vm1057, %v984, 0
      %v1098 = vsel %vm1057, %v985, 0
      %v1101 = vsel %vm1057, %v986, 0
      %v1104 = vsel %vm1057, %v987, 0
      %v1107 = vsel %vm1057, %v988, 0
      %v1110 = vsel %vm1057, %v989, 0
      %v1113 = vsel %vm1057, %v990, 0
      %v1116 = vsel %vm1057, %v991, 0
      %v1119 = vsel %vm1057, %v992, 0
      %v1122 = vsel %vm1057, %v993, 0
      %v1125 = vsel %vm1057, %v994, 0
      %v1128 = vsel %vm1057, %v995, 0
      %v1131 = vsel %vm1057, %v996, 0
      %v1134 = vsel %vm1057, %v997, 0
      %v1137 = vsel %vm1057, %v998, 0
      %v1140 = vsel %vm1057, %v999, 0
      %v1143 = vsel %vm1057, %v1000, 0
      %v1146 = vsel %vm1057, %v1001, 0
      %v1149 = vsel %vm1057, %v1002, 0
      %v1152 = vsel %vm1057, %v1003, 0
      %v1155 = vsel %vm1057, %v1004, 0
      %v1158 = vsel %vm1057, %v1005, 0
      %v1161 = vsel %vm1057, %v1006, 0
      %v1164 = vsel %vm1057, %v1007, 0
      %v1167 = vsel %vm1057, %v1008, 0
      %v1170 = vsel %vm1057, %v1009, 0
      %v1173 = vsel %vm1057, %v1010, 0
      %v1176 = vsel %vm1057, %v1011, 0
      %v1179 = vsel %vm1057, %v1012, 0
      %v1182 = vsel %vm1057, %v1013, 0
      %v1185 = vsel %vm1057, %v1014, 0
      %v1188 = vsel %vm1057, %v1015, 0
      %v1191 = vsel %vm1057, %v1016, 0
      %v1194 = vsel %vm1057, %v1017, 0
      %v1197 = vsel %vm1057, %v1018, 0
      %v1200 = vsel %vm1057, %v1019, 0
      %v1203 = vsel %vm1057, %v1053, 0
      %v1206 = vsel %vm1057, %v1054, 0
      %v1209 = vsel %vm1057, %v1055, 0
      %v1212 = vsel %vm1057, %v1056, 0
      %1214 = vmatprep.subr.bf16.mxu0 0
      %1215 = vmatpush1.bf16.xpose.msra.mxu0 %v1203
      %1216 = vmatprep.subr.bf16.mxu0 0
      %1217 = vmatpush1.bf16.xpose.msra.mxu0 %v1206
      %1218 = vmatprep.subr.bf16.mxu0 0
      %1219 = vmatpush1.bf16.xpose.msra.mxu0 %v1209
      %1220 = vmatprep.subr.bf16.mxu0 0
      %1221 = vmatpush1.bf16.xpose.msra.mxu0 %v1212
      %1222 = vmatprep.subr.bf16.mxu0 0
      %1223 = vmatpush1.bf16.xpose.msra.mxu0 0
      %1224 = vmatprep.subr.bf16.mxu0 0
      %1225 = vmatpush1.bf16.xpose.msra.mxu0 0
      %1226 = vmatprep.subr.bf16.mxu0 0
      %1227 = vmatpush1.bf16.xpose.msra.mxu0 0
      %1228 = vmatprep.subr.bf16.mxu0 0
      %1229 = vmatpush1.bf16.xpose.msra.mxu0 0
      %1230 = vmatprep.subr.bf16.mxu0 0
      %1231 = vmatpush1.bf16.xpose.msra.mxu0 0
      %1232 = vmatprep.subr.bf16.mxu0 0
      %1233 = vmatpush1.bf16.xpose.msra.mxu0 0
      %1234 = vmatprep.subr.bf16.mxu0 0
      %1235 = vmatpush1.bf16.xpose.msra.mxu0 0
      %1236 = vmatprep.subr.bf16.mxu0 0
      %1237 = vmatpush1.bf16.xpose.msra.mxu0 0
      %1238 = vmatprep.subr.bf16.mxu0 0
      %1239 = vmatpush1.bf16.xpose.msra.mxu0 0
      %1240 = vmatprep.subr.bf16.mxu0 0
      %1241 = vmatpush1.bf16.xpose.msra.mxu0 0
      %1242 = vmatprep.subr.bf16.mxu0 0
      %1243 = vmatpush1.bf16.xpose.msra.mxu0 0
      %1244 = vmatprep.subr.bf16.mxu0 0
      %1245 = vmatpush1.bf16.xpose.msra.mxu0 0
      %1246 = vmatprep.mubr.bf16.mxu0 0
      %1247 = vmatmul.mubr.bf16.gmra.mrb[0].mxu0 %v1059
      %v1248 = vpop.f32.mrb[0].mxu0
      %v1249 = vadd.f32 0.0, %v1248
      %v1250 = vpop.f32.mrb[0].mxu0
      %v1251 = vpop.f32.mrb[0].mxu0
      %v1252 = vadd.f32 0.0, %v1251
      %v1253 = vpop.f32.mrb[0].mxu0
      %1254 = vmatprep.mubr.bf16.mxu0 0
      %1255 = vmatmul.mubr.bf16.gmra.mrb[0].mxu0 %v1062
      %v1256 = vpop.f32.mrb[0].mxu0
      %v1257 = vadd.f32 0.0, %v1256
      %v1258 = vpop.f32.mrb[0].mxu0
      %v1259 = vpop.f32.mrb[0].mxu0
      %v1260 = vadd.f32 0.0, %v1259
      %v1261 = vpop.f32.mrb[0].mxu0
      %1262 = vmatprep.mubr.bf16.mxu0 0
      %1263 = vmatmul.mubr.bf16.gmra.mrb[0].mxu0 %v1065
      %v1264 = vpop.f32.mrb[0].mxu0
      %v1265 = vadd.f32 0.0, %v1264
      %v1266 = vpop.f32.mrb[0].mxu0
      %v1267 = vpop.f32.mrb[0].mxu0
      %v1268 = vadd.f32 0.0, %v1267
      %v1269 = vpop.f32.mrb[0].mxu0
      %1270 = vmatprep.mubr.bf16.mxu0 0
      %1271 = vmatmul.mubr.bf16.gmra.mrb[0].mxu0 %v1068
      %v1272 = vpop.f32.mrb[0].mxu0
      %v1273 = vadd.f32 0.0, %v1272
      %v1274 = vpop.f32.mrb[0].mxu0
      %v1275 = vpop.f32.mrb[0].mxu0
      %v1276 = vadd.f32 0.0, %v1275
      %v1277 = vpop.f32.mrb[0].mxu0
      %1278 = vmatprep.mubr.bf16.mxu0 0
      %1279 = vmatmul.mubr.bf16.gmra.mrb[0].mxu0 %v1071
      %v1280 = vpop.f32.mrb[0].mxu0
      %v1281 = vadd.f32 0.0, %v1280
      %v1282 = vpop.f32.mrb[0].mxu0
      %v1283 = vpop.f32.mrb[0].mxu0
      %v1284 = vadd.f32 0.0, %v1283
      %v1285 = vpop.f32.mrb[0].mxu0
      %1286 = vmatprep.mubr.bf16.mxu0 0
      %1287 = vmatmul.mubr.bf16.gmra.mrb[0].mxu0 %v1074
      %v1288 = vpop.f32.mrb[0].mxu0
      %v1289 = vadd.f32 0.0, %v1288
      %v1290 = vpop.f32.mrb[0].mxu0
      %v1291 = vpop.f32.mrb[0].mxu0
      %v1292 = vadd.f32 0.0, %v1291
      %v1293 = vpop.f32.mrb[0].mxu0
      %1294 = vmatprep.mubr.bf16.mxu0 0
      %1295 = vmatmul.mubr.bf16.gmra.mrb[0].mxu0 %v1077
      %v1296 = vpop.f32.mrb[0].mxu0
      %v1297 = vadd.f32 0.0, %v1296
      %v1298 = vpop.f32.mrb[0].mxu0
      %v1299 = vpop.f32.mrb[0].mxu0
      %v1300 = vadd.f32 0.0, %v1299
      %v1301 = vpop.f32.mrb[0].mxu0
      %1302 = vmatprep.mubr.bf16.mxu0 0
      %1303 = vmatmul.mubr.bf16.gmra.mrb[0].mxu0 %v1080
      %v1304 = vpop.f32.mrb[0].mxu0
      %v1305 = vadd.f32 0.0, %v1304
      %v1306 = vpop.f32.mrb[0].mxu0
      %v1307 = vpop.f32.mrb[0].mxu0
      %v1308 = vadd.f32 0.0, %v1307
      %v1309 = vpop.f32.mrb[0].mxu0
      %1310 = vmatprep.mubr.bf16.mxu0 0
      %1311 = vmatmul.mubr.bf16.gmra.mrb[0].mxu0 %v1083
      %v1312 = vpop.f32.mrb[0].mxu0
      %v1313 = vadd.f32 0.0, %v1312
      %v1314 = vpop.f32.mrb[0].mxu0
      %v1315 = vpop.f32.mrb[0].mxu0
      %v1316 = vadd.f32 0.0, %v1315
      %v1317 = vpop.f32.mrb[0].mxu0
      %1318 = vmatprep.mubr.bf16.mxu0 0
      %1319 = vmatmul.mubr.bf16.gmra.mrb[0].mxu0 %v1086
      %v1320 = vpop.f32.mrb[0].mxu0
      %v1321 = vadd.f32 0.0, %v1320
      %v1322 = vpop.f32.mrb[0].mxu0
      %v1323 = vpop.f32.mrb[0].mxu0
      %v1324 = vadd.f32 0.0, %v1323
      %v1325 = vpop.f32.mrb[0].mxu0
      %1326 = vmatprep.mubr.bf16.mxu0 0
      %1327 = vmatmul.mubr.bf16.gmra.mrb[0].mxu0 %v1089
      %v1328 = vpop.f32.mrb[0].mxu0
      %v1329 = vadd.f32 0.0, %v1328
      %v1330 = vpop.f32.mrb[0].mxu0
      %v1331 = vpop.f32.mrb[0].mxu0
      %v1332 = vadd.f32 0.0, %v1331
      %v1333 = vpop.f32.mrb[0].mxu0
      %1334 = vmatprep.mubr.bf16.mxu0 0
      %1335 = vmatmul.mubr.bf16.gmra.mrb[0].mxu0 %v1092
      %v1336 = vpop.f32.mrb[0].mxu0
      %v1337 = vadd.f32 0.0, %v1336
      %v1338 = vpop.f32.mrb[0].mxu0
      %v1339 = vpop.f32.mrb[0].mxu0
      %v1340 = vadd.f32 0.0, %v1339
      %v1341 = vpop.f32.mrb[0].mxu0
      %1342 = vmatprep.mubr.bf16.mxu0 0
      %1343 = vmatmul.mubr.bf16.gmra.mrb[0].mxu0 %v1095
      %v1344 = vpop.f32.mrb[0].mxu0
      %v1345 = vadd.f32 0.0, %v1344
      %v1346 = vpop.f32.mrb[0].mxu0
      %v1347 = vpop.f32.mrb[0].mxu0
      %v1348 = vadd.f32 0.0, %v1347
      %v1349 = vpop.f32.mrb[0].mxu0
      %1350 = vmatprep.mubr.bf16.mxu0 0
      %1351 = vmatmul.mubr.bf16.gmra.mrb[0].mxu0 %v1098
      %v1352 = vpop.f32.mrb[0].mxu0
      %v1353 = vadd.f32 0.0, %v1352
      %v1354 = vpop.f32.mrb[0].mxu0
      %v1355 = vpop.f32.mrb[0].mxu0
      %v1356 = vadd.f32 0.0, %v1355
      %v1357 = vpop.f32.mrb[0].mxu0
      %1358 = vmatprep.mubr.bf16.mxu0 0
      %1359 = vmatmul.mubr.bf16.gmra.mrb[0].mxu0 %v1101
      %v1360 = vpop.f32.mrb[0].mxu0
      %v1361 = vadd.f32 0.0, %v1360
      %v1362 = vpop.f32.mrb[0].mxu0
      %v1363 = vpop.f32.mrb[0].mxu0
      %v1364 = vadd.f32 0.0, %v1363
      %v1365 = vpop.f32.mrb[0].mxu0
      %1366 = vmatprep.mubr.bf16.mxu0 0
      %1367 = vmatmul.mubr.bf16.gmra.mrb[0].mxu0 %v1104
      %v1368 = vpop.f32.mrb[0].mxu0
      %v1369 = vadd.f32 0.0, %v1368
      %v1370 = vpop.f32.mrb[0].mxu0
      %v1371 = vpop.f32.mrb[0].mxu0
      %v1372 = vadd.f32 0.0, %v1371
      %v1373 = vpop.f32.mrb[0].mxu0
      %1374 = vmatprep.mubr.bf16.mxu0 0
      %1375 = vmatmul.mubr.bf16.gmra.mrb[0].mxu0 %v1107
      %v1376 = vpop.f32.mrb[0].mxu0
      %v1377 = vadd.f32 0.0, %v1376
      %v1378 = vpop.f32.mrb[0].mxu0
      %v1379 = vpop.f32.mrb[0].mxu0
      %v1380 = vadd.f32 0.0, %v1379
      %v1381 = vpop.f32.mrb[0].mxu0
      %1382 = vmatprep.mubr.bf16.mxu0 0
      %1383 = vmatmul.mubr.bf16.gmra.mrb[0].mxu0 %v1110
      %v1384 = vpop.f32.mrb[0].mxu0
      %v1385 = vadd.f32 0.0, %v1384
      %v1386 = vpop.f32.mrb[0].mxu0
      %v1387 = vpop.f32.mrb[0].mxu0
      %v1388 = vadd.f32 0.0, %v1387
      %v1389 = vpop.f32.mrb[0].mxu0
      %1390 = vmatprep.mubr.bf16.mxu0 0
      %1391 = vmatmul.mubr.bf16.gmra.mrb[0].mxu0 %v1113
      %v1392 = vpop.f32.mrb[0].mxu0
      %v1393 = vadd.f32 0.0, %v1392
      %v1394 = vpop.f32.mrb[0].mxu0
      %v1395 = vpop.f32.mrb[0].mxu0
      %v1396 = vadd.f32 0.0, %v1395
      %v1397 = vpop.f32.mrb[0].mxu0
      %1398 = vmatprep.mubr.bf16.mxu0 0
      %1399 = vmatmul.mubr.bf16.gmra.mrb[0].mxu0 %v1116
      %v1400 = vpop.f32.mrb[0].mxu0
      %v1401 = vadd.f32 0.0, %v1400
      %v1402 = vpop.f32.mrb[0].mxu0
      %v1403 = vpop.f32.mrb[0].mxu0
      %v1404 = vadd.f32 0.0, %v1403
      %v1405 = vpop.f32.mrb[0].mxu0
      %1406 = vmatprep.mubr.bf16.mxu0 0
      %1407 = vmatmul.mubr.bf16.gmra.mrb[0].mxu0 %v1119
      %v1408 = vpop.f32.mrb[0].mxu0
      %v1409 = vadd.f32 0.0, %v1408
      %v1410 = vpop.f32.mrb[0].mxu0
      %v1411 = vpop.f32.mrb[0].mxu0
      %v1412 = vadd.f32 0.0, %v1411
      %v1413 = vpop.f32.mrb[0].mxu0
      %1414 = vmatprep.mubr.bf16.mxu0 0
      %1415 = vmatmul.mubr.bf16.gmra.mrb[0].mxu0 %v1122
      %v1416 = vpop.f32.mrb[0].mxu0
      %v1417 = vadd.f32 0.0, %v1416
      %v1418 = vpop.f32.mrb[0].mxu0
      %v1419 = vpop.f32.mrb[0].mxu0
      %v1420 = vadd.f32 0.0, %v1419
      %v1421 = vpop.f32.mrb[0].mxu0
      %1422 = vmatprep.mubr.bf16.mxu0 0
      %1423 = vmatmul.mubr.bf16.gmra.mrb[0].mxu0 %v1125
      %v1424 = vpop.f32.mrb[0].mxu0
      %v1425 = vadd.f32 0.0, %v1424
      %v1426 = vpop.f32.mrb[0].mxu0
      %v1427 = vpop.f32.mrb[0].mxu0
      %v1428 = vadd.f32 0.0, %v1427
      %v1429 = vpop.f32.mrb[0].mxu0
      %1430 = vmatprep.mubr.bf16.mxu0 0
      %1431 = vmatmul.mubr.bf16.gmra.mrb[0].mxu0 %v1128
      %v1432 = vpop.f32.mrb[0].mxu0
      %v1433 = vadd.f32 0.0, %v1432
      %v1434 = vpop.f32.mrb[0].mxu0
      %v1435 = vpop.f32.mrb[0].mxu0
      %v1436 = vadd.f32 0.0, %v1435
      %v1437 = vpop.f32.mrb[0].mxu0
      %1438 = vmatprep.mubr.bf16.mxu0 0
      %1439 = vmatmul.mubr.bf16.gmra.mrb[0].mxu0 %v1131
      %v1440 = vpop.f32.mrb[0].mxu0
      %v1441 = vadd.f32 0.0, %v1440
      %v1442 = vpop.f32.mrb[0].mxu0
      %v1443 = vpop.f32.mrb[0].mxu0
      %v1444 = vadd.f32 0.0, %v1443
      %v1445 = vpop.f32.mrb[0].mxu0
      %1446 = vmatprep.mubr.bf16.mxu0 0
      %1447 = vmatmul.mubr.bf16.gmra.mrb[0].mxu0 %v1134
      %v1448 = vpop.f32.mrb[0].mxu0
      %v1449 = vadd.f32 0.0, %v1448
      %v1450 = vpop.f32.mrb[0].mxu0
      %v1451 = vpop.f32.mrb[0].mxu0
      %v1452 = vadd.f32 0.0, %v1451
      %v1453 = vpop.f32.mrb[0].mxu0
      %1454 = vmatprep.mubr.bf16.mxu0 0
      %1455 = vmatmul.mubr.bf16.gmra.mrb[0].mxu0 %v1137
      %v1456 = vpop.f32.mrb[0].mxu0
      %v1457 = vadd.f32 0.0, %v1456
      %v1458 = vpop.f32.mrb[0].mxu0
      %v1459 = vpop.f32.mrb[0].mxu0
      %v1460 = vadd.f32 0.0, %v1459
      %v1461 = vpop.f32.mrb[0].mxu0
      %1462 = vmatprep.mubr.bf16.mxu0 0
      %1463 = vmatmul.mubr.bf16.gmra.mrb[0].mxu0 %v1140
      %v1464 = vpop.f32.mrb[0].mxu0
      %v1465 = vadd.f32 0.0, %v1464
      %v1466 = vpop.f32.mrb[0].mxu0
      %v1467 = vpop.f32.mrb[0].mxu0
      %v1468 = vadd.f32 0.0, %v1467
      %v1469 = vpop.f32.mrb[0].mxu0
      %1470 = vmatprep.mubr.bf16.mxu0 0
      %1471 = vmatmul.mubr.bf16.gmra.mrb[0].mxu0 %v1143
      %v1472 = vpop.f32.mrb[0].mxu0
      %v1473 = vadd.f32 0.0, %v1472
      %v1474 = vpop.f32.mrb[0].mxu0
      %v1475 = vpop.f32.mrb[0].mxu0
      %v1476 = vadd.f32 0.0, %v1475
      %v1477 = vpop.f32.mrb[0].mxu0
      %1478 = vmatprep.mubr.bf16.mxu0 0
      %1479 = vmatmul.mubr.bf16.gmra.mrb[0].mxu0 %v1146
      %v1480 = vpop.f32.mrb[0].mxu0
      %v1481 = vadd.f32 0.0, %v1480
      %v1482 = vpop.f32.mrb[0].mxu0
      %v1483 = vpop.f32.mrb[0].mxu0
      %v1484 = vadd.f32 0.0, %v1483
      %v1485 = vpop.f32.mrb[0].mxu0
      %1486 = vmatprep.mubr.bf16.mxu0 0
      %1487 = vmatmul.mubr.bf16.gmra.mrb[0].mxu0 %v1149
      %v1488 = vpop.f32.mrb[0].mxu0
      %v1489 = vadd.f32 0.0, %v1488
      %v1490 = vpop.f32.mrb[0].mxu0
      %v1491 = vpop.f32.mrb[0].mxu0
      %v1492 = vadd.f32 0.0, %v1491
      %v1493 = vpop.f32.mrb[0].mxu0
      %1494 = vmatprep.mubr.bf16.mxu0 0
      %1495 = vmatmul.mubr.bf16.gmra.mrb[0].mxu0 %v1152
      %v1496 = vpop.f32.mrb[0].mxu0
      %v1497 = vadd.f32 0.0, %v1496
      %v1498 = vpop.f32.mrb[0].mxu0
      %v1499 = vpop.f32.mrb[0].mxu0
      %v1500 = vadd.f32 0.0, %v1499
      %v1501 = vpop.f32.mrb[0].mxu0
      %1502 = vmatprep.mubr.bf16.mxu0 0
      %1503 = vmatmul.mubr.bf16.gmra.mrb[0].mxu0 %v1155
      %v1504 = vpop.f32.mrb[0].mxu0
      %v1505 = vadd.f32 0.0, %v1504
      %v1506 = vpop.f32.mrb[0].mxu0
      %v1507 = vpop.f32.mrb[0].mxu0
      %v1508 = vadd.f32 0.0, %v1507
      %v1509 = vpop.f32.mrb[0].mxu0
      %1510 = vmatprep.mubr.bf16.mxu0 0
      %1511 = vmatmul.mubr.bf16.gmra.mrb[0].mxu0 %v1158
      %v1512 = vpop.f32.mrb[0].mxu0
      %v1513 = vadd.f32 0.0, %v1512
      %v1514 = vpop.f32.mrb[0].mxu0
      %v1515 = vpop.f32.mrb[0].mxu0
      %v1516 = vadd.f32 0.0, %v1515
      %v1517 = vpop.f32.mrb[0].mxu0
      %1518 = vmatprep.mubr.bf16.mxu0 0
      %1519 = vmatmul.mubr.bf16.gmra.mrb[0].mxu0 %v1161
      %v1520 = vpop.f32.mrb[0].mxu0
      %v1521 = vadd.f32 0.0, %v1520
      %v1522 = vpop.f32.mrb[0].mxu0
      %v1523 = vpop.f32.mrb[0].mxu0
      %v1524 = vadd.f32 0.0, %v1523
      %v1525 = vpop.f32.mrb[0].mxu0
      %1526 = vmatprep.mubr.bf16.mxu0 0
      %1527 = vmatmul.mubr.bf16.gmra.mrb[0].mxu0 %v1164
      %v1528 = vpop.f32.mrb[0].mxu0
      %v1529 = vadd.f32 0.0, %v1528
      %v1530 = vpop.f32.mrb[0].mxu0
      %v1531 = vpop.f32.mrb[0].mxu0
      %v1532 = vadd.f32 0.0, %v1531
      %v1533 = vpop.f32.mrb[0].mxu0
      %1534 = vmatprep.mubr.bf16.mxu0 0
      %1535 = vmatmul.mubr.bf16.gmra.mrb[0].mxu0 %v1167
      %v1536 = vpop.f32.mrb[0].mxu0
      %v1537 = vadd.f32 0.0, %v1536
      %v1538 = vpop.f32.mrb[0].mxu0
      %v1539 = vpop.f32.mrb[0].mxu0
      %v1540 = vadd.f32 0.0, %v1539
      %v1541 = vpop.f32.mrb[0].mxu0
      %1542 = vmatprep.mubr.bf16.mxu0 0
      %1543 = vmatmul.mubr.bf16.gmra.mrb[0].mxu0 %v1170
      %v1544 = vpop.f32.mrb[0].mxu0
      %v1545 = vadd.f32 0.0, %v1544
      %v1546 = vpop.f32.mrb[0].mxu0
      %v1547 = vpop.f32.mrb[0].mxu0
      %v1548 = vadd.f32 0.0, %v1547
      %v1549 = vpop.f32.mrb[0].mxu0
      %1550 = vmatprep.mubr.bf16.mxu0 0
      %1551 = vmatmul.mubr.bf16.gmra.mrb[0].mxu0 %v1173
      %v1552 = vpop.f32.mrb[0].mxu0
      %v1553 = vadd.f32 0.0, %v1552
      %v1554 = vpop.f32.mrb[0].mxu0
      %v1555 = vpop.f32.mrb[0].mxu0
      %v1556 = vadd.f32 0.0, %v1555
      %v1557 = vpop.f32.mrb[0].mxu0
      %1558 = vmatprep.mubr.bf16.mxu0 0
      %1559 = vmatmul.mubr.bf16.gmra.mrb[0].mxu0 %v1176
      %v1560 = vpop.f32.mrb[0].mxu0
      %v1561 = vadd.f32 0.0, %v1560
      %v1562 = vpop.f32.mrb[0].mxu0
      %v1563 = vpop.f32.mrb[0].mxu0
      %v1564 = vadd.f32 0.0, %v1563
      %v1565 = vpop.f32.mrb[0].mxu0
      %1566 = vmatprep.mubr.bf16.mxu0 0
      %1567 = vmatmul.mubr.bf16.gmra.mrb[0].mxu0 %v1179
      %v1568 = vpop.f32.mrb[0].mxu0
      %v1569 = vadd.f32 0.0, %v1568
      %v1570 = vpop.f32.mrb[0].mxu0
      %v1571 = vpop.f32.mrb[0].mxu0
      %v1572 = vadd.f32 0.0, %v1571
      %v1573 = vpop.f32.mrb[0].mxu0
      %1574 = vmatprep.mubr.bf16.mxu0 0
      %1575 = vmatmul.mubr.bf16.gmra.mrb[0].mxu0 %v1182
      %v1576 = vpop.f32.mrb[0].mxu0
      %v1577 = vadd.f32 0.0, %v1576
      %v1578 = vpop.f32.mrb[0].mxu0
      %v1579 = vpop.f32.mrb[0].mxu0
      %v1580 = vadd.f32 0.0, %v1579
      %v1581 = vpop.f32.mrb[0].mxu0
      %1582 = vmatprep.mubr.bf16.mxu0 0
      %1583 = vmatmul.mubr.bf16.gmra.mrb[0].mxu0 %v1185
      %v1584 = vpop.f32.mrb[0].mxu0
      %v1585 = vadd.f32 0.0, %v1584
      %v1586 = vpop.f32.mrb[0].mxu0
      %v1587 = vpop.f32.mrb[0].mxu0
      %v1588 = vadd.f32 0.0, %v1587
      %v1589 = vpop.f32.mrb[0].mxu0
      %1590 = vmatprep.mubr.bf16.mxu0 0
      %1591 = vmatmul.mubr.bf16.gmra.mrb[0].mxu0 %v1188
      %v1592 = vpop.f32.mrb[0].mxu0
      %v1593 = vadd.f32 0.0, %v1592
      %v1594 = vpop.f32.mrb[0].mxu0
      %v1595 = vpop.f32.mrb[0].mxu0
      %v1596 = vadd.f32 0.0, %v1595
      %v1597 = vpop.f32.mrb[0].mxu0
      %1598 = vmatprep.mubr.bf16.mxu0 0
      %1599 = vmatmul.mubr.bf16.gmra.mrb[0].mxu0 %v1191
      %v1600 = vpop.f32.mrb[0].mxu0
      %v1601 = vadd.f32 0.0, %v1600
      %v1602 = vpop.f32.mrb[0].mxu0
      %v1603 = vpop.f32.mrb[0].mxu0
      %v1604 = vadd.f32 0.0, %v1603
      %v1605 = vpop.f32.mrb[0].mxu0
      %1606 = vmatprep.mubr.bf16.mxu0 0
      %1607 = vmatmul.mubr.bf16.gmra.mrb[0].mxu0 %v1194
      %v1608 = vpop.f32.mrb[0].mxu0
      %v1609 = vadd.f32 0.0, %v1608
      %v1610 = vpop.f32.mrb[0].mxu0
      %v1611 = vpop.f32.mrb[0].mxu0
      %v1612 = vadd.f32 0.0, %v1611
      %v1613 = vpop.f32.mrb[0].mxu0
      %1614 = vmatprep.mubr.bf16.mxu0 0
      %1615 = vmatmul.mubr.bf16.gmra.mrb[0].mxu0 %v1197
      %v1616 = vpop.f32.mrb[0].mxu0
      %v1617 = vadd.f32 0.0, %v1616
      %v1618 = vpop.f32.mrb[0].mxu0
      %v1619 = vpop.f32.mrb[0].mxu0
      %v1620 = vadd.f32 0.0, %v1619
      %v1621 = vpop.f32.mrb[0].mxu0
      %1622 = vmatprep.mubr.bf16.mxu0 0
      %1623 = vmatmul.mubr.bf16.gmra.mrb[0].mxu0 %v1200
      %v1624 = vpop.f32.mrb[0].mxu0
      %v1625 = vadd.f32 0.0, %v1624
      %v1626 = vpop.f32.mrb[0].mxu0
      %v1627 = vpop.f32.mrb[0].mxu0
      %v1628 = vadd.f32 0.0, %v1627
      %v1629 = vpop.f32.mrb[0].mxu0
      %1630 = vdwg.mxu0
      %v1631 = vmul.f32 %v1249, 0.35355338
      %v1632 = vmul.f32 %v1252, 0.35355338
      %v1633 = vmul.f32 %v1257, 0.35355338
      %v1634 = vmul.f32 %v1260, 0.35355338
      %v1635 = vmul.f32 %v1265, 0.35355338
      %v1636 = vmul.f32 %v1268, 0.35355338
      %v1637 = vmul.f32 %v1273, 0.35355338
      %v1638 = vmul.f32 %v1276, 0.35355338
      %v1639 = vmul.f32 %v1281, 0.35355338
      %v1640 = vmul.f32 %v1284, 0.35355338
      %v1641 = vmul.f32 %v1289, 0.35355338
      %v1642 = vmul.f32 %v1292, 0.35355338
      %v1643 = vmul.f32 %v1297, 0.35355338
      %v1644 = vmul.f32 %v1300, 0.35355338
      %v1645 = vmul.f32 %v1305, 0.35355338
      %v1646 = vmul.f32 %v1308, 0.35355338
      %v1647 = vmul.f32 %v1313, 0.35355338
      %v1648 = vmul.f32 %v1316, 0.35355338
      %v1649 = vmul.f32 %v1321, 0.35355338
      %v1650 = vmul.f32 %v1324, 0.35355338
      %v1651 = vmul.f32 %v1329, 0.35355338
      %v1652 = vmul.f32 %v1332, 0.35355338
      %v1653 = vmul.f32 %v1337, 0.35355338
      %v1654 = vmul.f32 %v1340, 0.35355338
      %v1655 = vmul.f32 %v1345, 0.35355338
      %v1656 = vmul.f32 %v1348, 0.35355338
      %v1657 = vmul.f32 %v1353, 0.35355338
      %v1658 = vmul.f32 %v1356, 0.35355338
      %v1659 = vmul.f32 %v1361, 0.35355338
      %v1660 = vmul.f32 %v1364, 0.35355338
      %v1661 = vmul.f32 %v1369, 0.35355338
      %v1662 = vmul.f32 %v1372, 0.35355338
      %v1663 = vmul.f32 %v1377, 0.35355338
      %v1664 = vmul.f32 %v1380, 0.35355338
      %v1665 = vmul.f32 %v1385, 0.35355338
      %v1666 = vmul.f32 %v1388, 0.35355338
      %v1667 = vmul.f32 %v1393, 0.35355338
      %v1668 = vmul.f32 %v1396, 0.35355338
      %v1669 = vmul.f32 %v1401, 0.35355338
      %v1670 = vmul.f32 %v1404, 0.35355338
      %v1671 = vmul.f32 %v1409, 0.35355338
      %v1672 = vmul.f32 %v1412, 0.35355338
      %v1673 = vmul.f32 %v1417, 0.35355338
      %v1674 = vmul.f32 %v1420, 0.35355338
      %v1675 = vmul.f32 %v1425, 0.35355338
      %v1676 = vmul.f32 %v1428, 0.35355338
      %v1677 = vmul.f32 %v1433, 0.35355338
      %v1678 = vmul.f32 %v1436, 0.35355338
      %v1679 = vmul.f32 %v1441, 0.35355338
      %v1680 = vmul.f32 %v1444, 0.35355338
      %v1681 = vmul.f32 %v1449, 0.35355338
      %v1682 = vmul.f32 %v1452, 0.35355338
      %v1683 = vmul.f32 %v1457, 0.35355338
      %v1684 = vmul.f32 %v1460, 0.35355338
      %v1685 = vmul.f32 %v1465, 0.35355338
      %v1686 = vmul.f32 %v1468, 0.35355338
      %v1687 = vmul.f32 %v1473, 0.35355338
      %v1688 = vmul.f32 %v1476, 0.35355338
      %v1689 = vmul.f32 %v1481, 0.35355338
      %v1690 = vmul.f32 %v1484, 0.35355338
      %v1691 = vmul.f32 %v1489, 0.35355338
      %v1692 = vmul.f32 %v1492, 0.35355338
      %v1693 = vmul.f32 %v1497, 0.35355338
      %v1694 = vmul.f32 %v1500, 0.35355338
      %v1695 = vmul.f32 %v1505, 0.35355338
      %v1696 = vmul.f32 %v1508, 0.35355338
      %v1697 = vmul.f32 %v1513, 0.35355338
      %v1698 = vmul.f32 %v1516, 0.35355338
      %v1699 = vmul.f32 %v1521, 0.35355338
      %v1700 = vmul.f32 %v1524, 0.35355338
      %v1701 = vmul.f32 %v1529, 0.35355338
      %v1702 = vmul.f32 %v1532, 0.35355338
      %v1703 = vmul.f32 %v1537, 0.35355338
      %v1704 = vmul.f32 %v1540, 0.35355338
      %v1705 = vmul.f32 %v1545, 0.35355338
      %v1706 = vmul.f32 %v1548, 0.35355338
      %v1707 = vmul.f32 %v1553, 0.35355338
      %v1708 = vmul.f32 %v1556, 0.35355338
      %v1709 = vmul.f32 %v1561, 0.35355338
      %v1710 = vmul.f32 %v1564, 0.35355338
      %v1711 = vmul.f32 %v1569, 0.35355338
      %v1712 = vmul.f32 %v1572, 0.35355338
      %v1713 = vmul.f32 %v1577, 0.35355338
      %v1714 = vmul.f32 %v1580, 0.35355338
      %v1715 = vmul.f32 %v1585, 0.35355338
      %v1716 = vmul.f32 %v1588, 0.35355338
      %v1717 = vmul.f32 %v1593, 0.35355338
      %v1718 = vmul.f32 %v1596, 0.35355338
      %v1719 = vmul.f32 %v1601, 0.35355338
      %v1720 = vmul.f32 %v1604, 0.35355338
      %v1721 = vmul.f32 %v1609, 0.35355338
      %v1722 = vmul.f32 %v1612, 0.35355338
      %v1723 = vmul.f32 %v1617, 0.35355338
      %v1724 = vmul.f32 %v1620, 0.35355338
      %v1725 = vmul.f32 %v1625, 0.35355338
      %v1726 = vmul.f32 %v1628, 0.35355338
      %v1727 = vld [vmem:[%s9] sm:$0xff]
      %v1728 = vld [vmem:[%s9 + $0x8] sm:$0xff]
      %v1729 = vld [vmem:[%s9 + $0x10] sm:$0xff]
      %v1730 = vld [vmem:[%s9 + $0x18] sm:$0xff]
      %v1731 = vld [vmem:[%s9 + $0x20] sm:$0xff]
      %v1732 = vld [vmem:[%s9 + $0x28] sm:$0xff]
      %v1733 = vld [vmem:[%s9 + $0x30] sm:$0xff]
      %v1734 = vld [vmem:[%s9 + $0x38] sm:$0xff]
      %v1735 = vld [vmem:[%s9 + $0x40] sm:$0xff]
      %v1736 = vld [vmem:[%s9 + $0x48] sm:$0xff]
      %v1737 = vld [vmem:[%s9 + $0x50] sm:$0xff]
      %v1738 = vld [vmem:[%s9 + $0x58] sm:$0xff]
      %v1739 = vld [vmem:[%s9 + $0x60] sm:$0xff]
      %v1740 = vld [vmem:[%s9 + $0x68] sm:$0xff]
      %v1741 = vld [vmem:[%s9 + $0x70] sm:$0xff]
      %v1742 = vld [vmem:[%s9 + $0x78] sm:$0xff]
      %v1743 = vld [vmem:[%s9 + $0x80] sm:$0xff]
      %v1744 = vld [vmem:[%s9 + $0x88] sm:$0xff]
      %v1745 = vld [vmem:[%s9 + $0x90] sm:$0xff]
      %v1746 = vld [vmem:[%s9 + $0x98] sm:$0xff]
      %v1747 = vld [vmem:[%s9 + $0xa0] sm:$0xff]
      %v1748 = vld [vmem:[%s9 + $0xa8] sm:$0xff]
      %v1749 = vld [vmem:[%s9 + $0xb0] sm:$0xff]
      %v1750 = vld [vmem:[%s9 + $0xb8] sm:$0xff]
      %v1751 = vld [vmem:[%s9 + $0xc0] sm:$0xff]
      %v1752 = vld [vmem:[%s9 + $0xc8] sm:$0xff]
      %v1753 = vld [vmem:[%s9 + $0xd0] sm:$0xff]
      %v1754 = vld [vmem:[%s9 + $0xd8] sm:$0xff]
      %v1755 = vld [vmem:[%s9 + $0xe0] sm:$0xff]
      %v1756 = vld [vmem:[%s9 + $0xe8] sm:$0xff]
      %v1757 = vld [vmem:[%s9 + $0xf0] sm:$0xff]
      %v1758 = vld [vmem:[%s9 + $0xf8] sm:$0xff]
      %v1759 = vld [vmem:[%s9 + $0x100] sm:$0xff]
      %v1760 = vld [vmem:[%s9 + $0x108] sm:$0xff]
      %v1761 = vld [vmem:[%s9 + $0x110] sm:$0xff]
      %v1762 = vld [vmem:[%s9 + $0x118] sm:$0xff]
      %v1763 = vld [vmem:[%s9 + $0x120] sm:$0xff]
      %v1764 = vld [vmem:[%s9 + $0x128] sm:$0xff]
      %v1765 = vld [vmem:[%s9 + $0x130] sm:$0xff]
      %v1766 = vld [vmem:[%s9 + $0x138] sm:$0xff]
      %v1767 = vld [vmem:[%s9 + $0x140] sm:$0xff]
      %v1768 = vld [vmem:[%s9 + $0x148] sm:$0xff]
      %v1769 = vld [vmem:[%s9 + $0x150] sm:$0xff]
      %v1770 = vld [vmem:[%s9 + $0x158] sm:$0xff]
      %v1771 = vld [vmem:[%s9 + $0x160] sm:$0xff]
      %v1772 = vld [vmem:[%s9 + $0x168] sm:$0xff]
      %v1773 = vld [vmem:[%s9 + $0x170] sm:$0xff]
      %v1774 = vld [vmem:[%s9 + $0x178] sm:$0xff]
      %v1775 = vld [vmem:[%s9 + $0x180] sm:$0xff]
      %v1776 = vld [vmem:[%s9 + $0x188] sm:$0xff]
      %v1777 = vld [vmem:[%s9 + $0x190] sm:$0xff]
      %v1778 = vld [vmem:[%s9 + $0x198] sm:$0xff]
      %v1779 = vld [vmem:[%s9 + $0x1a0] sm:$0xff]
      %v1780 = vld [vmem:[%s9 + $0x1a8] sm:$0xff]
      %v1781 = vld [vmem:[%s9 + $0x1b0] sm:$0xff]
      %v1782 = vld [vmem:[%s9 + $0x1b8] sm:$0xff]
      %v1783 = vld [vmem:[%s9 + $0x1c0] sm:$0xff]
      %v1784 = vld [vmem:[%s9 + $0x1c8] sm:$0xff]
      %v1785 = vld [vmem:[%s9 + $0x1d0] sm:$0xff]
      %v1786 = vld [vmem:[%s9 + $0x1d8] sm:$0xff]
      %v1787 = vld [vmem:[%s9 + $0x1e0] sm:$0xff]
      %v1788 = vld [vmem:[%s9 + $0x1e8] sm:$0xff]
      %v1789 = vld [vmem:[%s9 + $0x1f0] sm:$0xff]
      %v1790 = vld [vmem:[%s9 + $0x1f8] sm:$0xff]
      %v1791 = vld [vmem:[%s9 + $0x200] sm:$0xff]
      %v1792 = vld [vmem:[%s9 + $0x208] sm:$0xff]
      %v1793 = vld [vmem:[%s9 + $0x210] sm:$0xff]
      %v1794 = vld [vmem:[%s9 + $0x218] sm:$0xff]
      %v1795 = vld [vmem:[%s9 + $0x220] sm:$0xff]
      %v1796 = vld [vmem:[%s9 + $0x228] sm:$0xff]
      %v1797 = vld [vmem:[%s9 + $0x230] sm:$0xff]
      %v1798 = vld [vmem:[%s9 + $0x238] sm:$0xff]
      %v1799 = vld [vmem:[%s9 + $0x240] sm:$0xff]
      %v1800 = vld [vmem:[%s9 + $0x248] sm:$0xff]
      %v1801 = vld [vmem:[%s9 + $0x250] sm:$0xff]
      %v1802 = vld [vmem:[%s9 + $0x258] sm:$0xff]
      %v1803 = vld [vmem:[%s9 + $0x260] sm:$0xff]
      %v1804 = vld [vmem:[%s9 + $0x268] sm:$0xff]
      %v1805 = vld [vmem:[%s9 + $0x270] sm:$0xff]
      %v1806 = vld [vmem:[%s9 + $0x278] sm:$0xff]
      %v1807 = vld [vmem:[%s9 + $0x280] sm:$0xff]
      %v1808 = vld [vmem:[%s9 + $0x288] sm:$0xff]
      %v1809 = vld [vmem:[%s9 + $0x290] sm:$0xff]
      %v1810 = vld [vmem:[%s9 + $0x298] sm:$0xff]
      %v1811 = vld [vmem:[%s9 + $0x2a0] sm:$0xff]
      %v1812 = vld [vmem:[%s9 + $0x2a8] sm:$0xff]
      %v1813 = vld [vmem:[%s9 + $0x2b0] sm:$0xff]
      %v1814 = vld [vmem:[%s9 + $0x2b8] sm:$0xff]
      %v1815 = vld [vmem:[%s9 + $0x2c0] sm:$0xff]
      %v1816 = vld [vmem:[%s9 + $0x2c8] sm:$0xff]
      %v1817 = vld [vmem:[%s9 + $0x2d0] sm:$0xff]
      %v1818 = vld [vmem:[%s9 + $0x2d8] sm:$0xff]
      %v1819 = vld [vmem:[%s9 + $0x2e0] sm:$0xff]
      %v1820 = vld [vmem:[%s9 + $0x2e8] sm:$0xff]
      %v1821 = vld [vmem:[%s9 + $0x2f0] sm:$0xff]
      %v1822 = vld [vmem:[%s9 + $0x2f8] sm:$0xff]
      %v1823 = vadd.f32 %v1631, %v1727
      %v1824 = vadd.f32 %v1632, %v1728
      %v1825 = vadd.f32 %v1633, %v1729
      %v1826 = vadd.f32 %v1634, %v1730
      %v1827 = vadd.f32 %v1635, %v1731
      %v1828 = vadd.f32 %v1636, %v1732
      %v1829 = vadd.f32 %v1637, %v1733
      %v1830 = vadd.f32 %v1638, %v1734
      %v1831 = vadd.f32 %v1639, %v1735
      %v1832 = vadd.f32 %v1640, %v1736
      %v1833 = vadd.f32 %v1641, %v1737
      %v1834 = vadd.f32 %v1642, %v1738
      %v1835 = vadd.f32 %v1643, %v1739
      %v1836 = vadd.f32 %v1644, %v1740
      %v1837 = vadd.f32 %v1645, %v1741
      %v1838 = vadd.f32 %v1646, %v1742
      %v1839 = vadd.f32 %v1647, %v1743
      %v1840 = vadd.f32 %v1648, %v1744
      %v1841 = vadd.f32 %v1649, %v1745
      %v1842 = vadd.f32 %v1650, %v1746
      %v1843 = vadd.f32 %v1651, %v1747
      %v1844 = vadd.f32 %v1652, %v1748
      %v1845 = vadd.f32 %v1653, %v1749
      %v1846 = vadd.f32 %v1654, %v1750
      %v1847 = vadd.f32 %v1655, %v1751
      %v1848 = vadd.f32 %v1656, %v1752
      %v1849 = vadd.f32 %v1657, %v1753
      %v1850 = vadd.f32 %v1658, %v1754
      %v1851 = vadd.f32 %v1659, %v1755
      %v1852 = vadd.f32 %v1660, %v1756
      %v1853 = vadd.f32 %v1661, %v1757
      %v1854 = vadd.f32 %v1662, %v1758
      %v1855 = vadd.f32 %v1663, %v1759
      %v1856 = vadd.f32 %v1664, %v1760
      %v1857 = vadd.f32 %v1665, %v1761
      %v1858 = vadd.f32 %v1666, %v1762
      %v1859 = vadd.f32 %v1667, %v1763
      %v1860 = vadd.f32 %v1668, %v1764
      %v1861 = vadd.f32 %v1669, %v1765
      %v1862 = vadd.f32 %v1670, %v1766
      %v1863 = vadd.f32 %v1671, %v1767
      %v1864 = vadd.f32 %v1672, %v1768
      %v1865 = vadd.f32 %v1673, %v1769
      %v1866 = vadd.f32 %v1674, %v1770
      %v1867 = vadd.f32 %v1675, %v1771
      %v1868 = vadd.f32 %v1676, %v1772
      %v1869 = vadd.f32 %v1677, %v1773
      %v1870 = vadd.f32 %v1678, %v1774
      %v1871 = vadd.f32 %v1679, %v1775
      %v1872 = vadd.f32 %v1680, %v1776
      %v1873 = vadd.f32 %v1681, %v1777
      %v1874 = vadd.f32 %v1682, %v1778
      %v1875 = vadd.f32 %v1683, %v1779
      %v1876 = vadd.f32 %v1684, %v1780
      %v1877 = vadd.f32 %v1685, %v1781
      %v1878 = vadd.f32 %v1686, %v1782
      %v1879 = vadd.f32 %v1687, %v1783
      %v1880 = vadd.f32 %v1688, %v1784
      %v1881 = vadd.f32 %v1689, %v1785
      %v1882 = vadd.f32 %v1690, %v1786
      %v1883 = vadd.f32 %v1691, %v1787
      %v1884 = vadd.f32 %v1692, %v1788
      %v1885 = vadd.f32 %v1693, %v1789
      %v1886 = vadd.f32 %v1694, %v1790
      %v1887 = vadd.f32 %v1695, %v1791
      %v1888 = vadd.f32 %v1696, %v1792
      %v1889 = vadd.f32 %v1697, %v1793
      %v1890 = vadd.f32 %v1698, %v1794
      %v1891 = vadd.f32 %v1699, %v1795
      %v1892 = vadd.f32 %v1700, %v1796
      %v1893 = vadd.f32 %v1701, %v1797
      %v1894 = vadd.f32 %v1702, %v1798
      %v1895 = vadd.f32 %v1703, %v1799
      %v1896 = vadd.f32 %v1704, %v1800
      %v1897 = vadd.f32 %v1705, %v1801
      %v1898 = vadd.f32 %v1706, %v1802
      %v1899 = vadd.f32 %v1707, %v1803
      %v1900 = vadd.f32 %v1708, %v1804
      %v1901 = vadd.f32 %v1709, %v1805
      %v1902 = vadd.f32 %v1710, %v1806
      %v1903 = vadd.f32 %v1711, %v1807
      %v1904 = vadd.f32 %v1712, %v1808
      %v1905 = vadd.f32 %v1713, %v1809
      %v1906 = vadd.f32 %v1714, %v1810
      %v1907 = vadd.f32 %v1715, %v1811
      %v1908 = vadd.f32 %v1716, %v1812
      %v1909 = vadd.f32 %v1717, %v1813
      %v1910 = vadd.f32 %v1718, %v1814
      %v1911 = vadd.f32 %v1719, %v1815
      %v1912 = vadd.f32 %v1720, %v1816
      %v1913 = vadd.f32 %v1721, %v1817
      %v1914 = vadd.f32 %v1722, %v1818
      %v1915 = vadd.f32 %v1723, %v1819
      %v1916 = vadd.f32 %v1724, %v1820
      %v1917 = vadd.f32 %v1725, %v1821
      %v1918 = vadd.f32 %v1726, %v1822
      %vm1919 = vcmask 523264
      %v1920 = vsel %vm1919, %v1823, -inf
      %1921 = vmax.xlane.f32.xlu0 %v1920
      %v1922 = vpop.xlane.xlu0 %1921
      %v1923 = vsel %vm1919, %v1824, -inf
      %1924 = vmax.xlane.f32.xlu0 %v1923
      %v1925 = vpop.xlane.xlu0 %1924
      %v1926 = vsel %vm1919, %v1825, -inf
      %1927 = vmax.xlane.f32.xlu0 %v1926
      %v1928 = vpop.xlane.xlu0 %1927
      %v1929 = vsel %vm1919, %v1826, -inf
      %1930 = vmax.xlane.f32.xlu0 %v1929
      %v1931 = vpop.xlane.xlu0 %1930
      %v1932 = vsel %vm1919, %v1827, -inf
      %1933 = vmax.xlane.f32.xlu0 %v1932
      %v1934 = vpop.xlane.xlu0 %1933
      %v1935 = vsel %vm1919, %v1828, -inf
      %1936 = vmax.xlane.f32.xlu0 %v1935
      %v1937 = vpop.xlane.xlu0 %1936
      %v1938 = vsel %vm1919, %v1829, -inf
      %1939 = vmax.xlane.f32.xlu0 %v1938
      %v1940 = vpop.xlane.xlu0 %1939
      %v1941 = vsel %vm1919, %v1830, -inf
      %1942 = vmax.xlane.f32.xlu0 %v1941
      %v1943 = vpop.xlane.xlu0 %1942
      %v1944 = vsel %vm1919, %v1831, -inf
      %1945 = vmax.xlane.f32.xlu0 %v1944
      %v1946 = vpop.xlane.xlu0 %1945
      %v1947 = vsel %vm1919, %v1832, -inf
      %1948 = vmax.xlane.f32.xlu0 %v1947
      %v1949 = vpop.xlane.xlu0 %1948
      %v1950 = vsel %vm1919, %v1833, -inf
      %1951 = vmax.xlane.f32.xlu0 %v1950
      %v1952 = vpop.xlane.xlu0 %1951
      %v1953 = vsel %vm1919, %v1834, -inf
      %1954 = vmax.xlane.f32.xlu0 %v1953
      %v1955 = vpop.xlane.xlu0 %1954
      %v1956 = vsel %vm1919, %v1835, -inf
      %1957 = vmax.xlane.f32.xlu0 %v1956
      %v1958 = vpop.xlane.xlu0 %1957
      %v1959 = vsel %vm1919, %v1836, -inf
      %1960 = vmax.xlane.f32.xlu0 %v1959
      %v1961 = vpop.xlane.xlu0 %1960
      %v1962 = vsel %vm1919, %v1837, -inf
      %1963 = vmax.xlane.f32.xlu0 %v1962
      %v1964 = vpop.xlane.xlu0 %1963
      %v1965 = vsel %vm1919, %v1838, -inf
      %1966 = vmax.xlane.f32.xlu0 %v1965
      %v1967 = vpop.xlane.xlu0 %1966
      %v1968 = vsel %vm1919, %v1839, -inf
      %1969 = vmax.xlane.f32.xlu0 %v1968
      %v1970 = vpop.xlane.xlu0 %1969
      %v1971 = vsel %vm1919, %v1840, -inf
      %1972 = vmax.xlane.f32.xlu0 %v1971
      %v1973 = vpop.xlane.xlu0 %1972
      %v1974 = vsel %vm1919, %v1841, -inf
      %1975 = vmax.xlane.f32.xlu0 %v1974
      %v1976 = vpop.xlane.xlu0 %1975
      %v1977 = vsel %vm1919, %v1842, -inf
      %1978 = vmax.xlane.f32.xlu0 %v1977
      %v1979 = vpop.xlane.xlu0 %1978
      %v1980 = vsel %vm1919, %v1843, -inf
      %1981 = vmax.xlane.f32.xlu0 %v1980
      %v1982 = vpop.xlane.xlu0 %1981
      %v1983 = vsel %vm1919, %v1844, -inf
      %1984 = vmax.xlane.f32.xlu0 %v1983
      %v1985 = vpop.xlane.xlu0 %1984
      %v1986 = vsel %vm1919, %v1845, -inf
      %1987 = vmax.xlane.f32.xlu0 %v1986
      %v1988 = vpop.xlane.xlu0 %1987
      %v1989 = vsel %vm1919, %v1846, -inf
      %1990 = vmax.xlane.f32.xlu0 %v1989
      %v1991 = vpop.xlane.xlu0 %1990
      %v1992 = vsel %vm1919, %v1847, -inf
      %1993 = vmax.xlane.f32.xlu0 %v1992
      %v1994 = vpop.xlane.xlu0 %1993
      %v1995 = vsel %vm1919, %v1848, -inf
      %1996 = vmax.xlane.f32.xlu0 %v1995
      %v1997 = vpop.xlane.xlu0 %1996
      %v1998 = vsel %vm1919, %v1849, -inf
      %1999 = vmax.xlane.f32.xlu0 %v1998
      %v2000 = vpop.xlane.xlu0 %1999
      %v2001 = vsel %vm1919, %v1850, -inf
      %2002 = vmax.xlane.f32.xlu0 %v2001
      %v2003 = vpop.xlane.xlu0 %2002
      %v2004 = vsel %vm1919, %v1851, -inf
      %2005 = vmax.xlane.f32.xlu0 %v2004
      %v2006 = vpop.xlane.xlu0 %2005
      %v2007 = vsel %vm1919, %v1852, -inf
      %2008 = vmax.xlane.f32.xlu0 %v2007
      %v2009 = vpop.xlane.xlu0 %2008
      %v2010 = vsel %vm1919, %v1853, -inf
      %2011 = vmax.xlane.f32.xlu0 %v2010
      %v2012 = vpop.xlane.xlu0 %2011
      %v2013 = vsel %vm1919, %v1854, -inf
      %2014 = vmax.xlane.f32.xlu0 %v2013
      %v2015 = vpop.xlane.xlu0 %2014
      %v2016 = vsel %vm1919, %v1855, -inf
      %2017 = vmax.xlane.f32.xlu0 %v2016
      %v2018 = vpop.xlane.xlu0 %2017
      %v2019 = vsel %vm1919, %v1856, -inf
      %2020 = vmax.xlane.f32.xlu0 %v2019
      %v2021 = vpop.xlane.xlu0 %2020
      %v2022 = vsel %vm1919, %v1857, -inf
      %2023 = vmax.xlane.f32.xlu0 %v2022
      %v2024 = vpop.xlane.xlu0 %2023
      %v2025 = vsel %vm1919, %v1858, -inf
      %2026 = vmax.xlane.f32.xlu0 %v2025
      %v2027 = vpop.xlane.xlu0 %2026
      %v2028 = vsel %vm1919, %v1859, -inf
      %2029 = vmax.xlane.f32.xlu0 %v2028
      %v2030 = vpop.xlane.xlu0 %2029
      %v2031 = vsel %vm1919, %v1860, -inf
      %2032 = vmax.xlane.f32.xlu0 %v2031
      %v2033 = vpop.xlane.xlu0 %2032
      %v2034 = vsel %vm1919, %v1861, -inf
      %2035 = vmax.xlane.f32.xlu0 %v2034
      %v2036 = vpop.xlane.xlu0 %2035
      %v2037 = vsel %vm1919, %v1862, -inf
      %2038 = vmax.xlane.f32.xlu0 %v2037
      %v2039 = vpop.xlane.xlu0 %2038
      %v2040 = vsel %vm1919, %v1863, -inf
      %2041 = vmax.xlane.f32.xlu0 %v2040
      %v2042 = vpop.xlane.xlu0 %2041
      %v2043 = vsel %vm1919, %v1864, -inf
      %2044 = vmax.xlane.f32.xlu0 %v2043
      %v2045 = vpop.xlane.xlu0 %2044
      %v2046 = vsel %vm1919, %v1865, -inf
      %2047 = vmax.xlane.f32.xlu0 %v2046
      %v2048 = vpop.xlane.xlu0 %2047
      %v2049 = vsel %vm1919, %v1866, -inf
      %2050 = vmax.xlane.f32.xlu0 %v2049
      %v2051 = vpop.xlane.xlu0 %2050
      %v2052 = vsel %vm1919, %v1867, -inf
      %2053 = vmax.xlane.f32.xlu0 %v2052
      %v2054 = vpop.xlane.xlu0 %2053
      %v2055 = vsel %vm1919, %v1868, -inf
      %2056 = vmax.xlane.f32.xlu0 %v2055
      %v2057 = vpop.xlane.xlu0 %2056
      %v2058 = vsel %vm1919, %v1869, -inf
      %2059 = vmax.xlane.f32.xlu0 %v2058
      %v2060 = vpop.xlane.xlu0 %2059
      %v2061 = vsel %vm1919, %v1870, -inf
      %2062 = vmax.xlane.f32.xlu0 %v2061
      %v2063 = vpop.xlane.xlu0 %2062
      %v2064 = vsel %vm1919, %v1871, -inf
      %2065 = vmax.xlane.f32.xlu0 %v2064
      %v2066 = vpop.xlane.xlu0 %2065
      %v2067 = vsel %vm1919, %v1872, -inf
      %2068 = vmax.xlane.f32.xlu0 %v2067
      %v2069 = vpop.xlane.xlu0 %2068
      %v2070 = vsel %vm1919, %v1873, -inf
      %2071 = vmax.xlane.f32.xlu0 %v2070
      %v2072 = vpop.xlane.xlu0 %2071
      %v2073 = vsel %vm1919, %v1874, -inf
      %2074 = vmax.xlane.f32.xlu0 %v2073
      %v2075 = vpop.xlane.xlu0 %2074
      %v2076 = vsel %vm1919, %v1875, -inf
      %2077 = vmax.xlane.f32.xlu0 %v2076
      %v2078 = vpop.xlane.xlu0 %2077
      %v2079 = vsel %vm1919, %v1876, -inf
      %2080 = vmax.xlane.f32.xlu0 %v2079
      %v2081 = vpop.xlane.xlu0 %2080
      %v2082 = vsel %vm1919, %v1877, -inf
      %2083 = vmax.xlane.f32.xlu0 %v2082
      %v2084 = vpop.xlane.xlu0 %2083
      %v2085 = vsel %vm1919, %v1878, -inf
      %2086 = vmax.xlane.f32.xlu0 %v2085
      %v2087 = vpop.xlane.xlu0 %2086
      %v2088 = vsel %vm1919, %v1879, -inf
      %2089 = vmax.xlane.f32.xlu0 %v2088
      %v2090 = vpop.xlane.xlu0 %2089
      %v2091 = vsel %vm1919, %v1880, -inf
      %2092 = vmax.xlane.f32.xlu0 %v2091
      %v2093 = vpop.xlane.xlu0 %2092
      %v2094 = vsel %vm1919, %v1881, -inf
      %2095 = vmax.xlane.f32.xlu0 %v2094
      %v2096 = vpop.xlane.xlu0 %2095
      %v2097 = vsel %vm1919, %v1882, -inf
      %2098 = vmax.xlane.f32.xlu0 %v2097
      %v2099 = vpop.xlane.xlu0 %2098
      %v2100 = vsel %vm1919, %v1883, -inf
      %2101 = vmax.xlane.f32.xlu0 %v2100
      %v2102 = vpop.xlane.xlu0 %2101
      %v2103 = vsel %vm1919, %v1884, -inf
      %2104 = vmax.xlane.f32.xlu0 %v2103
      %v2105 = vpop.xlane.xlu0 %2104
      %v2106 = vsel %vm1919, %v1885, -inf
      %2107 = vmax.xlane.f32.xlu0 %v2106
      %v2108 = vpop.xlane.xlu0 %2107
      %v2109 = vsel %vm1919, %v1886, -inf
      %2110 = vmax.xlane.f32.xlu0 %v2109
      %v2111 = vpop.xlane.xlu0 %2110
      %v2112 = vsel %vm1919, %v1887, -inf
      %2113 = vmax.xlane.f32.xlu0 %v2112
      %v2114 = vpop.xlane.xlu0 %2113
      %v2115 = vsel %vm1919, %v1888, -inf
      %2116 = vmax.xlane.f32.xlu0 %v2115
      %v2117 = vpop.xlane.xlu0 %2116
      %v2118 = vsel %vm1919, %v1889, -inf
      %2119 = vmax.xlane.f32.xlu0 %v2118
      %v2120 = vpop.xlane.xlu0 %2119
      %v2121 = vsel %vm1919, %v1890, -inf
      %2122 = vmax.xlane.f32.xlu0 %v2121
      %v2123 = vpop.xlane.xlu0 %2122
      %v2124 = vsel %vm1919, %v1891, -inf
      %2125 = vmax.xlane.f32.xlu0 %v2124
      %v2126 = vpop.xlane.xlu0 %2125
      %v2127 = vsel %vm1919, %v1892, -inf
      %2128 = vmax.xlane.f32.xlu0 %v2127
      %v2129 = vpop.xlane.xlu0 %2128
      %v2130 = vsel %vm1919, %v1893, -inf
      %2131 = vmax.xlane.f32.xlu0 %v2130
      %v2132 = vpop.xlane.xlu0 %2131
      %v2133 = vsel %vm1919, %v1894, -inf
      %2134 = vmax.xlane.f32.xlu0 %v2133
      %v2135 = vpop.xlane.xlu0 %2134
      %v2136 = vsel %vm1919, %v1895, -inf
      %2137 = vmax.xlane.f32.xlu0 %v2136
      %v2138 = vpop.xlane.xlu0 %2137
      %v2139 = vsel %vm1919, %v1896, -inf
      %2140 = vmax.xlane.f32.xlu0 %v2139
      %v2141 = vpop.xlane.xlu0 %2140
      %v2142 = vsel %vm1919, %v1897, -inf
      %2143 = vmax.xlane.f32.xlu0 %v2142
      %v2144 = vpop.xlane.xlu0 %2143
      %v2145 = vsel %vm1919, %v1898, -inf
      %2146 = vmax.xlane.f32.xlu0 %v2145
      %v2147 = vpop.xlane.xlu0 %2146
      %v2148 = vsel %vm1919, %v1899, -inf
      %2149 = vmax.xlane.f32.xlu0 %v2148
      %v2150 = vpop.xlane.xlu0 %2149
      %v2151 = vsel %vm1919, %v1900, -inf
      %2152 = vmax.xlane.f32.xlu0 %v2151
      %v2153 = vpop.xlane.xlu0 %2152
      %v2154 = vsel %vm1919, %v1901, -inf
      %2155 = vmax.xlane.f32.xlu0 %v2154
      %v2156 = vpop.xlane.xlu0 %2155
      %v2157 = vsel %vm1919, %v1902, -inf
      %2158 = vmax.xlane.f32.xlu0 %v2157
      %v2159 = vpop.xlane.xlu0 %2158
      %v2160 = vsel %vm1919, %v1903, -inf
      %2161 = vmax.xlane.f32.xlu0 %v2160
      %v2162 = vpop.xlane.xlu0 %2161
      %v2163 = vsel %vm1919, %v1904, -inf
      %2164 = vmax.xlane.f32.xlu0 %v2163
      %v2165 = vpop.xlane.xlu0 %2164
      %v2166 = vsel %vm1919, %v1905, -inf
      %2167 = vmax.xlane.f32.xlu0 %v2166
      %v2168 = vpop.xlane.xlu0 %2167
      %v2169 = vsel %vm1919, %v1906, -inf
      %2170 = vmax.xlane.f32.xlu0 %v2169
      %v2171 = vpop.xlane.xlu0 %2170
      %v2172 = vsel %vm1919, %v1907, -inf
      %2173 = vmax.xlane.f32.xlu0 %v2172
      %v2174 = vpop.xlane.xlu0 %2173
      %v2175 = vsel %vm1919, %v1908, -inf
      %2176 = vmax.xlane.f32.xlu0 %v2175
      %v2177 = vpop.xlane.xlu0 %2176
      %v2178 = vsel %vm1919, %v1909, -inf
      %2179 = vmax.xlane.f32.xlu0 %v2178
      %v2180 = vpop.xlane.xlu0 %2179
      %v2181 = vsel %vm1919, %v1910, -inf
      %2182 = vmax.xlane.f32.xlu0 %v2181
      %v2183 = vpop.xlane.xlu0 %2182
      %v2184 = vsel %vm1919, %v1911, -inf
      %2185 = vmax.xlane.f32.xlu0 %v2184
      %v2186 = vpop.xlane.xlu0 %2185
      %v2187 = vsel %vm1919, %v1912, -inf
      %2188 = vmax.xlane.f32.xlu0 %v2187
      %v2189 = vpop.xlane.xlu0 %2188
      %v2190 = vsel %vm1919, %v1913, -inf
      %2191 = vmax.xlane.f32.xlu0 %v2190
      %v2192 = vpop.xlane.xlu0 %2191
      %v2193 = vsel %vm1919, %v1914, -inf
      %2194 = vmax.xlane.f32.xlu0 %v2193
      %v2195 = vpop.xlane.xlu0 %2194
      %v2196 = vsel %vm1919, %v1915, -inf
      %2197 = vmax.xlane.f32.xlu0 %v2196
      %v2198 = vpop.xlane.xlu0 %2197
      %v2199 = vsel %vm1919, %v1916, -inf
      %2200 = vmax.xlane.f32.xlu0 %v2199
      %v2201 = vpop.xlane.xlu0 %2200
      %v2202 = vsel %vm1919, %v1917, -inf
      %2203 = vmax.xlane.f32.xlu0 %v2202
      %v2204 = vpop.xlane.xlu0 %2203
      %v2205 = vsel %vm1919, %v1918, -inf
      %2206 = vmax.xlane.f32.xlu0 %v2205
      %v2207 = vpop.xlane.xlu0 %2206
      %v2208 = vsub.f32 %v1823, %v1922
      %v2209 = vsub.f32 %v1824, %v1925
      %v2210 = vsub.f32 %v1825, %v1928
      %v2211 = vsub.f32 %v1826, %v1931
      %v2212 = vsub.f32 %v1827, %v1934
      %v2213 = vsub.f32 %v1828, %v1937
      %v2214 = vsub.f32 %v1829, %v1940
      %v2215 = vsub.f32 %v1830, %v1943
      %v2216 = vsub.f32 %v1831, %v1946
      %v2217 = vsub.f32 %v1832, %v1949
      %v2218 = vsub.f32 %v1833, %v1952
      %v2219 = vsub.f32 %v1834, %v1955
      %v2220 = vsub.f32 %v1835, %v1958
      %v2221 = vsub.f32 %v1836, %v1961
      %v2222 = vsub.f32 %v1837, %v1964
      %v2223 = vsub.f32 %v1838, %v1967
      %v2224 = vsub.f32 %v1839, %v1970
      %v2225 = vsub.f32 %v1840, %v1973
      %v2226 = vsub.f32 %v1841, %v1976
      %v2227 = vsub.f32 %v1842, %v1979
      %v2228 = vsub.f32 %v1843, %v1982
      %v2229 = vsub.f32 %v1844, %v1985
      %v2230 = vsub.f32 %v1845, %v1988
      %v2231 = vsub.f32 %v1846, %v1991
      %v2232 = vsub.f32 %v1847, %v1994
      %v2233 = vsub.f32 %v1848, %v1997
      %v2234 = vsub.f32 %v1849, %v2000
      %v2235 = vsub.f32 %v1850, %v2003
      %v2236 = vsub.f32 %v1851, %v2006
      %v2237 = vsub.f32 %v1852, %v2009
      %v2238 = vsub.f32 %v1853, %v2012
      %v2239 = vsub.f32 %v1854, %v2015
      %v2240 = vsub.f32 %v1855, %v2018
      %v2241 = vsub.f32 %v1856, %v2021
      %v2242 = vsub.f32 %v1857, %v2024
      %v2243 = vsub.f32 %v1858, %v2027
      %v2244 = vsub.f32 %v1859, %v2030
      %v2245 = vsub.f32 %v1860, %v2033
      %v2246 = vsub.f32 %v1861, %v2036
      %v2247 = vsub.f32 %v1862, %v2039
      %v2248 = vsub.f32 %v1863, %v2042
      %v2249 = vsub.f32 %v1864, %v2045
      %v2250 = vsub.f32 %v1865, %v2048
      %v2251 = vsub.f32 %v1866, %v2051
      %v2252 = vsub.f32 %v1867, %v2054
      %v2253 = vsub.f32 %v1868, %v2057
      %v2254 = vsub.f32 %v1869, %v2060
      %v2255 = vsub.f32 %v1870, %v2063
      %v2256 = vsub.f32 %v1871, %v2066
      %v2257 = vsub.f32 %v1872, %v2069
      %v2258 = vsub.f32 %v1873, %v2072
      %v2259 = vsub.f32 %v1874, %v2075
      %v2260 = vsub.f32 %v1875, %v2078
      %v2261 = vsub.f32 %v1876, %v2081
      %v2262 = vsub.f32 %v1877, %v2084
      %v2263 = vsub.f32 %v1878, %v2087
      %v2264 = vsub.f32 %v1879, %v2090
      %v2265 = vsub.f32 %v1880, %v2093
      %v2266 = vsub.f32 %v1881, %v2096
      %v2267 = vsub.f32 %v1882, %v2099
      %v2268 = vsub.f32 %v1883, %v2102
      %v2269 = vsub.f32 %v1884, %v2105
      %v2270 = vsub.f32 %v1885, %v2108
      %v2271 = vsub.f32 %v1886, %v2111
      %v2272 = vsub.f32 %v1887, %v2114
      %v2273 = vsub.f32 %v1888, %v2117
      %v2274 = vsub.f32 %v1889, %v2120
      %v2275 = vsub.f32 %v1890, %v2123
      %v2276 = vsub.f32 %v1891, %v2126
      %v2277 = vsub.f32 %v1892, %v2129
      %v2278 = vsub.f32 %v1893, %v2132
      %v2279 = vsub.f32 %v1894, %v2135
      %v2280 = vsub.f32 %v1895, %v2138
      %v2281 = vsub.f32 %v1896, %v2141
      %v2282 = vsub.f32 %v1897, %v2144
      %v2283 = vsub.f32 %v1898, %v2147
      %v2284 = vsub.f32 %v1899, %v2150
      %v2285 = vsub.f32 %v1900, %v2153
      %v2286 = vsub.f32 %v1901, %v2156
      %v2287 = vsub.f32 %v1902, %v2159
      %v2288 = vsub.f32 %v1903, %v2162
      %v2289 = vsub.f32 %v1904, %v2165
      %v2290 = vsub.f32 %v1905, %v2168
      %v2291 = vsub.f32 %v1906, %v2171
      %v2292 = vsub.f32 %v1907, %v2174
      %v2293 = vsub.f32 %v1908, %v2177
      %v2294 = vsub.f32 %v1909, %v2180
      %v2295 = vsub.f32 %v1910, %v2183
      %v2296 = vsub.f32 %v1911, %v2186
      %v2297 = vsub.f32 %v1912, %v2189
      %v2298 = vsub.f32 %v1913, %v2192
      %v2299 = vsub.f32 %v1914, %v2195
      %v2300 = vsub.f32 %v1915, %v2198
      %v2301 = vsub.f32 %v1916, %v2201
      %v2302 = vsub.f32 %v1917, %v2204
      %v2303 = vsub.f32 %v1918, %v2207
      %v2304 = vmul.f32 %v2208, 1.442695
      %v2305 = vpow.pop %v2304
      %v2306 = vmul.f32 %v2209, 1.442695
      %v2307 = vpow.pop %v2306
      %v2308 = vmul.f32 %v2210, 1.442695
      %v2309 = vpow.pop %v2308
      %v2310 = vmul.f32 %v2211, 1.442695
      %v2311 = vpow.pop %v2310
      %v2312 = vmul.f32 %v2212, 1.442695
      %v2313 = vpow.pop %v2312
      %v2314 = vmul.f32 %v2213, 1.442695
      %v2315 = vpow.pop %v2314
      %v2316 = vmul.f32 %v2214, 1.442695
      %v2317 = vpow.pop %v2316
      %v2318 = vmul.f32 %v2215, 1.442695
      %v2319 = vpow.pop %v2318
      %v2320 = vmul.f32 %v2216, 1.442695
      %v2321 = vpow.pop %v2320
      %v2322 = vmul.f32 %v2217, 1.442695
      %v2323 = vpow.pop %v2322
      %v2324 = vmul.f32 %v2218, 1.442695
      %v2325 = vpow.pop %v2324
      %v2326 = vmul.f32 %v2219, 1.442695
      %v2327 = vpow.pop %v2326
      %v2328 = vmul.f32 %v2220, 1.442695
      %v2329 = vpow.pop %v2328
      %v2330 = vmul.f32 %v2221, 1.442695
      %v2331 = vpow.pop %v2330
      %v2332 = vmul.f32 %v2222, 1.442695
      %v2333 = vpow.pop %v2332
      %v2334 = vmul.f32 %v2223, 1.442695
      %v2335 = vpow.pop %v2334
      %v2336 = vmul.f32 %v2224, 1.442695
      %v2337 = vpow.pop %v2336
      %v2338 = vmul.f32 %v2225, 1.442695
      %v2339 = vpow.pop %v2338
      %v2340 = vmul.f32 %v2226, 1.442695
      %v2341 = vpow.pop %v2340
      %v2342 = vmul.f32 %v2227, 1.442695
      %v2343 = vpow.pop %v2342
      %v2344 = vmul.f32 %v2228, 1.442695
      %v2345 = vpow.pop %v2344
      %v2346 = vmul.f32 %v2229, 1.442695
      %v2347 = vpow.pop %v2346
      %v2348 = vmul.f32 %v2230, 1.442695
      %v2349 = vpow.pop %v2348
      %v2350 = vmul.f32 %v2231, 1.442695
      %v2351 = vpow.pop %v2350
      %v2352 = vmul.f32 %v2232, 1.442695
      %v2353 = vpow.pop %v2352
      %v2354 = vmul.f32 %v2233, 1.442695
      %v2355 = vpow.pop %v2354
      %v2356 = vmul.f32 %v2234, 1.442695
      %v2357 = vpow.pop %v2356
      %v2358 = vmul.f32 %v2235, 1.442695
      %v2359 = vpow.pop %v2358
      %v2360 = vmul.f32 %v2236, 1.442695
      %v2361 = vpow.pop %v2360
      %v2362 = vmul.f32 %v2237, 1.442695
      %v2363 = vpow.pop %v2362
      %v2364 = vmul.f32 %v2238, 1.442695
      %v2365 = vpow.pop %v2364
      %v2366 = vmul.f32 %v2239, 1.442695
      %v2367 = vpow.pop %v2366
      %v2368 = vmul.f32 %v2240, 1.442695
      %v2369 = vpow.pop %v2368
      %v2370 = vmul.f32 %v2241, 1.442695
      %v2371 = vpow.pop %v2370
      %v2372 = vmul.f32 %v2242, 1.442695
      %v2373 = vpow.pop %v2372
      %v2374 = vmul.f32 %v2243, 1.442695
      %v2375 = vpow.pop %v2374
      %v2376 = vmul.f32 %v2244, 1.442695
      %v2377 = vpow.pop %v2376
      %v2378 = vmul.f32 %v2245, 1.442695
      %v2379 = vpow.pop %v2378
      %v2380 = vmul.f32 %v2246, 1.442695
      %v2381 = vpow.pop %v2380
      %v2382 = vmul.f32 %v2247, 1.442695
      %v2383 = vpow.pop %v2382
      %v2384 = vmul.f32 %v2248, 1.442695
      %v2385 = vpow.pop %v2384
      %v2386 = vmul.f32 %v2249, 1.442695
      %v2387 = vpow.pop %v2386
      %v2388 = vmul.f32 %v2250, 1.442695
      %v2389 = vpow.pop %v2388
      %v2390 = vmul.f32 %v2251, 1.442695
      %v2391 = vpow.pop %v2390
      %v2392 = vmul.f32 %v2252, 1.442695
      %v2393 = vpow.pop %v2392
      %v2394 = vmul.f32 %v2253, 1.442695
      %v2395 = vpow.pop %v2394
      %v2396 = vmul.f32 %v2254, 1.442695
      %v2397 = vpow.pop %v2396
      %v2398 = vmul.f32 %v2255, 1.442695
      %v2399 = vpow.pop %v2398
      %v2400 = vmul.f32 %v2256, 1.442695
      %v2401 = vpow.pop %v2400
      %v2402 = vmul.f32 %v2257, 1.442695
      %v2403 = vpow.pop %v2402
      %v2404 = vmul.f32 %v2258, 1.442695
      %v2405 = vpow.pop %v2404
      %v2406 = vmul.f32 %v2259, 1.442695
      %v2407 = vpow.pop %v2406
      %v2408 = vmul.f32 %v2260, 1.442695
      %v2409 = vpow.pop %v2408
      %v2410 = vmul.f32 %v2261, 1.442695
      %v2411 = vpow.pop %v2410
      %v2412 = vmul.f32 %v2262, 1.442695
      %v2413 = vpow.pop %v2412
      %v2414 = vmul.f32 %v2263, 1.442695
      %v2415 = vpow.pop %v2414
      %v2416 = vmul.f32 %v2264, 1.442695
      %v2417 = vpow.pop %v2416
      %v2418 = vmul.f32 %v2265, 1.442695
      %v2419 = vpow.pop %v2418
      %v2420 = vmul.f32 %v2266, 1.442695
      %v2421 = vpow.pop %v2420
      %v2422 = vmul.f32 %v2267, 1.442695
      %v2423 = vpow.pop %v2422
      %v2424 = vmul.f32 %v2268, 1.442695
      %v2425 = vpow.pop %v2424
      %v2426 = vmul.f32 %v2269, 1.442695
      %v2427 = vpow.pop %v2426
      %v2428 = vmul.f32 %v2270, 1.442695
      %v2429 = vpow.pop %v2428
      %v2430 = vmul.f32 %v2271, 1.442695
      %v2431 = vpow.pop %v2430
      %v2432 = vmul.f32 %v2272, 1.442695
      %v2433 = vpow.pop %v2432
      %v2434 = vmul.f32 %v2273, 1.442695
      %v2435 = vpow.pop %v2434
      %v2436 = vmul.f32 %v2274, 1.442695
      %v2437 = vpow.pop %v2436
      %v2438 = vmul.f32 %v2275, 1.442695
      %v2439 = vpow.pop %v2438
      %v2440 = vmul.f32 %v2276, 1.442695
      %v2441 = vpow.pop %v2440
      %v2442 = vmul.f32 %v2277, 1.442695
      %v2443 = vpow.pop %v2442
      %v2444 = vmul.f32 %v2278, 1.442695
      %v2445 = vpow.pop %v2444
      %v2446 = vmul.f32 %v2279, 1.442695
      %v2447 = vpow.pop %v2446
      %v2448 = vmul.f32 %v2280, 1.442695
      %v2449 = vpow.pop %v2448
      %v2450 = vmul.f32 %v2281, 1.442695
      %v2451 = vpow.pop %v2450
      %v2452 = vmul.f32 %v2282, 1.442695
      %v2453 = vpow.pop %v2452
      %v2454 = vmul.f32 %v2283, 1.442695
      %v2455 = vpow.pop %v2454
      %v2456 = vmul.f32 %v2284, 1.442695
      %v2457 = vpow.pop %v2456
      %v2458 = vmul.f32 %v2285, 1.442695
      %v2459 = vpow.pop %v2458
      %v2460 = vmul.f32 %v2286, 1.442695
      %v2461 = vpow.pop %v2460
      %v2462 = vmul.f32 %v2287, 1.442695
      %v2463 = vpow.pop %v2462
      %v2464 = vmul.f32 %v2288, 1.442695
      %v2465 = vpow.pop %v2464
      %v2466 = vmul.f32 %v2289, 1.442695
      %v2467 = vpow.pop %v2466
      %v2468 = vmul.f32 %v2290, 1.442695
      %v2469 = vpow.pop %v2468
      %v2470 = vmul.f32 %v2291, 1.442695
      %v2471 = vpow.pop %v2470
      %v2472 = vmul.f32 %v2292, 1.442695
      %v2473 = vpow.pop %v2472
      %v2474 = vmul.f32 %v2293, 1.442695
      %v2475 = vpow.pop %v2474
      %v2476 = vmul.f32 %v2294, 1.442695
      %v2477 = vpow.pop %v2476
      %v2478 = vmul.f32 %v2295, 1.442695
      %v2479 = vpow.pop %v2478
      %v2480 = vmul.f32 %v2296, 1.442695
      %v2481 = vpow.pop %v2480
      %v2482 = vmul.f32 %v2297, 1.442695
      %v2483 = vpow.pop %v2482
      %v2484 = vmul.f32 %v2298, 1.442695
      %v2485 = vpow.pop %v2484
      %v2486 = vmul.f32 %v2299, 1.442695
      %v2487 = vpow.pop %v2486
      %v2488 = vmul.f32 %v2300, 1.442695
      %v2489 = vpow.pop %v2488
      %v2490 = vmul.f32 %v2301, 1.442695
      %v2491 = vpow.pop %v2490
      %v2492 = vmul.f32 %v2302, 1.442695
      %v2493 = vpow.pop %v2492
      %v2494 = vmul.f32 %v2303, 1.442695
      %v2495 = vpow.pop %v2494
      %v2496 = vsel %vm1919, %v2305, 0.0
      %2497 = vadd.xlane.f32.xlu0 %v2496
      %v2498 = vpop.xlane.xlu0 %2497
      %v2499 = vsel %vm1919, %v2307, 0.0
      %2500 = vadd.xlane.f32.xlu0 %v2499
      %v2501 = vpop.xlane.xlu0 %2500
      %v2502 = vsel %vm1919, %v2309, 0.0
      %2503 = vadd.xlane.f32.xlu0 %v2502
      %v2504 = vpop.xlane.xlu0 %2503
      %v2505 = vsel %vm1919, %v2311, 0.0
      %2506 = vadd.xlane.f32.xlu0 %v2505
      %v2507 = vpop.xlane.xlu0 %2506
      %v2508 = vsel %vm1919, %v2313, 0.0
      %2509 = vadd.xlane.f32.xlu0 %v2508
      %v2510 = vpop.xlane.xlu0 %2509
      %v2511 = vsel %vm1919, %v2315, 0.0
      %2512 = vadd.xlane.f32.xlu0 %v2511
      %v2513 = vpop.xlane.xlu0 %2512
      %v2514 = vsel %vm1919, %v2317, 0.0
      %2515 = vadd.xlane.f32.xlu0 %v2514
      %v2516 = vpop.xlane.xlu0 %2515
      %v2517 = vsel %vm1919, %v2319, 0.0
      %2518 = vadd.xlane.f32.xlu0 %v2517
      %v2519 = vpop.xlane.xlu0 %2518
      %v2520 = vsel %vm1919, %v2321, 0.0
      %2521 = vadd.xlane.f32.xlu0 %v2520
      %v2522 = vpop.xlane.xlu0 %2521
      %v2523 = vsel %vm1919, %v2323, 0.0
      %2524 = vadd.xlane.f32.xlu0 %v2523
      %v2525 = vpop.xlane.xlu0 %2524
      %v2526 = vsel %vm1919, %v2325, 0.0
      %2527 = vadd.xlane.f32.xlu0 %v2526
      %v2528 = vpop.xlane.xlu0 %2527
      %v2529 = vsel %vm1919, %v2327, 0.0
      %2530 = vadd.xlane.f32.xlu0 %v2529
      %v2531 = vpop.xlane.xlu0 %2530
      %v2532 = vsel %vm1919, %v2329, 0.0
      %2533 = vadd.xlane.f32.xlu0 %v2532
      %v2534 = vpop.xlane.xlu0 %2533
      %v2535 = vsel %vm1919, %v2331, 0.0
      %2536 = vadd.xlane.f32.xlu0 %v2535
      %v2537 = vpop.xlane.xlu0 %2536
      %v2538 = vsel %vm1919, %v2333, 0.0
      %2539 = vadd.xlane.f32.xlu0 %v2538
      %v2540 = vpop.xlane.xlu0 %2539
      %v2541 = vsel %vm1919, %v2335, 0.0
      %2542 = vadd.xlane.f32.xlu0 %v2541
      %v2543 = vpop.xlane.xlu0 %2542
      %v2544 = vsel %vm1919, %v2337, 0.0
      %2545 = vadd.xlane.f32.xlu0 %v2544
      %v2546 = vpop.xlane.xlu0 %2545
      %v2547 = vsel %vm1919, %v2339, 0.0
      %2548 = vadd.xlane.f32.xlu0 %v2547
      %v2549 = vpop.xlane.xlu0 %2548
      %v2550 = vsel %vm1919, %v2341, 0.0
      %2551 = vadd.xlane.f32.xlu0 %v2550
      %v2552 = vpop.xlane.xlu0 %2551
      %v2553 = vsel %vm1919, %v2343, 0.0
      %2554 = vadd.xlane.f32.xlu0 %v2553
      %v2555 = vpop.xlane.xlu0 %2554
      %v2556 = vsel %vm1919, %v2345, 0.0
      %2557 = vadd.xlane.f32.xlu0 %v2556
      %v2558 = vpop.xlane.xlu0 %2557
      %v2559 = vsel %vm1919, %v2347, 0.0
      %2560 = vadd.xlane.f32.xlu0 %v2559
      %v2561 = vpop.xlane.xlu0 %2560
      %v2562 = vsel %vm1919, %v2349, 0.0
      %2563 = vadd.xlane.f32.xlu0 %v2562
      %v2564 = vpop.xlane.xlu0 %2563
      %v2565 = vsel %vm1919, %v2351, 0.0
      %2566 = vadd.xlane.f32.xlu0 %v2565
      %v2567 = vpop.xlane.xlu0 %2566
      %v2568 = vsel %vm1919, %v2353, 0.0
      %2569 = vadd.xlane.f32.xlu0 %v2568
      %v2570 = vpop.xlane.xlu0 %2569
      %v2571 = vsel %vm1919, %v2355, 0.0
      %2572 = vadd.xlane.f32.xlu0 %v2571
      %v2573 = vpop.xlane.xlu0 %2572
      %v2574 = vsel %vm1919, %v2357, 0.0
      %2575 = vadd.xlane.f32.xlu0 %v2574
      %v2576 = vpop.xlane.xlu0 %2575
      %v2577 = vsel %vm1919, %v2359, 0.0
      %2578 = vadd.xlane.f32.xlu0 %v2577
      %v2579 = vpop.xlane.xlu0 %2578
      %v2580 = vsel %vm1919, %v2361, 0.0
      %2581 = vadd.xlane.f32.xlu0 %v2580
      %v2582 = vpop.xlane.xlu0 %2581
      %v2583 = vsel %vm1919, %v2363, 0.0
      %2584 = vadd.xlane.f32.xlu0 %v2583
      %v2585 = vpop.xlane.xlu0 %2584
      %v2586 = vsel %vm1919, %v2365, 0.0
      %2587 = vadd.xlane.f32.xlu0 %v2586
      %v2588 = vpop.xlane.xlu0 %2587
      %v2589 = vsel %vm1919, %v2367, 0.0
      %2590 = vadd.xlane.f32.xlu0 %v2589
      %v2591 = vpop.xlane.xlu0 %2590
      %v2592 = vsel %vm1919, %v2369, 0.0
      %2593 = vadd.xlane.f32.xlu0 %v2592
      %v2594 = vpop.xlane.xlu0 %2593
      %v2595 = vsel %vm1919, %v2371, 0.0
      %2596 = vadd.xlane.f32.xlu0 %v2595
      %v2597 = vpop.xlane.xlu0 %2596
      %v2598 = vsel %vm1919, %v2373, 0.0
      %2599 = vadd.xlane.f32.xlu0 %v2598
      %v2600 = vpop.xlane.xlu0 %2599
      %v2601 = vsel %vm1919, %v2375, 0.0
      %2602 = vadd.xlane.f32.xlu0 %v2601
      %v2603 = vpop.xlane.xlu0 %2602
      %v2604 = vsel %vm1919, %v2377, 0.0
      %2605 = vadd.xlane.f32.xlu0 %v2604
      %v2606 = vpop.xlane.xlu0 %2605
      %v2607 = vsel %vm1919, %v2379, 0.0
      %2608 = vadd.xlane.f32.xlu0 %v2607
      %v2609 = vpop.xlane.xlu0 %2608
      %v2610 = vsel %vm1919, %v2381, 0.0
      %2611 = vadd.xlane.f32.xlu0 %v2610
      %v2612 = vpop.xlane.xlu0 %2611
      %v2613 = vsel %vm1919, %v2383, 0.0
      %2614 = vadd.xlane.f32.xlu0 %v2613
      %v2615 = vpop.xlane.xlu0 %2614
      %v2616 = vsel %vm1919, %v2385, 0.0
      %2617 = vadd.xlane.f32.xlu0 %v2616
      %v2618 = vpop.xlane.xlu0 %2617
      %v2619 = vsel %vm1919, %v2387, 0.0
      %2620 = vadd.xlane.f32.xlu0 %v2619
      %v2621 = vpop.xlane.xlu0 %2620
      %v2622 = vsel %vm1919, %v2389, 0.0
      %2623 = vadd.xlane.f32.xlu0 %v2622
      %v2624 = vpop.xlane.xlu0 %2623
      %v2625 = vsel %vm1919, %v2391, 0.0
      %2626 = vadd.xlane.f32.xlu0 %v2625
      %v2627 = vpop.xlane.xlu0 %2626
      %v2628 = vsel %vm1919, %v2393, 0.0
      %2629 = vadd.xlane.f32.xlu0 %v2628
      %v2630 = vpop.xlane.xlu0 %2629
      %v2631 = vsel %vm1919, %v2395, 0.0
      %2632 = vadd.xlane.f32.xlu0 %v2631
      %v2633 = vpop.xlane.xlu0 %2632
      %v2634 = vsel %vm1919, %v2397, 0.0
      %2635 = vadd.xlane.f32.xlu0 %v2634
      %v2636 = vpop.xlane.xlu0 %2635
      %v2637 = vsel %vm1919, %v2399, 0.0
      %2638 = vadd.xlane.f32.xlu0 %v2637
      %v2639 = vpop.xlane.xlu0 %2638
      %v2640 = vsel %vm1919, %v2401, 0.0
      %2641 = vadd.xlane.f32.xlu0 %v2640
      %v2642 = vpop.xlane.xlu0 %2641
      %v2643 = vsel %vm1919, %v2403, 0.0
      %2644 = vadd.xlane.f32.xlu0 %v2643
      %v2645 = vpop.xlane.xlu0 %2644
      %v2646 = vsel %vm1919, %v2405, 0.0
      %2647 = vadd.xlane.f32.xlu0 %v2646
      %v2648 = vpop.xlane.xlu0 %2647
      %v2649 = vsel %vm1919, %v2407, 0.0
      %2650 = vadd.xlane.f32.xlu0 %v2649
      %v2651 = vpop.xlane.xlu0 %2650
      %v2652 = vsel %vm1919, %v2409, 0.0
      %2653 = vadd.xlane.f32.xlu0 %v2652
      %v2654 = vpop.xlane.xlu0 %2653
      %v2655 = vsel %vm1919, %v2411, 0.0
      %2656 = vadd.xlane.f32.xlu0 %v2655
      %v2657 = vpop.xlane.xlu0 %2656
      %v2658 = vsel %vm1919, %v2413, 0.0
      %2659 = vadd.xlane.f32.xlu0 %v2658
      %v2660 = vpop.xlane.xlu0 %2659
      %v2661 = vsel %vm1919, %v2415, 0.0
      %2662 = vadd.xlane.f32.xlu0 %v2661
      %v2663 = vpop.xlane.xlu0 %2662
      %v2664 = vsel %vm1919, %v2417, 0.0
      %2665 = vadd.xlane.f32.xlu0 %v2664
      %v2666 = vpop.xlane.xlu0 %2665
      %v2667 = vsel %vm1919, %v2419, 0.0
      %2668 = vadd.xlane.f32.xlu0 %v2667
      %v2669 = vpop.xlane.xlu0 %2668
      %v2670 = vsel %vm1919, %v2421, 0.0
      %2671 = vadd.xlane.f32.xlu0 %v2670
      %v2672 = vpop.xlane.xlu0 %2671
      %v2673 = vsel %vm1919, %v2423, 0.0
      %2674 = vadd.xlane.f32.xlu0 %v2673
      %v2675 = vpop.xlane.xlu0 %2674
      %v2676 = vsel %vm1919, %v2425, 0.0
      %2677 = vadd.xlane.f32.xlu0 %v2676
      %v2678 = vpop.xlane.xlu0 %2677
      %v2679 = vsel %vm1919, %v2427, 0.0
      %2680 = vadd.xlane.f32.xlu0 %v2679
      %v2681 = vpop.xlane.xlu0 %2680
      %v2682 = vsel %vm1919, %v2429, 0.0
      %2683 = vadd.xlane.f32.xlu0 %v2682
      %v2684 = vpop.xlane.xlu0 %2683
      %v2685 = vsel %vm1919, %v2431, 0.0
      %2686 = vadd.xlane.f32.xlu0 %v2685
      %v2687 = vpop.xlane.xlu0 %2686
      %v2688 = vsel %vm1919, %v2433, 0.0
      %2689 = vadd.xlane.f32.xlu0 %v2688
      %v2690 = vpop.xlane.xlu0 %2689
      %v2691 = vsel %vm1919, %v2435, 0.0
      %2692 = vadd.xlane.f32.xlu0 %v2691
      %v2693 = vpop.xlane.xlu0 %2692
      %v2694 = vsel %vm1919, %v2437, 0.0
      %2695 = vadd.xlane.f32.xlu0 %v2694
      %v2696 = vpop.xlane.xlu0 %2695
      %v2697 = vsel %vm1919, %v2439, 0.0
      %2698 = vadd.xlane.f32.xlu0 %v2697
      %v2699 = vpop.xlane.xlu0 %2698
      %v2700 = vsel %vm1919, %v2441, 0.0
      %2701 = vadd.xlane.f32.xlu0 %v2700
      %v2702 = vpop.xlane.xlu0 %2701
      %v2703 = vsel %vm1919, %v2443, 0.0
      %2704 = vadd.xlane.f32.xlu0 %v2703
      %v2705 = vpop.xlane.xlu0 %2704
      %v2706 = vsel %vm1919, %v2445, 0.0
      %2707 = vadd.xlane.f32.xlu0 %v2706
      %v2708 = vpop.xlane.xlu0 %2707
      %v2709 = vsel %vm1919, %v2447, 0.0
      %2710 = vadd.xlane.f32.xlu0 %v2709
      %v2711 = vpop.xlane.xlu0 %2710
      %v2712 = vsel %vm1919, %v2449, 0.0
      %2713 = vadd.xlane.f32.xlu0 %v2712
      %v2714 = vpop.xlane.xlu0 %2713
      %v2715 = vsel %vm1919, %v2451, 0.0
      %2716 = vadd.xlane.f32.xlu0 %v2715
      %v2717 = vpop.xlane.xlu0 %2716
      %v2718 = vsel %vm1919, %v2453, 0.0
      %2719 = vadd.xlane.f32.xlu0 %v2718
      %v2720 = vpop.xlane.xlu0 %2719
      %v2721 = vsel %vm1919, %v2455, 0.0
      %2722 = vadd.xlane.f32.xlu0 %v2721
      %v2723 = vpop.xlane.xlu0 %2722
      %v2724 = vsel %vm1919, %v2457, 0.0
      %2725 = vadd.xlane.f32.xlu0 %v2724
      %v2726 = vpop.xlane.xlu0 %2725
      %v2727 = vsel %vm1919, %v2459, 0.0
      %2728 = vadd.xlane.f32.xlu0 %v2727
      %v2729 = vpop.xlane.xlu0 %2728
      %v2730 = vsel %vm1919, %v2461, 0.0
      %2731 = vadd.xlane.f32.xlu0 %v2730
      %v2732 = vpop.xlane.xlu0 %2731
      %v2733 = vsel %vm1919, %v2463, 0.0
      %2734 = vadd.xlane.f32.xlu0 %v2733
      %v2735 = vpop.xlane.xlu0 %2734
      %v2736 = vsel %vm1919, %v2465, 0.0
      %2737 = vadd.xlane.f32.xlu0 %v2736
      %v2738 = vpop.xlane.xlu0 %2737
      %v2739 = vsel %vm1919, %v2467, 0.0
      %2740 = vadd.xlane.f32.xlu0 %v2739
      %v2741 = vpop.xlane.xlu0 %2740
      %v2742 = vsel %vm1919, %v2469, 0.0
      %2743 = vadd.xlane.f32.xlu0 %v2742
      %v2744 = vpop.xlane.xlu0 %2743
      %v2745 = vsel %vm1919, %v2471, 0.0
      %2746 = vadd.xlane.f32.xlu0 %v2745
      %v2747 = vpop.xlane.xlu0 %2746
      %v2748 = vsel %vm1919, %v2473, 0.0
      %2749 = vadd.xlane.f32.xlu0 %v2748
      %v2750 = vpop.xlane.xlu0 %2749
      %v2751 = vsel %vm1919, %v2475, 0.0
      %2752 = vadd.xlane.f32.xlu0 %v2751
      %v2753 = vpop.xlane.xlu0 %2752
      %v2754 = vsel %vm1919, %v2477, 0.0
      %2755 = vadd.xlane.f32.xlu0 %v2754
      %v2756 = vpop.xlane.xlu0 %2755
      %v2757 = vsel %vm1919, %v2479, 0.0
      %2758 = vadd.xlane.f32.xlu0 %v2757
      %v2759 = vpop.xlane.xlu0 %2758
      %v2760 = vsel %vm1919, %v2481, 0.0
      %2761 = vadd.xlane.f32.xlu0 %v2760
      %v2762 = vpop.xlane.xlu0 %2761
      %v2763 = vsel %vm1919, %v2483, 0.0
      %2764 = vadd.xlane.f32.xlu0 %v2763
      %v2765 = vpop.xlane.xlu0 %2764
      %v2766 = vsel %vm1919, %v2485, 0.0
      %2767 = vadd.xlane.f32.xlu0 %v2766
      %v2768 = vpop.xlane.xlu0 %2767
      %v2769 = vsel %vm1919, %v2487, 0.0
      %2770 = vadd.xlane.f32.xlu0 %v2769
      %v2771 = vpop.xlane.xlu0 %2770
      %v2772 = vsel %vm1919, %v2489, 0.0
      %2773 = vadd.xlane.f32.xlu0 %v2772
      %v2774 = vpop.xlane.xlu0 %2773
      %v2775 = vsel %vm1919, %v2491, 0.0
      %2776 = vadd.xlane.f32.xlu0 %v2775
      %v2777 = vpop.xlane.xlu0 %2776
      %v2778 = vsel %vm1919, %v2493, 0.0
      %2779 = vadd.xlane.f32.xlu0 %v2778
      %v2780 = vpop.xlane.xlu0 %2779
      %v2781 = vsel %vm1919, %v2495, 0.0
      %2782 = vadd.xlane.f32.xlu0 %v2781
      %v2783 = vpop.xlane.xlu0 %2782
      %v2784 = vrcp.pop %v2498
      %v2785 = vrcp.pop %v2501
      %v2786 = vrcp.pop %v2504
      %v2787 = vrcp.pop %v2507
      %v2788 = vrcp.pop %v2510
      %v2789 = vrcp.pop %v2513
      %v2790 = vrcp.pop %v2516
      %v2791 = vrcp.pop %v2519
      %v2792 = vrcp.pop %v2522
      %v2793 = vrcp.pop %v2525
      %v2794 = vrcp.pop %v2528
      %v2795 = vrcp.pop %v2531
      %v2796 = vrcp.pop %v2534
      %v2797 = vrcp.pop %v2537
      %v2798 = vrcp.pop %v2540
      %v2799 = vrcp.pop %v2543
      %v2800 = vrcp.pop %v2546
      %v2801 = vrcp.pop %v2549
      %v2802 = vrcp.pop %v2552
      %v2803 = vrcp.pop %v2555
      %v2804 = vrcp.pop %v2558
      %v2805 = vrcp.pop %v2561
      %v2806 = vrcp.pop %v2564
      %v2807 = vrcp.pop %v2567
      %v2808 = vrcp.pop %v2570
      %v2809 = vrcp.pop %v2573
      %v2810 = vrcp.pop %v2576
      %v2811 = vrcp.pop %v2579
      %v2812 = vrcp.pop %v2582
      %v2813 = vrcp.pop %v2585
      %v2814 = vrcp.pop %v2588
      %v2815 = vrcp.pop %v2591
      %v2816 = vrcp.pop %v2594
      %v2817 = vrcp.pop %v2597
      %v2818 = vrcp.pop %v2600
      %v2819 = vrcp.pop %v2603
      %v2820 = vrcp.pop %v2606
      %v2821 = vrcp.pop %v2609
      %v2822 = vrcp.pop %v2612
      %v2823 = vrcp.pop %v2615
      %v2824 = vrcp.pop %v2618
      %v2825 = vrcp.pop %v2621
      %v2826 = vrcp.pop %v2624
      %v2827 = vrcp.pop %v2627
      %v2828 = vrcp.pop %v2630
      %v2829 = vrcp.pop %v2633
      %v2830 = vrcp.pop %v2636
      %v2831 = vrcp.pop %v2639
      %v2832 = vrcp.pop %v2642
      %v2833 = vrcp.pop %v2645
      %v2834 = vrcp.pop %v2648
      %v2835 = vrcp.pop %v2651
      %v2836 = vrcp.pop %v2654
      %v2837 = vrcp.pop %v2657
      %v2838 = vrcp.pop %v2660
      %v2839 = vrcp.pop %v2663
      %v2840 = vrcp.pop %v2666
      %v2841 = vrcp.pop %v2669
      %v2842 = vrcp.pop %v2672
      %v2843 = vrcp.pop %v2675
      %v2844 = vrcp.pop %v2678
      %v2845 = vrcp.pop %v2681
      %v2846 = vrcp.pop %v2684
      %v2847 = vrcp.pop %v2687
      %v2848 = vrcp.pop %v2690
      %v2849 = vrcp.pop %v2693
      %v2850 = vrcp.pop %v2696
      %v2851 = vrcp.pop %v2699
      %v2852 = vrcp.pop %v2702
      %v2853 = vrcp.pop %v2705
      %v2854 = vrcp.pop %v2708
      %v2855 = vrcp.pop %v2711
      %v2856 = vrcp.pop %v2714
      %v2857 = vrcp.pop %v2717
      %v2858 = vrcp.pop %v2720
      %v2859 = vrcp.pop %v2723
      %v2860 = vrcp.pop %v2726
      %v2861 = vrcp.pop %v2729
      %v2862 = vrcp.pop %v2732
      %v2863 = vrcp.pop %v2735
      %v2864 = vrcp.pop %v2738
      %v2865 = vrcp.pop %v2741
      %v2866 = vrcp.pop %v2744
      %v2867 = vrcp.pop %v2747
      %v2868 = vrcp.pop %v2750
      %v2869 = vrcp.pop %v2753
      %v2870 = vrcp.pop %v2756
      %v2871 = vrcp.pop %v2759
      %v2872 = vrcp.pop %v2762
      %v2873 = vrcp.pop %v2765
      %v2874 = vrcp.pop %v2768
      %v2875 = vrcp.pop %v2771
      %v2876 = vrcp.pop %v2774
      %v2877 = vrcp.pop %v2777
      %v2878 = vrcp.pop %v2780
      %v2879 = vrcp.pop %v2783
      %v2880 = vmul.f32 %v2305, %v2784
      %v2881 = vmul.f32 %v2307, %v2785
      %v2882 = vmul.f32 %v2309, %v2786
      %v2883 = vmul.f32 %v2311, %v2787
      %v2884 = vmul.f32 %v2313, %v2788
      %v2885 = vmul.f32 %v2315, %v2789
      %v2886 = vmul.f32 %v2317, %v2790
      %v2887 = vmul.f32 %v2319, %v2791
      %v2888 = vmul.f32 %v2321, %v2792
      %v2889 = vmul.f32 %v2323, %v2793
      %v2890 = vmul.f32 %v2325, %v2794
      %v2891 = vmul.f32 %v2327, %v2795
      %v2892 = vmul.f32 %v2329, %v2796
      %v2893 = vmul.f32 %v2331, %v2797
      %v2894 = vmul.f32 %v2333, %v2798
      %v2895 = vmul.f32 %v2335, %v2799
      %v2896 = vmul.f32 %v2337, %v2800
      %v2897 = vmul.f32 %v2339, %v2801
      %v2898 = vmul.f32 %v2341, %v2802
      %v2899 = vmul.f32 %v2343, %v2803
      %v2900 = vmul.f32 %v2345, %v2804
      %v2901 = vmul.f32 %v2347, %v2805
      %v2902 = vmul.f32 %v2349, %v2806
      %v2903 = vmul.f32 %v2351, %v2807
      %v2904 = vmul.f32 %v2353, %v2808
      %v2905 = vmul.f32 %v2355, %v2809
      %v2906 = vmul.f32 %v2357, %v2810
      %v2907 = vmul.f32 %v2359, %v2811
      %v2908 = vmul.f32 %v2361, %v2812
      %v2909 = vmul.f32 %v2363, %v2813
      %v2910 = vmul.f32 %v2365, %v2814
      %v2911 = vmul.f32 %v2367, %v2815
      %v2912 = vmul.f32 %v2369, %v2816
      %v2913 = vmul.f32 %v2371, %v2817
      %v2914 = vmul.f32 %v2373, %v2818
      %v2915 = vmul.f32 %v2375, %v2819
      %v2916 = vmul.f32 %v2377, %v2820
      %v2917 = vmul.f32 %v2379, %v2821
      %v2918 = vmul.f32 %v2381, %v2822
      %v2919 = vmul.f32 %v2383, %v2823
      %v2920 = vmul.f32 %v2385, %v2824
      %v2921 = vmul.f32 %v2387, %v2825
      %v2922 = vmul.f32 %v2389, %v2826
      %v2923 = vmul.f32 %v2391, %v2827
      %v2924 = vmul.f32 %v2393, %v2828
      %v2925 = vmul.f32 %v2395, %v2829
      %v2926 = vmul.f32 %v2397, %v2830
      %v2927 = vmul.f32 %v2399, %v2831
      %v2928 = vmul.f32 %v2401, %v2832
      %v2929 = vmul.f32 %v2403, %v2833
      %v2930 = vmul.f32 %v2405, %v2834
      %v2931 = vmul.f32 %v2407, %v2835
      %v2932 = vmul.f32 %v2409, %v2836
      %v2933 = vmul.f32 %v2411, %v2837
      %v2934 = vmul.f32 %v2413, %v2838
      %v2935 = vmul.f32 %v2415, %v2839
      %v2936 = vmul.f32 %v2417, %v2840
      %v2937 = vmul.f32 %v2419, %v2841
      %v2938 = vmul.f32 %v2421, %v2842
      %v2939 = vmul.f32 %v2423, %v2843
      %v2940 = vmul.f32 %v2425, %v2844
      %v2941 = vmul.f32 %v2427, %v2845
      %v2942 = vmul.f32 %v2429, %v2846
      %v2943 = vmul.f32 %v2431, %v2847
      %v2944 = vmul.f32 %v2433, %v2848
      %v2945 = vmul.f32 %v2435, %v2849
      %v2946 = vmul.f32 %v2437, %v2850
      %v2947 = vmul.f32 %v2439, %v2851
      %v2948 = vmul.f32 %v2441, %v2852
      %v2949 = vmul.f32 %v2443, %v2853
      %v2950 = vmul.f32 %v2445, %v2854
      %v2951 = vmul.f32 %v2447, %v2855
      %v2952 = vmul.f32 %v2449, %v2856
      %v2953 = vmul.f32 %v2451, %v2857
      %v2954 = vmul.f32 %v2453, %v2858
      %v2955 = vmul.f32 %v2455, %v2859
      %v2956 = vmul.f32 %v2457, %v2860
      %v2957 = vmul.f32 %v2459, %v2861
      %v2958 = vmul.f32 %v2461, %v2862
      %v2959 = vmul.f32 %v2463, %v2863
      %v2960 = vmul.f32 %v2465, %v2864
      %v2961 = vmul.f32 %v2467, %v2865
      %v2962 = vmul.f32 %v2469, %v2866
      %v2963 = vmul.f32 %v2471, %v2867
      %v2964 = vmul.f32 %v2473, %v2868
      %v2965 = vmul.f32 %v2475, %v2869
      %v2966 = vmul.f32 %v2477, %v2870
      %v2967 = vmul.f32 %v2479, %v2871
      %v2968 = vmul.f32 %v2481, %v2872
      %v2969 = vmul.f32 %v2483, %v2873
      %v2970 = vmul.f32 %v2485, %v2874
      %v2971 = vmul.f32 %v2487, %v2875
      %v2972 = vmul.f32 %v2489, %v2876
      %v2973 = vmul.f32 %v2491, %v2877
      %v2974 = vmul.f32 %v2493, %v2878
      %v2975 = vmul.f32 %v2495, %v2879
      %v2976 = vpack.c.bf16 %v2881, %v2880
      %v2977 = vpack.c.bf16 %v2883, %v2882
      %v2978 = vpack.c.bf16 %v2885, %v2884
      %v2979 = vpack.c.bf16 %v2887, %v2886
      %v2980 = vpack.c.bf16 %v2889, %v2888
      %v2981 = vpack.c.bf16 %v2891, %v2890
      %v2982 = vpack.c.bf16 %v2893, %v2892
      %v2983 = vpack.c.bf16 %v2895, %v2894
      %v2984 = vpack.c.bf16 %v2897, %v2896
      %v2985 = vpack.c.bf16 %v2899, %v2898
      %v2986 = vpack.c.bf16 %v2901, %v2900
      %v2987 = vpack.c.bf16 %v2903, %v2902
      %v2988 = vpack.c.bf16 %v2905, %v2904
      %v2989 = vpack.c.bf16 %v2907, %v2906
      %v2990 = vpack.c.bf16 %v2909, %v2908
      %v2991 = vpack.c.bf16 %v2911, %v2910
      %v2992 = vpack.c.bf16 %v2913, %v2912
      %v2993 = vpack.c.bf16 %v2915, %v2914
      %v2994 = vpack.c.bf16 %v2917, %v2916
      %v2995 = vpack.c.bf16 %v2919, %v2918
      %v2996 = vpack.c.bf16 %v2921, %v2920
      %v2997 = vpack.c.bf16 %v2923, %v2922
      %v2998 = vpack.c.bf16 %v2925, %v2924
      %v2999 = vpack.c.bf16 %v2927, %v2926
      %v3000 = vpack.c.bf16 %v2929, %v2928
      %v3001 = vpack.c.bf16 %v2931, %v2930
      %v3002 = vpack.c.bf16 %v2933, %v2932
      %v3003 = vpack.c.bf16 %v2935, %v2934
      %v3004 = vpack.c.bf16 %v2937, %v2936
      %v3005 = vpack.c.bf16 %v2939, %v2938
      %v3006 = vpack.c.bf16 %v2941, %v2940
      %v3007 = vpack.c.bf16 %v2943, %v2942
      %v3008 = vpack.c.bf16 %v2945, %v2944
      %v3009 = vpack.c.bf16 %v2947, %v2946
      %v3010 = vpack.c.bf16 %v2949, %v2948
      %v3011 = vpack.c.bf16 %v2951, %v2950
      %v3012 = vpack.c.bf16 %v2953, %v2952
      %v3013 = vpack.c.bf16 %v2955, %v2954
      %v3014 = vpack.c.bf16 %v2957, %v2956
      %v3015 = vpack.c.bf16 %v2959, %v2958
      %v3016 = vpack.c.bf16 %v2961, %v2960
      %v3017 = vpack.c.bf16 %v2963, %v2962
      %v3018 = vpack.c.bf16 %v2965, %v2964
      %v3019 = vpack.c.bf16 %v2967, %v2966
      %v3020 = vpack.c.bf16 %v2969, %v2968
      %v3021 = vpack.c.bf16 %v2971, %v2970
      %v3022 = vpack.c.bf16 %v2973, %v2972
      %v3023 = vpack.c.bf16 %v2975, %v2974
      %v3024 = vpack.c.bf16 %v712, %v709
      %v3025 = vpack.c.bf16 %v720, %v717
      %v3026 = vpack.c.bf16 %v728, %v725
      %v3027 = vpack.c.bf16 %v736, %v733
      %3032 = vrot.lane.b32.xlu0 %v1021, 64
      %v3033 = vpop.permute.xlu0 %3032
      %3034 = vrot.lane.b32.xlu0 %v3024, 64
      %v3035 = vpop.permute.xlu0 %3034
      %3036 = vrot.lane.b32.xlu0 %v1023, 64
      %v3037 = vpop.permute.xlu0 %3036
      %3038 = vrot.lane.b32.xlu0 %v3025, 64
      %v3039 = vpop.permute.xlu0 %3038
      %3040 = vrot.lane.b32.xlu0 %v1025, 64
      %v3041 = vpop.permute.xlu0 %3040
      %3042 = vrot.lane.b32.xlu0 %v3026, 64
      %v3043 = vpop.permute.xlu0 %3042
      %3044 = vrot.lane.b32.xlu0 %v1027, 64
      %v3045 = vpop.permute.xlu0 %3044
      %3046 = vrot.lane.b32.xlu0 %v3027, 64
      %v3047 = vpop.permute.xlu0 %3046
      %vm3048 = vcmask 523264
      %v3049 = vsel %vm3048, %v3033, %v3035
      %v3050 = vsel %vm3048, %v3037, %v3039
      %v3051 = vsel %vm3048, %v3041, %v3043
      %v3052 = vsel %vm3048, %v3045, %v3047
      %v3058 = vsel %vm1919, %v2976, 0
      %v3061 = vsel %vm1919, %v2977, 0
      %v3064 = vsel %vm1919, %v2978, 0
      %v3067 = vsel %vm1919, %v2979, 0
      %v3070 = vsel %vm1919, %v2980, 0
      %v3073 = vsel %vm1919, %v2981, 0
      %v3076 = vsel %vm1919, %v2982, 0
      %v3079 = vsel %vm1919, %v2983, 0
      %v3082 = vsel %vm1919, %v2984, 0
      %v3085 = vsel %vm1919, %v2985, 0
      %v3088 = vsel %vm1919, %v2986, 0
      %v3091 = vsel %vm1919, %v2987, 0
      %v3094 = vsel %vm1919, %v2988, 0
      %v3097 = vsel %vm1919, %v2989, 0
      %v3100 = vsel %vm1919, %v2990, 0
      %v3103 = vsel %vm1919, %v2991, 0
      %v3106 = vsel %vm1919, %v2992, 0
      %v3109 = vsel %vm1919, %v2993, 0
      %v3112 = vsel %vm1919, %v2994, 0
      %v3115 = vsel %vm1919, %v2995, 0
      %v3118 = vsel %vm1919, %v2996, 0
      %v3121 = vsel %vm1919, %v2997, 0
      %v3124 = vsel %vm1919, %v2998, 0
      %v3127 = vsel %vm1919, %v2999, 0
      %v3130 = vsel %vm1919, %v3000, 0
      %v3133 = vsel %vm1919, %v3001, 0
      %v3136 = vsel %vm1919, %v3002, 0
      %v3139 = vsel %vm1919, %v3003, 0
      %v3142 = vsel %vm1919, %v3004, 0
      %v3145 = vsel %vm1919, %v3005, 0
      %v3148 = vsel %vm1919, %v3006, 0
      %v3151 = vsel %vm1919, %v3007, 0
      %v3154 = vsel %vm1919, %v3008, 0
      %v3157 = vsel %vm1919, %v3009, 0
      %v3160 = vsel %vm1919, %v3010, 0
      %v3163 = vsel %vm1919, %v3011, 0
      %v3166 = vsel %vm1919, %v3012, 0
      %v3169 = vsel %vm1919, %v3013, 0
      %v3172 = vsel %vm1919, %v3014, 0
      %v3175 = vsel %vm1919, %v3015, 0
      %v3178 = vsel %vm1919, %v3016, 0
      %v3181 = vsel %vm1919, %v3017, 0
      %v3184 = vsel %vm1919, %v3018, 0
      %v3187 = vsel %vm1919, %v3019, 0
      %v3190 = vsel %vm1919, %v3020, 0
      %v3193 = vsel %vm1919, %v3021, 0
      %v3196 = vsel %vm1919, %v3022, 0
      %v3199 = vsel %vm1919, %v3023, 0
      %3201 = vmatprep.subr.bf16.mxu0 0
      %3202 = vmatpush1.bf16.msra.mxu0 %v3049
      %3203 = vmatprep.subr.bf16.mxu0 0
      %3204 = vmatpush1.bf16.msra.mxu0 %v3050
      %3205 = vmatprep.subr.bf16.mxu0 0
      %3206 = vmatpush1.bf16.msra.mxu0 %v3051
      %3207 = vmatprep.subr.bf16.mxu0 0
      %3208 = vmatpush1.bf16.msra.mxu0 %v3052
      %3209 = vmatprep.subr.bf16.mxu0 0
      %3210 = vmatpush1.bf16.msra.mxu0 0
      %3211 = vmatprep.subr.bf16.mxu0 0
      %3212 = vmatpush1.bf16.msra.mxu0 0
      %3213 = vmatprep.subr.bf16.mxu0 0
      %3214 = vmatpush1.bf16.msra.mxu0 0
      %3215 = vmatprep.subr.bf16.mxu0 0
      %3216 = vmatpush1.bf16.msra.mxu0 0
      %3217 = vmatprep.subr.bf16.mxu0 0
      %3218 = vmatpush1.bf16.msra.mxu0 0
      %3219 = vmatprep.subr.bf16.mxu0 0
      %3220 = vmatpush1.bf16.msra.mxu0 0
      %3221 = vmatprep.subr.bf16.mxu0 0
      %3222 = vmatpush1.bf16.msra.mxu0 0
      %3223 = vmatprep.subr.bf16.mxu0 0
      %3224 = vmatpush1.bf16.msra.mxu0 0
      %3225 = vmatprep.subr.bf16.mxu0 0
      %3226 = vmatpush1.bf16.msra.mxu0 0
      %3227 = vmatprep.subr.bf16.mxu0 0
      %3228 = vmatpush1.bf16.msra.mxu0 0
      %3229 = vmatprep.subr.bf16.mxu0 0
      %3230 = vmatpush1.bf16.msra.mxu0 0
      %3231 = vmatprep.subr.bf16.mxu0 0
      %3232 = vmatpush1.bf16.msra.mxu0 0
      %3233 = vmatprep.mubr.bf16.mxu0 0
      %3234 = vmatmul.mubr.bf16.gmra.mrb[0].mxu0 %v3058
      %v3235 = vpop.f32.mrb[0].mxu0
      %v3236 = vadd.f32 0.0, %v3235
      %v3237 = vpop.f32.mrb[0].mxu0
      %v3238 = vpop.f32.mrb[0].mxu0
      %v3239 = vadd.f32 0.0, %v3238
      %v3240 = vpop.f32.mrb[0].mxu0
      %3241 = vmatprep.mubr.bf16.mxu0 0
      %3242 = vmatmul.mubr.bf16.gmra.mrb[0].mxu0 %v3061
      %v3243 = vpop.f32.mrb[0].mxu0
      %v3244 = vadd.f32 0.0, %v3243
      %v3245 = vpop.f32.mrb[0].mxu0
      %v3246 = vpop.f32.mrb[0].mxu0
      %v3247 = vadd.f32 0.0, %v3246
      %v3248 = vpop.f32.mrb[0].mxu0
      %3249 = vmatprep.mubr.bf16.mxu0 0
      %3250 = vmatmul.mubr.bf16.gmra.mrb[0].mxu0 %v3064
      %v3251 = vpop.f32.mrb[0].mxu0
      %v3252 = vadd.f32 0.0, %v3251
      %v3253 = vpop.f32.mrb[0].mxu0
      %v3254 = vpop.f32.mrb[0].mxu0
      %v3255 = vadd.f32 0.0, %v3254
      %v3256 = vpop.f32.mrb[0].mxu0
      %3257 = vmatprep.mubr.bf16.mxu0 0
      %3258 = vmatmul.mubr.bf16.gmra.mrb[0].mxu0 %v3067
      %v3259 = vpop.f32.mrb[0].mxu0
      %v3260 = vadd.f32 0.0, %v3259
      %v3261 = vpop.f32.mrb[0].mxu0
      %v3262 = vpop.f32.mrb[0].mxu0
      %v3263 = vadd.f32 0.0, %v3262
      %v3264 = vpop.f32.mrb[0].mxu0
      %3265 = vmatprep.mubr.bf16.mxu0 0
      %3266 = vmatmul.mubr.bf16.gmra.mrb[0].mxu0 %v3070
      %v3267 = vpop.f32.mrb[0].mxu0
      %v3268 = vadd.f32 0.0, %v3267
      %v3269 = vpop.f32.mrb[0].mxu0
      %v3270 = vpop.f32.mrb[0].mxu0
      %v3271 = vadd.f32 0.0, %v3270
      %v3272 = vpop.f32.mrb[0].mxu0
      %3273 = vmatprep.mubr.bf16.mxu0 0
      %3274 = vmatmul.mubr.bf16.gmra.mrb[0].mxu0 %v3073
      %v3275 = vpop.f32.mrb[0].mxu0
      %v3276 = vadd.f32 0.0, %v3275
      %v3277 = vpop.f32.mrb[0].mxu0
      %v3278 = vpop.f32.mrb[0].mxu0
      %v3279 = vadd.f32 0.0, %v3278
      %v3280 = vpop.f32.mrb[0].mxu0
      %3281 = vmatprep.mubr.bf16.mxu0 0
      %3282 = vmatmul.mubr.bf16.gmra.mrb[0].mxu0 %v3076
      %v3283 = vpop.f32.mrb[0].mxu0
      %v3284 = vadd.f32 0.0, %v3283
      %v3285 = vpop.f32.mrb[0].mxu0
      %v3286 = vpop.f32.mrb[0].mxu0
      %v3287 = vadd.f32 0.0, %v3286
      %v3288 = vpop.f32.mrb[0].mxu0
      %3289 = vmatprep.mubr.bf16.mxu0 0
      %3290 = vmatmul.mubr.bf16.gmra.mrb[0].mxu0 %v3079
      %v3291 = vpop.f32.mrb[0].mxu0
      %v3292 = vadd.f32 0.0, %v3291
      %v3293 = vpop.f32.mrb[0].mxu0
      %v3294 = vpop.f32.mrb[0].mxu0
      %v3295 = vadd.f32 0.0, %v3294
      %v3296 = vpop.f32.mrb[0].mxu0
      %3297 = vmatprep.mubr.bf16.mxu0 0
      %3298 = vmatmul.mubr.bf16.gmra.mrb[0].mxu0 %v3082
      %v3299 = vpop.f32.mrb[0].mxu0
      %v3300 = vadd.f32 0.0, %v3299
      %v3301 = vpop.f32.mrb[0].mxu0
      %v3302 = vpop.f32.mrb[0].mxu0
      %v3303 = vadd.f32 0.0, %v3302
      %v3304 = vpop.f32.mrb[0].mxu0
      %3305 = vmatprep.mubr.bf16.mxu0 0
      %3306 = vmatmul.mubr.bf16.gmra.mrb[0].mxu0 %v3085
      %v3307 = vpop.f32.mrb[0].mxu0
      %v3308 = vadd.f32 0.0, %v3307
      %v3309 = vpop.f32.mrb[0].mxu0
      %v3310 = vpop.f32.mrb[0].mxu0
      %v3311 = vadd.f32 0.0, %v3310
      %v3312 = vpop.f32.mrb[0].mxu0
      %3313 = vmatprep.mubr.bf16.mxu0 0
      %3314 = vmatmul.mubr.bf16.gmra.mrb[0].mxu0 %v3088
      %v3315 = vpop.f32.mrb[0].mxu0
      %v3316 = vadd.f32 0.0, %v3315
      %v3317 = vpop.f32.mrb[0].mxu0
      %v3318 = vpop.f32.mrb[0].mxu0
      %v3319 = vadd.f32 0.0, %v3318
      %v3320 = vpop.f32.mrb[0].mxu0
      %3321 = vmatprep.mubr.bf16.mxu0 0
      %3322 = vmatmul.mubr.bf16.gmra.mrb[0].mxu0 %v3091
      %v3323 = vpop.f32.mrb[0].mxu0
      %v3324 = vadd.f32 0.0, %v3323
      %v3325 = vpop.f32.mrb[0].mxu0
      %v3326 = vpop.f32.mrb[0].mxu0
      %v3327 = vadd.f32 0.0, %v3326
      %v3328 = vpop.f32.mrb[0].mxu0
      %3329 = vmatprep.mubr.bf16.mxu0 0
      %3330 = vmatmul.mubr.bf16.gmra.mrb[0].mxu0 %v3094
      %v3331 = vpop.f32.mrb[0].mxu0
      %v3332 = vadd.f32 0.0, %v3331
      %v3333 = vpop.f32.mrb[0].mxu0
      %v3334 = vpop.f32.mrb[0].mxu0
      %v3335 = vadd.f32 0.0, %v3334
      %v3336 = vpop.f32.mrb[0].mxu0
      %3337 = vmatprep.mubr.bf16.mxu0 0
      %3338 = vmatmul.mubr.bf16.gmra.mrb[0].mxu0 %v3097
      %v3339 = vpop.f32.mrb[0].mxu0
      %v3340 = vadd.f32 0.0, %v3339
      %v3341 = vpop.f32.mrb[0].mxu0
      %v3342 = vpop.f32.mrb[0].mxu0
      %v3343 = vadd.f32 0.0, %v3342
      %v3344 = vpop.f32.mrb[0].mxu0
      %3345 = vmatprep.mubr.bf16.mxu0 0
      %3346 = vmatmul.mubr.bf16.gmra.mrb[0].mxu0 %v3100
      %v3347 = vpop.f32.mrb[0].mxu0
      %v3348 = vadd.f32 0.0, %v3347
      %v3349 = vpop.f32.mrb[0].mxu0
      %v3350 = vpop.f32.mrb[0].mxu0
      %v3351 = vadd.f32 0.0, %v3350
      %v3352 = vpop.f32.mrb[0].mxu0
      %3353 = vmatprep.mubr.bf16.mxu0 0
      %3354 = vmatmul.mubr.bf16.gmra.mrb[0].mxu0 %v3103
      %v3355 = vpop.f32.mrb[0].mxu0
      %v3356 = vadd.f32 0.0, %v3355
      %v3357 = vpop.f32.mrb[0].mxu0
      %v3358 = vpop.f32.mrb[0].mxu0
      %v3359 = vadd.f32 0.0, %v3358
      %v3360 = vpop.f32.mrb[0].mxu0
      %3361 = vmatprep.mubr.bf16.mxu0 0
      %3362 = vmatmul.mubr.bf16.gmra.mrb[0].mxu0 %v3106
      %v3363 = vpop.f32.mrb[0].mxu0
      %v3364 = vadd.f32 0.0, %v3363
      %v3365 = vpop.f32.mrb[0].mxu0
      %v3366 = vpop.f32.mrb[0].mxu0
      %v3367 = vadd.f32 0.0, %v3366
      %v3368 = vpop.f32.mrb[0].mxu0
      %3369 = vmatprep.mubr.bf16.mxu0 0
      %3370 = vmatmul.mubr.bf16.gmra.mrb[0].mxu0 %v3109
      %v3371 = vpop.f32.mrb[0].mxu0
      %v3372 = vadd.f32 0.0, %v3371
      %v3373 = vpop.f32.mrb[0].mxu0
      %v3374 = vpop.f32.mrb[0].mxu0
      %v3375 = vadd.f32 0.0, %v3374
      %v3376 = vpop.f32.mrb[0].mxu0
      %3377 = vmatprep.mubr.bf16.mxu0 0
      %3378 = vmatmul.mubr.bf16.gmra.mrb[0].mxu0 %v3112
      %v3379 = vpop.f32.mrb[0].mxu0
      %v3380 = vadd.f32 0.0, %v3379
      %v3381 = vpop.f32.mrb[0].mxu0
      %v3382 = vpop.f32.mrb[0].mxu0
      %v3383 = vadd.f32 0.0, %v3382
      %v3384 = vpop.f32.mrb[0].mxu0
      %3385 = vmatprep.mubr.bf16.mxu0 0
      %3386 = vmatmul.mubr.bf16.gmra.mrb[0].mxu0 %v3115
      %v3387 = vpop.f32.mrb[0].mxu0
      %v3388 = vadd.f32 0.0, %v3387
      %v3389 = vpop.f32.mrb[0].mxu0
      %v3390 = vpop.f32.mrb[0].mxu0
      %v3391 = vadd.f32 0.0, %v3390
      %v3392 = vpop.f32.mrb[0].mxu0
      %3393 = vmatprep.mubr.bf16.mxu0 0
      %3394 = vmatmul.mubr.bf16.gmra.mrb[0].mxu0 %v3118
      %v3395 = vpop.f32.mrb[0].mxu0
      %v3396 = vadd.f32 0.0, %v3395
      %v3397 = vpop.f32.mrb[0].mxu0
      %v3398 = vpop.f32.mrb[0].mxu0
      %v3399 = vadd.f32 0.0, %v3398
      %v3400 = vpop.f32.mrb[0].mxu0
      %3401 = vmatprep.mubr.bf16.mxu0 0
      %3402 = vmatmul.mubr.bf16.gmra.mrb[0].mxu0 %v3121
      %v3403 = vpop.f32.mrb[0].mxu0
      %v3404 = vadd.f32 0.0, %v3403
      %v3405 = vpop.f32.mrb[0].mxu0
      %v3406 = vpop.f32.mrb[0].mxu0
      %v3407 = vadd.f32 0.0, %v3406
      %v3408 = vpop.f32.mrb[0].mxu0
      %3409 = vmatprep.mubr.bf16.mxu0 0
      %3410 = vmatmul.mubr.bf16.gmra.mrb[0].mxu0 %v3124
      %v3411 = vpop.f32.mrb[0].mxu0
      %v3412 = vadd.f32 0.0, %v3411
      %v3413 = vpop.f32.mrb[0].mxu0
      %v3414 = vpop.f32.mrb[0].mxu0
      %v3415 = vadd.f32 0.0, %v3414
      %v3416 = vpop.f32.mrb[0].mxu0
      %3417 = vmatprep.mubr.bf16.mxu0 0
      %3418 = vmatmul.mubr.bf16.gmra.mrb[0].mxu0 %v3127
      %v3419 = vpop.f32.mrb[0].mxu0
      %v3420 = vadd.f32 0.0, %v3419
      %v3421 = vpop.f32.mrb[0].mxu0
      %v3422 = vpop.f32.mrb[0].mxu0
      %v3423 = vadd.f32 0.0, %v3422
      %v3424 = vpop.f32.mrb[0].mxu0
      %3425 = vmatprep.mubr.bf16.mxu0 0
      %3426 = vmatmul.mubr.bf16.gmra.mrb[0].mxu0 %v3130
      %v3427 = vpop.f32.mrb[0].mxu0
      %v3428 = vadd.f32 0.0, %v3427
      %v3429 = vpop.f32.mrb[0].mxu0
      %v3430 = vpop.f32.mrb[0].mxu0
      %v3431 = vadd.f32 0.0, %v3430
      %v3432 = vpop.f32.mrb[0].mxu0
      %3433 = vmatprep.mubr.bf16.mxu0 0
      %3434 = vmatmul.mubr.bf16.gmra.mrb[0].mxu0 %v3133
      %v3435 = vpop.f32.mrb[0].mxu0
      %v3436 = vadd.f32 0.0, %v3435
      %v3437 = vpop.f32.mrb[0].mxu0
      %v3438 = vpop.f32.mrb[0].mxu0
      %v3439 = vadd.f32 0.0, %v3438
      %v3440 = vpop.f32.mrb[0].mxu0
      %3441 = vmatprep.mubr.bf16.mxu0 0
      %3442 = vmatmul.mubr.bf16.gmra.mrb[0].mxu0 %v3136
      %v3443 = vpop.f32.mrb[0].mxu0
      %v3444 = vadd.f32 0.0, %v3443
      %v3445 = vpop.f32.mrb[0].mxu0
      %v3446 = vpop.f32.mrb[0].mxu0
      %v3447 = vadd.f32 0.0, %v3446
      %v3448 = vpop.f32.mrb[0].mxu0
      %3449 = vmatprep.mubr.bf16.mxu0 0
      %3450 = vmatmul.mubr.bf16.gmra.mrb[0].mxu0 %v3139
      %v3451 = vpop.f32.mrb[0].mxu0
      %v3452 = vadd.f32 0.0, %v3451
      %v3453 = vpop.f32.mrb[0].mxu0
      %v3454 = vpop.f32.mrb[0].mxu0
      %v3455 = vadd.f32 0.0, %v3454
      %v3456 = vpop.f32.mrb[0].mxu0
      %3457 = vmatprep.mubr.bf16.mxu0 0
      %3458 = vmatmul.mubr.bf16.gmra.mrb[0].mxu0 %v3142
      %v3459 = vpop.f32.mrb[0].mxu0
      %v3460 = vadd.f32 0.0, %v3459
      %v3461 = vpop.f32.mrb[0].mxu0
      %v3462 = vpop.f32.mrb[0].mxu0
      %v3463 = vadd.f32 0.0, %v3462
      %v3464 = vpop.f32.mrb[0].mxu0
      %3465 = vmatprep.mubr.bf16.mxu0 0
      %3466 = vmatmul.mubr.bf16.gmra.mrb[0].mxu0 %v3145
      %v3467 = vpop.f32.mrb[0].mxu0
      %v3468 = vadd.f32 0.0, %v3467
      %v3469 = vpop.f32.mrb[0].mxu0
      %v3470 = vpop.f32.mrb[0].mxu0
      %v3471 = vadd.f32 0.0, %v3470
      %v3472 = vpop.f32.mrb[0].mxu0
      %3473 = vmatprep.mubr.bf16.mxu0 0
      %3474 = vmatmul.mubr.bf16.gmra.mrb[0].mxu0 %v3148
      %v3475 = vpop.f32.mrb[0].mxu0
      %v3476 = vadd.f32 0.0, %v3475
      %v3477 = vpop.f32.mrb[0].mxu0
      %v3478 = vpop.f32.mrb[0].mxu0
      %v3479 = vadd.f32 0.0, %v3478
      %v3480 = vpop.f32.mrb[0].mxu0
      %3481 = vmatprep.mubr.bf16.mxu0 0
      %3482 = vmatmul.mubr.bf16.gmra.mrb[0].mxu0 %v3151
      %v3483 = vpop.f32.mrb[0].mxu0
      %v3484 = vadd.f32 0.0, %v3483
      %v3485 = vpop.f32.mrb[0].mxu0
      %v3486 = vpop.f32.mrb[0].mxu0
      %v3487 = vadd.f32 0.0, %v3486
      %v3488 = vpop.f32.mrb[0].mxu0
      %3489 = vmatprep.mubr.bf16.mxu0 0
      %3490 = vmatmul.mubr.bf16.gmra.mrb[0].mxu0 %v3154
      %v3491 = vpop.f32.mrb[0].mxu0
      %v3492 = vadd.f32 0.0, %v3491
      %v3493 = vpop.f32.mrb[0].mxu0
      %v3494 = vpop.f32.mrb[0].mxu0
      %v3495 = vadd.f32 0.0, %v3494
      %v3496 = vpop.f32.mrb[0].mxu0
      %3497 = vmatprep.mubr.bf16.mxu0 0
      %3498 = vmatmul.mubr.bf16.gmra.mrb[0].mxu0 %v3157
      %v3499 = vpop.f32.mrb[0].mxu0
      %v3500 = vadd.f32 0.0, %v3499
      %v3501 = vpop.f32.mrb[0].mxu0
      %v3502 = vpop.f32.mrb[0].mxu0
      %v3503 = vadd.f32 0.0, %v3502
      %v3504 = vpop.f32.mrb[0].mxu0
      %3505 = vmatprep.mubr.bf16.mxu0 0
      %3506 = vmatmul.mubr.bf16.gmra.mrb[0].mxu0 %v3160
      %v3507 = vpop.f32.mrb[0].mxu0
      %v3508 = vadd.f32 0.0, %v3507
      %v3509 = vpop.f32.mrb[0].mxu0
      %v3510 = vpop.f32.mrb[0].mxu0
      %v3511 = vadd.f32 0.0, %v3510
      %v3512 = vpop.f32.mrb[0].mxu0
      %3513 = vmatprep.mubr.bf16.mxu0 0
      %3514 = vmatmul.mubr.bf16.gmra.mrb[0].mxu0 %v3163
      %v3515 = vpop.f32.mrb[0].mxu0
      %v3516 = vadd.f32 0.0, %v3515
      %v3517 = vpop.f32.mrb[0].mxu0
      %v3518 = vpop.f32.mrb[0].mxu0
      %v3519 = vadd.f32 0.0, %v3518
      %v3520 = vpop.f32.mrb[0].mxu0
      %3521 = vmatprep.mubr.bf16.mxu0 0
      %3522 = vmatmul.mubr.bf16.gmra.mrb[0].mxu0 %v3166
      %v3523 = vpop.f32.mrb[0].mxu0
      %v3524 = vadd.f32 0.0, %v3523
      %v3525 = vpop.f32.mrb[0].mxu0
      %v3526 = vpop.f32.mrb[0].mxu0
      %v3527 = vadd.f32 0.0, %v3526
      %v3528 = vpop.f32.mrb[0].mxu0
      %3529 = vmatprep.mubr.bf16.mxu0 0
      %3530 = vmatmul.mubr.bf16.gmra.mrb[0].mxu0 %v3169
      %v3531 = vpop.f32.mrb[0].mxu0
      %v3532 = vadd.f32 0.0, %v3531
      %v3533 = vpop.f32.mrb[0].mxu0
      %v3534 = vpop.f32.mrb[0].mxu0
      %v3535 = vadd.f32 0.0, %v3534
      %v3536 = vpop.f32.mrb[0].mxu0
      %3537 = vmatprep.mubr.bf16.mxu0 0
      %3538 = vmatmul.mubr.bf16.gmra.mrb[0].mxu0 %v3172
      %v3539 = vpop.f32.mrb[0].mxu0
      %v3540 = vadd.f32 0.0, %v3539
      %v3541 = vpop.f32.mrb[0].mxu0
      %v3542 = vpop.f32.mrb[0].mxu0
      %v3543 = vadd.f32 0.0, %v3542
      %v3544 = vpop.f32.mrb[0].mxu0
      %3545 = vmatprep.mubr.bf16.mxu0 0
      %3546 = vmatmul.mubr.bf16.gmra.mrb[0].mxu0 %v3175
      %v3547 = vpop.f32.mrb[0].mxu0
      %v3548 = vadd.f32 0.0, %v3547
      %v3549 = vpop.f32.mrb[0].mxu0
      %v3550 = vpop.f32.mrb[0].mxu0
      %v3551 = vadd.f32 0.0, %v3550
      %v3552 = vpop.f32.mrb[0].mxu0
      %3553 = vmatprep.mubr.bf16.mxu0 0
      %3554 = vmatmul.mubr.bf16.gmra.mrb[0].mxu0 %v3178
      %v3555 = vpop.f32.mrb[0].mxu0
      %v3556 = vadd.f32 0.0, %v3555
      %v3557 = vpop.f32.mrb[0].mxu0
      %v3558 = vpop.f32.mrb[0].mxu0
      %v3559 = vadd.f32 0.0, %v3558
      %v3560 = vpop.f32.mrb[0].mxu0
      %3561 = vmatprep.mubr.bf16.mxu0 0
      %3562 = vmatmul.mubr.bf16.gmra.mrb[0].mxu0 %v3181
      %v3563 = vpop.f32.mrb[0].mxu0
      %v3564 = vadd.f32 0.0, %v3563
      %v3565 = vpop.f32.mrb[0].mxu0
      %v3566 = vpop.f32.mrb[0].mxu0
      %v3567 = vadd.f32 0.0, %v3566
      %v3568 = vpop.f32.mrb[0].mxu0
      %3569 = vmatprep.mubr.bf16.mxu0 0
      %3570 = vmatmul.mubr.bf16.gmra.mrb[0].mxu0 %v3184
      %v3571 = vpop.f32.mrb[0].mxu0
      %v3572 = vadd.f32 0.0, %v3571
      %v3573 = vpop.f32.mrb[0].mxu0
      %v3574 = vpop.f32.mrb[0].mxu0
      %v3575 = vadd.f32 0.0, %v3574
      %v3576 = vpop.f32.mrb[0].mxu0
      %3577 = vmatprep.mubr.bf16.mxu0 0
      %3578 = vmatmul.mubr.bf16.gmra.mrb[0].mxu0 %v3187
      %v3579 = vpop.f32.mrb[0].mxu0
      %v3580 = vadd.f32 0.0, %v3579
      %v3581 = vpop.f32.mrb[0].mxu0
      %v3582 = vpop.f32.mrb[0].mxu0
      %v3583 = vadd.f32 0.0, %v3582
      %v3584 = vpop.f32.mrb[0].mxu0
      %3585 = vmatprep.mubr.bf16.mxu0 0
      %3586 = vmatmul.mubr.bf16.gmra.mrb[0].mxu0 %v3190
      %v3587 = vpop.f32.mrb[0].mxu0
      %v3588 = vadd.f32 0.0, %v3587
      %v3589 = vpop.f32.mrb[0].mxu0
      %v3590 = vpop.f32.mrb[0].mxu0
      %v3591 = vadd.f32 0.0, %v3590
      %v3592 = vpop.f32.mrb[0].mxu0
      %3593 = vmatprep.mubr.bf16.mxu0 0
      %3594 = vmatmul.mubr.bf16.gmra.mrb[0].mxu0 %v3193
      %v3595 = vpop.f32.mrb[0].mxu0
      %v3596 = vadd.f32 0.0, %v3595
      %v3597 = vpop.f32.mrb[0].mxu0
      %v3598 = vpop.f32.mrb[0].mxu0
      %v3599 = vadd.f32 0.0, %v3598
      %v3600 = vpop.f32.mrb[0].mxu0
      %3601 = vmatprep.mubr.bf16.mxu0 0
      %3602 = vmatmul.mubr.bf16.gmra.mrb[0].mxu0 %v3196
      %v3603 = vpop.f32.mrb[0].mxu0
      %v3604 = vadd.f32 0.0, %v3603
      %v3605 = vpop.f32.mrb[0].mxu0
      %v3606 = vpop.f32.mrb[0].mxu0
      %v3607 = vadd.f32 0.0, %v3606
      %v3608 = vpop.f32.mrb[0].mxu0
      %3609 = vmatprep.mubr.bf16.mxu0 0
      %3610 = vmatmul.mubr.bf16.gmra.mrb[0].mxu0 %v3199
      %v3611 = vpop.f32.mrb[0].mxu0
      %v3612 = vadd.f32 0.0, %v3611
      %v3613 = vpop.f32.mrb[0].mxu0
      %v3614 = vpop.f32.mrb[0].mxu0
      %v3615 = vadd.f32 0.0, %v3614
      %v3616 = vpop.f32.mrb[0].mxu0
      %3617 = vdwg.mxu0
      %v3618 = vmul.f32 %v3236, %v819
      %v3619 = vmul.f32 %v3239, %v819
      %v3620 = vmul.f32 %v3244, %v819
      %v3621 = vmul.f32 %v3247, %v819
      %v3622 = vmul.f32 %v3252, %v819
      %v3623 = vmul.f32 %v3255, %v819
      %v3624 = vmul.f32 %v3260, %v819
      %v3625 = vmul.f32 %v3263, %v819
      %v3626 = vmul.f32 %v3268, %v823
      %v3627 = vmul.f32 %v3271, %v823
      %v3628 = vmul.f32 %v3276, %v823
      %v3629 = vmul.f32 %v3279, %v823
      %v3630 = vmul.f32 %v3284, %v823
      %v3631 = vmul.f32 %v3287, %v823
      %v3632 = vmul.f32 %v3292, %v823
      %v3633 = vmul.f32 %v3295, %v823
      %v3634 = vmul.f32 %v3300, %v827
      %v3635 = vmul.f32 %v3303, %v827
      %v3636 = vmul.f32 %v3308, %v827
      %v3637 = vmul.f32 %v3311, %v827
      %v3638 = vmul.f32 %v3316, %v827
      %v3639 = vmul.f32 %v3319, %v827
      %v3640 = vmul.f32 %v3324, %v827
      %v3641 = vmul.f32 %v3327, %v827
      %v3642 = vmul.f32 %v3332, %v831
      %v3643 = vmul.f32 %v3335, %v831
      %v3644 = vmul.f32 %v3340, %v831
      %v3645 = vmul.f32 %v3343, %v831
      %v3646 = vmul.f32 %v3348, %v831
      %v3647 = vmul.f32 %v3351, %v831
      %v3648 = vmul.f32 %v3356, %v831
      %v3649 = vmul.f32 %v3359, %v831
      %v3650 = vmul.f32 %v3364, %v835
      %v3651 = vmul.f32 %v3367, %v835
      %v3652 = vmul.f32 %v3372, %v835
      %v3653 = vmul.f32 %v3375, %v835
      %v3654 = vmul.f32 %v3380, %v835
      %v3655 = vmul.f32 %v3383, %v835
      %v3656 = vmul.f32 %v3388, %v835
      %v3657 = vmul.f32 %v3391, %v835
      %v3658 = vmul.f32 %v3396, %v839
      %v3659 = vmul.f32 %v3399, %v839
      %v3660 = vmul.f32 %v3404, %v839
      %v3661 = vmul.f32 %v3407, %v839
      %v3662 = vmul.f32 %v3412, %v839
      %v3663 = vmul.f32 %v3415, %v839
      %v3664 = vmul.f32 %v3420, %v839
      %v3665 = vmul.f32 %v3423, %v839
      %v3666 = vmul.f32 %v3428, %v843
      %v3667 = vmul.f32 %v3431, %v843
      %v3668 = vmul.f32 %v3436, %v843
      %v3669 = vmul.f32 %v3439, %v843
      %v3670 = vmul.f32 %v3444, %v843
      %v3671 = vmul.f32 %v3447, %v843
      %v3672 = vmul.f32 %v3452, %v843
      %v3673 = vmul.f32 %v3455, %v843
      %v3674 = vmul.f32 %v3460, %v847
      %v3675 = vmul.f32 %v3463, %v847
      %v3676 = vmul.f32 %v3468, %v847
      %v3677 = vmul.f32 %v3471, %v847
      %v3678 = vmul.f32 %v3476, %v847
      %v3679 = vmul.f32 %v3479, %v847
      %v3680 = vmul.f32 %v3484, %v847
      %v3681 = vmul.f32 %v3487, %v847
      %v3682 = vmul.f32 %v3492, %v851
      %v3683 = vmul.f32 %v3495, %v851
      %v3684 = vmul.f32 %v3500, %v851
      %v3685 = vmul.f32 %v3503, %v851
      %v3686 = vmul.f32 %v3508, %v851
      %v3687 = vmul.f32 %v3511, %v851
      %v3688 = vmul.f32 %v3516, %v851
      %v3689 = vmul.f32 %v3519, %v851
      %v3690 = vmul.f32 %v3524, %v855
      %v3691 = vmul.f32 %v3527, %v855
      %v3692 = vmul.f32 %v3532, %v855
      %v3693 = vmul.f32 %v3535, %v855
      %v3694 = vmul.f32 %v3540, %v855
      %v3695 = vmul.f32 %v3543, %v855
      %v3696 = vmul.f32 %v3548, %v855
      %v3697 = vmul.f32 %v3551, %v855
      %v3698 = vmul.f32 %v3556, %v859
      %v3699 = vmul.f32 %v3559, %v859
      %v3700 = vmul.f32 %v3564, %v859
      %v3701 = vmul.f32 %v3567, %v859
      %v3702 = vmul.f32 %v3572, %v859
      %v3703 = vmul.f32 %v3575, %v859
      %v3704 = vmul.f32 %v3580, %v859
      %v3705 = vmul.f32 %v3583, %v859
      %v3706 = vmul.f32 %v3588, %v863
      %v3707 = vmul.f32 %v3591, %v863
      %v3708 = vmul.f32 %v3596, %v863
      %v3709 = vmul.f32 %v3599, %v863
      %v3710 = vmul.f32 %v3604, %v863
      %v3711 = vmul.f32 %v3607, %v863
      %v3712 = vmul.f32 %v3612, %v863
      %v3713 = vmul.f32 %v3615, %v863
      %v3714 = vsel %vm1057, %v3618, 0.0
      %v3715 = vsel %vm1057, %v3626, 0.0
      %v3716 = vadd.f32 %v3714, %v3715
      %v3717 = vsel %vm1057, %v3634, 0.0
      %v3718 = vadd.f32 %v3716, %v3717
      %v3719 = vsel %vm1057, %v3642, 0.0
      %v3720 = vadd.f32 %v3718, %v3719
      %v3721 = vsel %vm1057, %v3650, 0.0
      %v3722 = vadd.f32 %v3720, %v3721
      %v3723 = vsel %vm1057, %v3658, 0.0
      %v3724 = vadd.f32 %v3722, %v3723
      %v3725 = vsel %vm1057, %v3666, 0.0
      %v3726 = vadd.f32 %v3724, %v3725
      %v3727 = vsel %vm1057, %v3674, 0.0
      %v3728 = vadd.f32 %v3726, %v3727
      %v3729 = vsel %vm1057, %v3682, 0.0
      %v3730 = vadd.f32 %v3728, %v3729
      %v3731 = vsel %vm1057, %v3690, 0.0
      %v3732 = vadd.f32 %v3730, %v3731
      %v3733 = vsel %vm1057, %v3698, 0.0
      %v3734 = vadd.f32 %v3732, %v3733
      %v3735 = vsel %vm1057, %v3706, 0.0
      %v3736 = vadd.f32 %v3734, %v3735
      %v3737 = vsel %vm1057, %v3619, 0.0
      %v3738 = vsel %vm1057, %v3627, 0.0
      %v3739 = vadd.f32 %v3737, %v3738
      %v3740 = vsel %vm1057, %v3635, 0.0
      %v3741 = vadd.f32 %v3739, %v3740
      %v3742 = vsel %vm1057, %v3643, 0.0
      %v3743 = vadd.f32 %v3741, %v3742
      %v3744 = vsel %vm1057, %v3651, 0.0
      %v3745 = vadd.f32 %v3743, %v3744
      %v3746 = vsel %vm1057, %v3659, 0.0
      %v3747 = vadd.f32 %v3745, %v3746
      %v3748 = vsel %vm1057, %v3667, 0.0
      %v3749 = vadd.f32 %v3747, %v3748
      %v3750 = vsel %vm1057, %v3675, 0.0
      %v3751 = vadd.f32 %v3749, %v3750
      %v3752 = vsel %vm1057, %v3683, 0.0
      %v3753 = vadd.f32 %v3751, %v3752
      %v3754 = vsel %vm1057, %v3691, 0.0
      %v3755 = vadd.f32 %v3753, %v3754
      %v3756 = vsel %vm1057, %v3699, 0.0
      %v3757 = vadd.f32 %v3755, %v3756
      %v3758 = vsel %vm1057, %v3707, 0.0
      %v3759 = vadd.f32 %v3757, %v3758
      %v3760 = vsel %vm1057, %v3620, 0.0
      %v3761 = vsel %vm1057, %v3628, 0.0
      %v3762 = vadd.f32 %v3760, %v3761
      %v3763 = vsel %vm1057, %v3636, 0.0
      %v3764 = vadd.f32 %v3762, %v3763
      %v3765 = vsel %vm1057, %v3644, 0.0
      %v3766 = vadd.f32 %v3764, %v3765
      %v3767 = vsel %vm1057, %v3652, 0.0
      %v3768 = vadd.f32 %v3766, %v3767
      %v3769 = vsel %vm1057, %v3660, 0.0
      %v3770 = vadd.f32 %v3768, %v3769
      %v3771 = vsel %vm1057, %v3668, 0.0
      %v3772 = vadd.f32 %v3770, %v3771
      %v3773 = vsel %vm1057, %v3676, 0.0
      %v3774 = vadd.f32 %v3772, %v3773
      %v3775 = vsel %vm1057, %v3684, 0.0
      %v3776 = vadd.f32 %v3774, %v3775
      %v3777 = vsel %vm1057, %v3692, 0.0
      %v3778 = vadd.f32 %v3776, %v3777
      %v3779 = vsel %vm1057, %v3700, 0.0
      %v3780 = vadd.f32 %v3778, %v3779
      %v3781 = vsel %vm1057, %v3708, 0.0
      %v3782 = vadd.f32 %v3780, %v3781
      %v3783 = vsel %vm1057, %v3621, 0.0
      %v3784 = vsel %vm1057, %v3629, 0.0
      %v3785 = vadd.f32 %v3783, %v3784
      %v3786 = vsel %vm1057, %v3637, 0.0
      %v3787 = vadd.f32 %v3785, %v3786
      %v3788 = vsel %vm1057, %v3645, 0.0
      %v3789 = vadd.f32 %v3787, %v3788
      %v3790 = vsel %vm1057, %v3653, 0.0
      %v3791 = vadd.f32 %v3789, %v3790
      %v3792 = vsel %vm1057, %v3661, 0.0
      %v3793 = vadd.f32 %v3791, %v3792
      %v3794 = vsel %vm1057, %v3669, 0.0
      %v3795 = vadd.f32 %v3793, %v3794
      %v3796 = vsel %vm1057, %v3677, 0.0
      %v3797 = vadd.f32 %v3795, %v3796
      %v3798 = vsel %vm1057, %v3685, 0.0
      %v3799 = vadd.f32 %v3797, %v3798
      %v3800 = vsel %vm1057, %v3693, 0.0
      %v3801 = vadd.f32 %v3799, %v3800
      %v3802 = vsel %vm1057, %v3701, 0.0
      %v3803 = vadd.f32 %v3801, %v3802
      %v3804 = vsel %vm1057, %v3709, 0.0
      %v3805 = vadd.f32 %v3803, %v3804
      %v3806 = vsel %vm1057, %v3622, 0.0
      %v3807 = vsel %vm1057, %v3630, 0.0
      %v3808 = vadd.f32 %v3806, %v3807
      %v3809 = vsel %vm1057, %v3638, 0.0
      %v3810 = vadd.f32 %v3808, %v3809
      %v3811 = vsel %vm1057, %v3646, 0.0
      %v3812 = vadd.f32 %v3810, %v3811
      %v3813 = vsel %vm1057, %v3654, 0.0
      %v3814 = vadd.f32 %v3812, %v3813
      %v3815 = vsel %vm1057, %v3662, 0.0
      %v3816 = vadd.f32 %v3814, %v3815
      %v3817 = vsel %vm1057, %v3670, 0.0
      %v3818 = vadd.f32 %v3816, %v3817
      %v3819 = vsel %vm1057, %v3678, 0.0
      %v3820 = vadd.f32 %v3818, %v3819
      %v3821 = vsel %vm1057, %v3686, 0.0
      %v3822 = vadd.f32 %v3820, %v3821
      %v3823 = vsel %vm1057, %v3694, 0.0
      %v3824 = vadd.f32 %v3822, %v3823
      %v3825 = vsel %vm1057, %v3702, 0.0
      %v3826 = vadd.f32 %v3824, %v3825
      %v3827 = vsel %vm1057, %v3710, 0.0
      %v3828 = vadd.f32 %v3826, %v3827
      %v3829 = vsel %vm1057, %v3623, 0.0
      %v3830 = vsel %vm1057, %v3631, 0.0
      %v3831 = vadd.f32 %v3829, %v3830
      %v3832 = vsel %vm1057, %v3639, 0.0
      %v3833 = vadd.f32 %v3831, %v3832
      %v3834 = vsel %vm1057, %v3647, 0.0
      %v3835 = vadd.f32 %v3833, %v3834
      %v3836 = vsel %vm1057, %v3655, 0.0
      %v3837 = vadd.f32 %v3835, %v3836
      %v3838 = vsel %vm1057, %v3663, 0.0
      %v3839 = vadd.f32 %v3837, %v3838
      %v3840 = vsel %vm1057, %v3671, 0.0
      %v3841 = vadd.f32 %v3839, %v3840
      %v3842 = vsel %vm1057, %v3679, 0.0
      %v3843 = vadd.f32 %v3841, %v3842
      %v3844 = vsel %vm1057, %v3687, 0.0
      %v3845 = vadd.f32 %v3843, %v3844
      %v3846 = vsel %vm1057, %v3695, 0.0
      %v3847 = vadd.f32 %v3845, %v3846
      %v3848 = vsel %vm1057, %v3703, 0.0
      %v3849 = vadd.f32 %v3847, %v3848
      %v3850 = vsel %vm1057, %v3711, 0.0
      %v3851 = vadd.f32 %v3849, %v3850
      %v3852 = vsel %vm1057, %v3624, 0.0
      %v3853 = vsel %vm1057, %v3632, 0.0
      %v3854 = vadd.f32 %v3852, %v3853
      %v3855 = vsel %vm1057, %v3640, 0.0
      %v3856 = vadd.f32 %v3854, %v3855
      %v3857 = vsel %vm1057, %v3648, 0.0
      %v3858 = vadd.f32 %v3856, %v3857
      %v3859 = vsel %vm1057, %v3656, 0.0
      %v3860 = vadd.f32 %v3858, %v3859
      %v3861 = vsel %vm1057, %v3664, 0.0
      %v3862 = vadd.f32 %v3860, %v3861
      %v3863 = vsel %vm1057, %v3672, 0.0
      %v3864 = vadd.f32 %v3862, %v3863
      %v3865 = vsel %vm1057, %v3680, 0.0
      %v3866 = vadd.f32 %v3864, %v3865
      %v3867 = vsel %vm1057, %v3688, 0.0
      %v3868 = vadd.f32 %v3866, %v3867
      %v3869 = vsel %vm1057, %v3696, 0.0
      %v3870 = vadd.f32 %v3868, %v3869
      %v3871 = vsel %vm1057, %v3704, 0.0
      %v3872 = vadd.f32 %v3870, %v3871
      %v3873 = vsel %vm1057, %v3712, 0.0
      %v3874 = vadd.f32 %v3872, %v3873
      %v3875 = vsel %vm1057, %v3625, 0.0
      %v3876 = vsel %vm1057, %v3633, 0.0
      %v3877 = vadd.f32 %v3875, %v3876
      %v3878 = vsel %vm1057, %v3641, 0.0
      %v3879 = vadd.f32 %v3877, %v3878
      %v3880 = vsel %vm1057, %v3649, 0.0
      %v3881 = vadd.f32 %v3879, %v3880
      %v3882 = vsel %vm1057, %v3657, 0.0
      %v3883 = vadd.f32 %v3881, %v3882
      %v3884 = vsel %vm1057, %v3665, 0.0
      %v3885 = vadd.f32 %v3883, %v3884
      %v3886 = vsel %vm1057, %v3673, 0.0
      %v3887 = vadd.f32 %v3885, %v3886
      %v3888 = vsel %vm1057, %v3681, 0.0
      %v3889 = vadd.f32 %v3887, %v3888
      %v3890 = vsel %vm1057, %v3689, 0.0
      %v3891 = vadd.f32 %v3889, %v3890
      %v3892 = vsel %vm1057, %v3697, 0.0
      %v3893 = vadd.f32 %v3891, %v3892
      %v3894 = vsel %vm1057, %v3705, 0.0
      %v3895 = vadd.f32 %v3893, %v3894
      %v3896 = vsel %vm1057, %v3713, 0.0
      %v3897 = vadd.f32 %v3895, %v3896
      %v3898 = vpack.c.bf16 %v3759, %v3736
      %v3899 = vpack.c.bf16 %v3805, %v3782
      %v3900 = vpack.c.bf16 %v3851, %v3828
      %v3901 = vpack.c.bf16 %v3897, %v3874
      %v3902 = vld [vmem:[%s3] sm:$0xf]
      %v3903 = vld [vmem:[%s3 + $0x4] sm:$0xf]
      %v3904 = vld [vmem:[%s3 + $0x8] sm:$0xf]
      %v3905 = vld [vmem:[%s3 + $0xc] sm:$0xf]
      %v3906 = vld [vmem:[%s3 + $0x10] sm:$0xf]
      %v3907 = vld [vmem:[%s3 + $0x14] sm:$0xf]
      %v3908 = vld [vmem:[%s3 + $0x18] sm:$0xf]
      %v3909 = vld [vmem:[%s3 + $0x1c] sm:$0xf]
      %v3910 = vld [vmem:[%s3 + $0x20] sm:$0xf]
      %v3911 = vld [vmem:[%s3 + $0x24] sm:$0xf]
      %v3912 = vld [vmem:[%s3 + $0x28] sm:$0xf]
      %v3913 = vld [vmem:[%s3 + $0x2c] sm:$0xf]
      %v3914 = vlaneseq
      %v3915 = vshrl.u32 %v3914, 7
      %v3916 = vsub.s32 4, %v3915
      %v3917 = vrot.slane %v361, %v3916
      %v3930 = vunpack.c.l.b16 %v3902
      %v3931 = vunpack.c.l.b16 %v3903
      %v3932 = vunpack.c.l.b16 %v3904
      %v3933 = vunpack.c.l.b16 %v3905
      %v3934 = vunpack.c.l.b16 %v3906
      %v3935 = vunpack.c.l.b16 %v3907
      %v3936 = vunpack.c.l.b16 %v3908
      %v3937 = vunpack.c.l.b16 %v3909
      %v3938 = vunpack.c.l.b16 %v3910
      %v3939 = vunpack.c.l.b16 %v3911
      %v3940 = vunpack.c.l.b16 %v3912
      %v3941 = vunpack.c.l.b16 %v3913
      %v3942 = vpack.c.b16 %v3931, %v3930
      %v3943 = vpack.c.b16 %v3933, %v3932
      %v3944 = vpack.c.b16 %v3935, %v3934
      %v3945 = vpack.c.b16 %v3937, %v3936
      %v3946 = vpack.c.b16 %v3939, %v3938
      %v3947 = vpack.c.b16 %v3941, %v3940
      %v3955 = vsel %vm1057, %v3898, 0
      %v3958 = vsel %vm1057, %v3899, 0
      %v3961 = vsel %vm1057, %v3900, 0
      %v3964 = vsel %vm1057, %v3901, 0
      %3966 = vmatprep.subr.bf16.mxu0 0
      %3967 = vmatpush1.bf16.msra.mxu0 %v3942
      %3968 = vmatprep.subr.bf16.mxu0 0
      %3969 = vmatpush1.bf16.msra.mxu0 %v3943
      %3970 = vmatprep.subr.bf16.mxu0 0
      %3971 = vmatpush1.bf16.msra.mxu0 %v3944
      %3972 = vmatprep.subr.bf16.mxu0 0
      %3973 = vmatpush1.bf16.msra.mxu0 %v3945
      %3974 = vmatprep.subr.bf16.mxu0 0
      %3975 = vmatpush1.bf16.msra.mxu0 %v3946
      %3976 = vmatprep.subr.bf16.mxu0 0
      %3977 = vmatpush1.bf16.msra.mxu0 %v3947
      %3978 = vmatprep.subr.bf16.mxu0 0
      %3979 = vmatpush1.bf16.msra.mxu0 0
      %3980 = vmatprep.subr.bf16.mxu0 0
      %3981 = vmatpush1.bf16.msra.mxu0 0
      %3982 = vmatprep.subr.bf16.mxu0 0
      %3983 = vmatpush1.bf16.msra.mxu0 0
      %3984 = vmatprep.subr.bf16.mxu0 0
      %3985 = vmatpush1.bf16.msra.mxu0 0
      %3986 = vmatprep.subr.bf16.mxu0 0
      %3987 = vmatpush1.bf16.msra.mxu0 0
      %3988 = vmatprep.subr.bf16.mxu0 0
      %3989 = vmatpush1.bf16.msra.mxu0 0
      %3990 = vmatprep.subr.bf16.mxu0 0
      %3991 = vmatpush1.bf16.msra.mxu0 0
      %3992 = vmatprep.subr.bf16.mxu0 0
      %3993 = vmatpush1.bf16.msra.mxu0 0
      %3994 = vmatprep.subr.bf16.mxu0 0
      %3995 = vmatpush1.bf16.msra.mxu0 0
      %3996 = vmatprep.subr.bf16.mxu0 0
      %3997 = vmatpush1.bf16.msra.mxu0 0
      %3998 = vmatprep.mubr.bf16.mxu0 0
      %3999 = vmatmul.mubr.bf16.gmra.mrb[0].mxu0 %v3955
      %v4000 = vpop.f32.mrb[0].mxu0
      %v4001 = vadd.f32 %v3917, %v4000
      %v4002 = vpop.f32.mrb[0].mxu0
      %v4003 = vpop.f32.mrb[0].mxu0
      %v4004 = vadd.f32 %v3917, %v4003
      %v4005 = vpop.f32.mrb[0].mxu0
      %4006 = vmatprep.mubr.bf16.mxu0 0
      %4007 = vmatmul.mubr.bf16.gmra.mrb[0].mxu0 %v3958
      %v4008 = vpop.f32.mrb[0].mxu0
      %v4009 = vadd.f32 %v3917, %v4008
      %v4010 = vpop.f32.mrb[0].mxu0
      %v4011 = vpop.f32.mrb[0].mxu0
      %v4012 = vadd.f32 %v3917, %v4011
      %v4013 = vpop.f32.mrb[0].mxu0
      %4014 = vmatprep.mubr.bf16.mxu0 0
      %4015 = vmatmul.mubr.bf16.gmra.mrb[0].mxu0 %v3961
      %v4016 = vpop.f32.mrb[0].mxu0
      %v4017 = vadd.f32 %v3917, %v4016
      %v4018 = vpop.f32.mrb[0].mxu0
      %v4019 = vpop.f32.mrb[0].mxu0
      %v4020 = vadd.f32 %v3917, %v4019
      %v4021 = vpop.f32.mrb[0].mxu0
      %4022 = vmatprep.mubr.bf16.mxu0 0
      %4023 = vmatmul.mubr.bf16.gmra.mrb[0].mxu0 %v3964
      %v4024 = vpop.f32.mrb[0].mxu0
      %v4025 = vadd.f32 %v3917, %v4024
      %v4026 = vpop.f32.mrb[0].mxu0
      %v4027 = vpop.f32.mrb[0].mxu0
      %v4028 = vadd.f32 %v3917, %v4027
      %v4029 = vpop.f32.mrb[0].mxu0
      %4030 = vdwg.mxu0
      %v4031 = vadd.f32 %v4001, %v382
      %v4032 = vadd.f32 %v4004, %v383
      %v4033 = vadd.f32 %v4009, %v384
      %v4034 = vadd.f32 %v4012, %v385
      %v4035 = vadd.f32 %v4017, %v386
      %v4036 = vadd.f32 %v4020, %v387
      %v4037 = vadd.f32 %v4025, %v388
      %v4038 = vadd.f32 %v4028, %v389
      %v4039 = vsel %vm398, %v4031, 0.0
      %4040 = vadd.xlane.f32.xlu0 %v4039
      %v4041 = vpop.xlane.xlu0 %4040
      %v4042 = vsel %vm398, %v4032, 0.0
      %4043 = vadd.xlane.f32.xlu0 %v4042
      %v4044 = vpop.xlane.xlu0 %4043
      %v4045 = vsel %vm398, %v4033, 0.0
      %4046 = vadd.xlane.f32.xlu0 %v4045
      %v4047 = vpop.xlane.xlu0 %4046
      %v4048 = vsel %vm398, %v4034, 0.0
      %4049 = vadd.xlane.f32.xlu0 %v4048
      %v4050 = vpop.xlane.xlu0 %4049
      %v4051 = vsel %vm398, %v4035, 0.0
      %4052 = vadd.xlane.f32.xlu0 %v4051
      %v4053 = vpop.xlane.xlu0 %4052
      %v4054 = vsel %vm398, %v4036, 0.0
      %4055 = vadd.xlane.f32.xlu0 %v4054
      %v4056 = vpop.xlane.xlu0 %4055
      %v4057 = vsel %vm398, %v4037, 0.0
      %4058 = vadd.xlane.f32.xlu0 %v4057
      %v4059 = vpop.xlane.xlu0 %4058
      %v4060 = vsel %vm398, %v4038, 0.0
      %4061 = vadd.xlane.f32.xlu0 %v4060
      %v4062 = vpop.xlane.xlu0 %4061
      %v4063 = vmul.f32 %v4041, %v423
      %v4064 = vmul.f32 %v4044, %v423
      %v4065 = vmul.f32 %v4047, %v423
      %v4066 = vmul.f32 %v4050, %v423
      %v4067 = vmul.f32 %v4053, %v423
      %v4068 = vmul.f32 %v4056, %v423
      %v4069 = vmul.f32 %v4059, %v423
      %v4070 = vmul.f32 %v4062, %v423
      %v4071 = vsub.f32 %v4031, %v4063
      %v4072 = vsub.f32 %v4032, %v4064
      %v4073 = vsub.f32 %v4033, %v4065
      %v4074 = vsub.f32 %v4034, %v4066
      %v4075 = vsub.f32 %v4035, %v4067
      %v4076 = vsub.f32 %v4036, %v4068
      %v4077 = vsub.f32 %v4037, %v4069
      %v4078 = vsub.f32 %v4038, %v4070
      %v4079 = vmul.f32 %v4071, %v4071
      %v4080 = vmul.f32 %v4072, %v4072
      %v4081 = vmul.f32 %v4073, %v4073
      %v4082 = vmul.f32 %v4074, %v4074
      %v4083 = vmul.f32 %v4075, %v4075
      %v4084 = vmul.f32 %v4076, %v4076
      %v4085 = vmul.f32 %v4077, %v4077
      %v4086 = vmul.f32 %v4078, %v4078
      %v4087 = vsel %vm398, %v4079, 0.0
      %4088 = vadd.xlane.f32.xlu0 %v4087
      %v4089 = vpop.xlane.xlu0 %4088
      %v4090 = vsel %vm398, %v4080, 0.0
      %4091 = vadd.xlane.f32.xlu0 %v4090
      %v4092 = vpop.xlane.xlu0 %4091
      %v4093 = vsel %vm398, %v4081, 0.0
      %4094 = vadd.xlane.f32.xlu0 %v4093
      %v4095 = vpop.xlane.xlu0 %4094
      %v4096 = vsel %vm398, %v4082, 0.0
      %4097 = vadd.xlane.f32.xlu0 %v4096
      %v4098 = vpop.xlane.xlu0 %4097
      %v4099 = vsel %vm398, %v4083, 0.0
      %4100 = vadd.xlane.f32.xlu0 %v4099
      %v4101 = vpop.xlane.xlu0 %4100
      %v4102 = vsel %vm398, %v4084, 0.0
      %4103 = vadd.xlane.f32.xlu0 %v4102
      %v4104 = vpop.xlane.xlu0 %4103
      %v4105 = vsel %vm398, %v4085, 0.0
      %4106 = vadd.xlane.f32.xlu0 %v4105
      %v4107 = vpop.xlane.xlu0 %4106
      %v4108 = vsel %vm398, %v4086, 0.0
      %4109 = vadd.xlane.f32.xlu0 %v4108
      %v4110 = vpop.xlane.xlu0 %4109
      %v4111 = vmul.f32 %v4089, %v423
      %v4112 = vmul.f32 %v4092, %v423
      %v4113 = vmul.f32 %v4095, %v423
      %v4114 = vmul.f32 %v4098, %v423
      %v4115 = vmul.f32 %v4101, %v423
      %v4116 = vmul.f32 %v4104, %v423
      %v4117 = vmul.f32 %v4107, %v423
      %v4118 = vmul.f32 %v4110, %v423
      %v4119 = vadd.f32 %v4111, 1e-06
      %v4120 = vadd.f32 %v4112, 1e-06
      %v4121 = vadd.f32 %v4113, 1e-06
      %v4122 = vadd.f32 %v4114, 1e-06
      %v4123 = vadd.f32 %v4115, 1e-06
      %v4124 = vadd.f32 %v4116, 1e-06
      %v4125 = vadd.f32 %v4117, 1e-06
      %v4126 = vadd.f32 %v4118, 1e-06
      %v4127 = vrsqrt.pop %v4119
      %v4128 = vrsqrt.pop %v4120
      %v4129 = vrsqrt.pop %v4121
      %v4130 = vrsqrt.pop %v4122
      %v4131 = vrsqrt.pop %v4123
      %v4132 = vrsqrt.pop %v4124
      %v4133 = vrsqrt.pop %v4125
      %v4134 = vrsqrt.pop %v4126
      %v4135 = vmul.f32 %v4071, %v4127
      %v4136 = vmul.f32 %v4072, %v4128
      %v4137 = vmul.f32 %v4073, %v4129
      %v4138 = vmul.f32 %v4074, %v4130
      %v4139 = vmul.f32 %v4075, %v4131
      %v4140 = vmul.f32 %v4076, %v4132
      %v4141 = vmul.f32 %v4077, %v4133
      %v4142 = vmul.f32 %v4078, %v4134
      %v4143 = vlaneseq
      %v4144 = vshrl.u32 %v4143, 7
      %v4145 = vsub.s32 2, %v4144
      %v4146 = vrot.slane %v361, %v4145
      %v4147 = vmul.f32 %v4135, %v4146
      %v4148 = vmul.f32 %v4136, %v4146
      %v4149 = vmul.f32 %v4137, %v4146
      %v4150 = vmul.f32 %v4138, %v4146
      %v4151 = vmul.f32 %v4139, %v4146
      %v4152 = vmul.f32 %v4140, %v4146
      %v4153 = vmul.f32 %v4141, %v4146
      %v4154 = vmul.f32 %v4142, %v4146
      %v4155 = vlaneseq
      %v4156 = vshrl.u32 %v4155, 7
      %v4157 = vsub.s32 3, %v4156
      %v4158 = vrot.slane %v361, %v4157
      %v4159 = vadd.f32 %v4147, %v4158
      %v4160 = vadd.f32 %v4148, %v4158
      %v4161 = vadd.f32 %v4149, %v4158
      %v4162 = vadd.f32 %v4150, %v4158
      %v4163 = vadd.f32 %v4151, %v4158
      %v4164 = vadd.f32 %v4152, %v4158
      %v4165 = vadd.f32 %v4153, %v4158
      %v4166 = vadd.f32 %v4154, %v4158
      %v4167 = vpack.c.bf16 %v4160, %v4159
      %v4168 = vpack.c.bf16 %v4162, %v4161
      %v4169 = vpack.c.bf16 %v4164, %v4163
      %v4170 = vpack.c.bf16 %v4166, %v4165
      %v4171 = vld [vmem:[%s4] sm:$0xf]
      %v4172 = vld [vmem:[%s4 + $0x4] sm:$0xf]
      %v4173 = vld [vmem:[%s4 + $0x8] sm:$0xf]
      %v4174 = vld [vmem:[%s4 + $0xc] sm:$0xf]
      %v4175 = vld [vmem:[%s7] sm:$0x1]
      %v4177 = vlaneseq
      %v4178 = vshrl.u32 %v4177, 7
      %v4179 = vsub.s32 0, %v4178
      %v4180 = vrot.slane %v4175, %v4179
      %v4186 = vunpack.c.l.b16 %v4171
      %v4187 = vunpack.c.l.b16 %v4172
      %v4188 = vunpack.c.l.b16 %v4173
      %v4189 = vunpack.c.l.b16 %v4174
      %v4190 = vpack.c.b16 %v4187, %v4186
      %v4191 = vpack.c.b16 %v4189, %v4188
      %v4195 = vsel %vm398, %v4167, 0
      %v4198 = vsel %vm398, %v4168, 0
      %v4201 = vsel %vm398, %v4169, 0
      %v4204 = vsel %vm398, %v4170, 0
      %4206 = vmatprep.subr.bf16.mxu0 0
      %4207 = vmatpush1.bf16.msra.mxu0 %v4190
      %4208 = vmatprep.subr.bf16.mxu0 0
      %4209 = vmatpush1.bf16.msra.mxu0 %v4191
      %4210 = vmatprep.subr.bf16.mxu0 0
      %4211 = vmatpush1.bf16.msra.mxu0 0
      %4212 = vmatprep.subr.bf16.mxu0 0
      %4213 = vmatpush1.bf16.msra.mxu0 0
      %4214 = vmatprep.subr.bf16.mxu0 0
      %4215 = vmatpush1.bf16.msra.mxu0 0
      %4216 = vmatprep.subr.bf16.mxu0 0
      %4217 = vmatpush1.bf16.msra.mxu0 0
      %4218 = vmatprep.subr.bf16.mxu0 0
      %4219 = vmatpush1.bf16.msra.mxu0 0
      %4220 = vmatprep.subr.bf16.mxu0 0
      %4221 = vmatpush1.bf16.msra.mxu0 0
      %4222 = vmatprep.subr.bf16.mxu0 0
      %4223 = vmatpush1.bf16.msra.mxu0 0
      %4224 = vmatprep.subr.bf16.mxu0 0
      %4225 = vmatpush1.bf16.msra.mxu0 0
      %4226 = vmatprep.subr.bf16.mxu0 0
      %4227 = vmatpush1.bf16.msra.mxu0 0
      %4228 = vmatprep.subr.bf16.mxu0 0
      %4229 = vmatpush1.bf16.msra.mxu0 0
      %4230 = vmatprep.subr.bf16.mxu0 0
      %4231 = vmatpush1.bf16.msra.mxu0 0
      %4232 = vmatprep.subr.bf16.mxu0 0
      %4233 = vmatpush1.bf16.msra.mxu0 0
      %4234 = vmatprep.subr.bf16.mxu0 0
      %4235 = vmatpush1.bf16.msra.mxu0 0
      %4236 = vmatprep.subr.bf16.mxu0 0
      %4237 = vmatpush1.bf16.msra.mxu0 0
      %4238 = vmatprep.mubr.bf16.mxu0 0
      %4239 = vmatmul.mubr.bf16.gmra.mrb[0].mxu0 %v4195
      %v4240 = vpop.f32.mrb[0].mxu0
      %v4241 = vadd.f32 %v4180, %v4240
      %v4242 = vpop.f32.mrb[0].mxu0
      %v4243 = vpop.f32.mrb[0].mxu0
      %v4244 = vadd.f32 %v4180, %v4243
      %v4245 = vpop.f32.mrb[0].mxu0
      %4246 = vmatprep.mubr.bf16.mxu0 0
      %4247 = vmatmul.mubr.bf16.gmra.mrb[0].mxu0 %v4198
      %v4248 = vpop.f32.mrb[0].mxu0
      %v4249 = vadd.f32 %v4180, %v4248
      %v4250 = vpop.f32.mrb[0].mxu0
      %v4251 = vpop.f32.mrb[0].mxu0
      %v4252 = vadd.f32 %v4180, %v4251
      %v4253 = vpop.f32.mrb[0].mxu0
      %4254 = vmatprep.mubr.bf16.mxu0 0
      %4255 = vmatmul.mubr.bf16.gmra.mrb[0].mxu0 %v4201
      %v4256 = vpop.f32.mrb[0].mxu0
      %v4257 = vadd.f32 %v4180, %v4256
      %v4258 = vpop.f32.mrb[0].mxu0
      %v4259 = vpop.f32.mrb[0].mxu0
      %v4260 = vadd.f32 %v4180, %v4259
      %v4261 = vpop.f32.mrb[0].mxu0
      %4262 = vmatprep.mubr.bf16.mxu0 0
      %4263 = vmatmul.mubr.bf16.gmra.mrb[0].mxu0 %v4204
      %v4264 = vpop.f32.mrb[0].mxu0
      %v4265 = vadd.f32 %v4180, %v4264
      %v4266 = vpop.f32.mrb[0].mxu0
      %v4267 = vpop.f32.mrb[0].mxu0
      %v4268 = vadd.f32 %v4180, %v4267
      %v4269 = vpop.f32.mrb[0].mxu0
      %4270 = vdwg.mxu0
      %v4271 = vmul.f32 %v4241, %v4241
      %v4272 = vmul.f32 %v4244, %v4244
      %v4273 = vmul.f32 %v4249, %v4249
      %v4274 = vmul.f32 %v4252, %v4252
      %v4275 = vmul.f32 %v4257, %v4257
      %v4276 = vmul.f32 %v4260, %v4260
      %v4277 = vmul.f32 %v4265, %v4265
      %v4278 = vmul.f32 %v4268, %v4268
      %v4279 = vmul.f32 %v4241, %v4271
      %v4280 = vmul.f32 %v4244, %v4272
      %v4281 = vmul.f32 %v4249, %v4273
      %v4282 = vmul.f32 %v4252, %v4274
      %v4283 = vmul.f32 %v4257, %v4275
      %v4284 = vmul.f32 %v4260, %v4276
      %v4285 = vmul.f32 %v4265, %v4277
      %v4286 = vmul.f32 %v4268, %v4278
      %v4287 = vmul.f32 %v4279, 0.044715
      %v4288 = vmul.f32 %v4280, 0.044715
      %v4289 = vmul.f32 %v4281, 0.044715
      %v4290 = vmul.f32 %v4282, 0.044715
      %v4291 = vmul.f32 %v4283, 0.044715
      %v4292 = vmul.f32 %v4284, 0.044715
      %v4293 = vmul.f32 %v4285, 0.044715
      %v4294 = vmul.f32 %v4286, 0.044715
      %v4295 = vadd.f32 %v4241, %v4287
      %v4296 = vadd.f32 %v4244, %v4288
      %v4297 = vadd.f32 %v4249, %v4289
      %v4298 = vadd.f32 %v4252, %v4290
      %v4299 = vadd.f32 %v4257, %v4291
      %v4300 = vadd.f32 %v4260, %v4292
      %v4301 = vadd.f32 %v4265, %v4293
      %v4302 = vadd.f32 %v4268, %v4294
      %v4303 = vmul.f32 %v4295, 0.7978846
      %v4304 = vmul.f32 %v4296, 0.7978846
      %v4305 = vmul.f32 %v4297, 0.7978846
      %v4306 = vmul.f32 %v4298, 0.7978846
      %v4307 = vmul.f32 %v4299, 0.7978846
      %v4308 = vmul.f32 %v4300, 0.7978846
      %v4309 = vmul.f32 %v4301, 0.7978846
      %v4310 = vmul.f32 %v4302, 0.7978846
      %v4311 = vtanh.pop %v4303
      %v4312 = vtanh.pop %v4304
      %v4313 = vtanh.pop %v4305
      %v4314 = vtanh.pop %v4306
      %v4315 = vtanh.pop %v4307
      %v4316 = vtanh.pop %v4308
      %v4317 = vtanh.pop %v4309
      %v4318 = vtanh.pop %v4310
      %v4319 = vadd.f32 %v4311, 1.0
      %v4320 = vadd.f32 %v4312, 1.0
      %v4321 = vadd.f32 %v4313, 1.0
      %v4322 = vadd.f32 %v4314, 1.0
      %v4323 = vadd.f32 %v4315, 1.0
      %v4324 = vadd.f32 %v4316, 1.0
      %v4325 = vadd.f32 %v4317, 1.0
      %v4326 = vadd.f32 %v4318, 1.0
      %v4327 = vmul.f32 %v4319, 0.5
      %v4328 = vmul.f32 %v4320, 0.5
      %v4329 = vmul.f32 %v4321, 0.5
      %v4330 = vmul.f32 %v4322, 0.5
      %v4331 = vmul.f32 %v4323, 0.5
      %v4332 = vmul.f32 %v4324, 0.5
      %v4333 = vmul.f32 %v4325, 0.5
      %v4334 = vmul.f32 %v4326, 0.5
      %v4335 = vmul.f32 %v4241, %v4327
      %v4336 = vmul.f32 %v4244, %v4328
      %v4337 = vmul.f32 %v4249, %v4329
      %v4338 = vmul.f32 %v4252, %v4330
      %v4339 = vmul.f32 %v4257, %v4331
      %v4340 = vmul.f32 %v4260, %v4332
      %v4341 = vmul.f32 %v4265, %v4333
      %v4342 = vmul.f32 %v4268, %v4334
      %v4343 = vpack.c.bf16 %v4336, %v4335
      %v4344 = vpack.c.bf16 %v4338, %v4337
      %v4345 = vpack.c.bf16 %v4340, %v4339
      %v4346 = vpack.c.bf16 %v4342, %v4341
      %v4347 = vld [vmem:[%s5] sm:$0xf]
      %v4348 = vld [vmem:[%s5 + $0x4] sm:$0xf]
      %v4349 = vld [vmem:[%s5 + $0x8] sm:$0xf]
      %v4350 = vld [vmem:[%s5 + $0xc] sm:$0xf]
      %v4351 = vld [vmem:[%s5 + $0x10] sm:$0xf]
      %v4352 = vld [vmem:[%s5 + $0x14] sm:$0xf]
      %v4353 = vld [vmem:[%s5 + $0x18] sm:$0xf]
      %v4354 = vld [vmem:[%s5 + $0x1c] sm:$0xf]
      %v4355 = vlaneseq
      %v4356 = vshrl.u32 %v4355, 7
      %v4357 = vsub.s32 5, %v4356
      %v4358 = vrot.slane %v361, %v4357
      %v4367 = vunpack.c.l.b16 %v4347
      %v4368 = vunpack.c.l.b16 %v4348
      %v4369 = vunpack.c.l.b16 %v4349
      %v4370 = vunpack.c.l.b16 %v4350
      %v4371 = vunpack.c.l.b16 %v4351
      %v4372 = vunpack.c.l.b16 %v4352
      %v4373 = vunpack.c.l.b16 %v4353
      %v4374 = vunpack.c.l.b16 %v4354
      %v4375 = vpack.c.b16 %v4368, %v4367
      %v4376 = vpack.c.b16 %v4370, %v4369
      %v4377 = vpack.c.b16 %v4372, %v4371
      %v4378 = vpack.c.b16 %v4374, %v4373
      %v4384 = vsel %vm1919, %v4343, 0
      %v4387 = vsel %vm1919, %v4344, 0
      %v4390 = vsel %vm1919, %v4345, 0
      %v4393 = vsel %vm1919, %v4346, 0
      %4395 = vmatprep.subr.bf16.mxu0 0
      %4396 = vmatpush1.bf16.msra.mxu0 %v4375
      %4397 = vmatprep.subr.bf16.mxu0 0
      %4398 = vmatpush1.bf16.msra.mxu0 %v4376
      %4399 = vmatprep.subr.bf16.mxu0 0
      %4400 = vmatpush1.bf16.msra.mxu0 %v4377
      %4401 = vmatprep.subr.bf16.mxu0 0
      %4402 = vmatpush1.bf16.msra.mxu0 %v4378
      %4403 = vmatprep.subr.bf16.mxu0 0
      %4404 = vmatpush1.bf16.msra.mxu0 0
      %4405 = vmatprep.subr.bf16.mxu0 0
      %4406 = vmatpush1.bf16.msra.mxu0 0
      %4407 = vmatprep.subr.bf16.mxu0 0
      %4408 = vmatpush1.bf16.msra.mxu0 0
      %4409 = vmatprep.subr.bf16.mxu0 0
      %4410 = vmatpush1.bf16.msra.mxu0 0
      %4411 = vmatprep.subr.bf16.mxu0 0
      %4412 = vmatpush1.bf16.msra.mxu0 0
      %4413 = vmatprep.subr.bf16.mxu0 0
      %4414 = vmatpush1.bf16.msra.mxu0 0
      %4415 = vmatprep.subr.bf16.mxu0 0
      %4416 = vmatpush1.bf16.msra.mxu0 0
      %4417 = vmatprep.subr.bf16.mxu0 0
      %4418 = vmatpush1.bf16.msra.mxu0 0
      %4419 = vmatprep.subr.bf16.mxu0 0
      %4420 = vmatpush1.bf16.msra.mxu0 0
      %4421 = vmatprep.subr.bf16.mxu0 0
      %4422 = vmatpush1.bf16.msra.mxu0 0
      %4423 = vmatprep.subr.bf16.mxu0 0
      %4424 = vmatpush1.bf16.msra.mxu0 0
      %4425 = vmatprep.subr.bf16.mxu0 0
      %4426 = vmatpush1.bf16.msra.mxu0 0
      %4427 = vmatprep.mubr.bf16.mxu0 0
      %4428 = vmatmul.mubr.bf16.gmra.mrb[0].mxu0 %v4384
      %v4429 = vpop.f32.mrb[0].mxu0
      %v4430 = vadd.f32 %v4358, %v4429
      %v4431 = vpop.f32.mrb[0].mxu0
      %v4432 = vpop.f32.mrb[0].mxu0
      %v4433 = vadd.f32 %v4358, %v4432
      %v4434 = vpop.f32.mrb[0].mxu0
      %4435 = vmatprep.mubr.bf16.mxu0 0
      %4436 = vmatmul.mubr.bf16.gmra.mrb[0].mxu0 %v4387
      %v4437 = vpop.f32.mrb[0].mxu0
      %v4438 = vadd.f32 %v4358, %v4437
      %v4439 = vpop.f32.mrb[0].mxu0
      %v4440 = vpop.f32.mrb[0].mxu0
      %v4441 = vadd.f32 %v4358, %v4440
      %v4442 = vpop.f32.mrb[0].mxu0
      %4443 = vmatprep.mubr.bf16.mxu0 0
      %4444 = vmatmul.mubr.bf16.gmra.mrb[0].mxu0 %v4390
      %v4445 = vpop.f32.mrb[0].mxu0
      %v4446 = vadd.f32 %v4358, %v4445
      %v4447 = vpop.f32.mrb[0].mxu0
      %v4448 = vpop.f32.mrb[0].mxu0
      %v4449 = vadd.f32 %v4358, %v4448
      %v4450 = vpop.f32.mrb[0].mxu0
      %4451 = vmatprep.mubr.bf16.mxu0 0
      %4452 = vmatmul.mubr.bf16.gmra.mrb[0].mxu0 %v4393
      %v4453 = vpop.f32.mrb[0].mxu0
      %v4454 = vadd.f32 %v4358, %v4453
      %v4455 = vpop.f32.mrb[0].mxu0
      %v4456 = vpop.f32.mrb[0].mxu0
      %v4457 = vadd.f32 %v4358, %v4456
      %v4458 = vpop.f32.mrb[0].mxu0
      %4459 = vdwg.mxu0
      %v4460 = vadd.f32 %v4430, %v4031
      %v4461 = vadd.f32 %v4433, %v4032
      %v4462 = vadd.f32 %v4438, %v4033
      %v4463 = vadd.f32 %v4441, %v4034
      %v4464 = vadd.f32 %v4446, %v4035
      %v4465 = vadd.f32 %v4449, %v4036
      %v4466 = vadd.f32 %v4454, %v4037
      %v4467 = vadd.f32 %v4457, %v4038
      %4468 = vxpose.xlu0.b32.start [1/16] %v4460, 128
      %4469 = vxpose.xlu0.b32.cont [2/16] %v4461, 128
      %4470 = vxpose.xlu0.b32.cont [3/16] %v4462, 128
      %4471 = vxpose.xlu0.b32.cont [4/16] %v4463, 128
      %4472 = vxpose.xlu0.b32.cont [5/16] %v4464, 128
      %4473 = vxpose.xlu0.b32.cont [6/16] %v4465, 128
      %4474 = vxpose.xlu0.b32.cont [7/16] %v4466, 128
      %4475 = vxpose.xlu0.b32.cont [8/16] %v4467, 128
      %4476 = vxpose.xlu0.b32.cont [9/16] 0.0, 128
      %4477 = vxpose.xlu0.b32.cont [10/16] 0.0, 128
      %4478 = vxpose.xlu0.b32.cont [11/16] 0.0, 128
      %4479 = vxpose.xlu0.b32.cont [12/16] 0.0, 128
      %4480 = vxpose.xlu0.b32.cont [13/16] 0.0, 128
      %4481 = vxpose.xlu0.b32.cont [14/16] 0.0, 128
      %4482 = vxpose.xlu0.b32.cont [15/16] 0.0, 128
      %4483 = vxpose.xlu0.b32.end [16/16] 0.0, 128
      %v4484 = vpop.trf.xlu0
      %v4485 = vpop.trf.xlu0
      %v4486 = vpop.trf.xlu0
      %v4487 = vpop.trf.xlu0
      %v4488 = vpop.trf.xlu0
      %v4489 = vpop.trf.xlu0
      %v4490 = vpop.trf.xlu0
      %v4491 = vpop.trf.xlu0
      %v4492 = vpop.trf.xlu0
      %v4493 = vpop.trf.xlu0
      %v4494 = vpop.trf.xlu0
      %v4495 = vpop.trf.xlu0
      %v4496 = vpop.trf.xlu0
      %v4497 = vpop.trf.xlu0
      %v4498 = vpop.trf.xlu0
      %v4499 = vpop.trf.xlu0
      %4500 = vst.msk [vmem:[%s359] sm:$0xff] %vm1919, %v4484
      %4501 = vst.msk [vmem:[%s359 + $0x8] sm:$0xff] %vm1919, %v4485
      %4502 = vst.msk [vmem:[%s359 + $0x10] sm:$0xff] %vm1919, %v4486
      %4503 = vst.msk [vmem:[%s359 + $0x18] sm:$0xff] %vm1919, %v4487
      %p4504 = scmp.lt.s32.totalorder %s21, 1
      %s4505 = scalar_select %p4504, %s21, 1
      %s4506 = smul.addr %s4505, 4
      %s4507 = smul.addr %s4506, 8
      %s4508 = scalar_lea.vmem %s10, %s4507
      // Predicated region
      $region61: #{_lambda_.1} parent=59 // pred_check
        %p4509 = pneg %p254
      $region62: #{_lambda_.1} parent=59 // pred_check_branch
        %4511 = sbr.rel (%p4509) target = $region64
      $region63: #{_lambda_.1} parent=59 // pred_region
        _
      $region64: #{_lambda_.1} parent=59 // pred_fallthru
        _
    $region60: #{_lambda_.1} parent=5 // pred_fallthru
      _
    %p4512 = scmp.le.s32.totalorder 2, %s16
    // Predicated region
    $region65: #{_lambda_.1} parent=5 // pred_check
      %p4513 = pneg %p4512
    $region66: #{_lambda_.1} parent=5 // pred_check_branch
      %4515 = sbr.rel (%p4513) target = $region68
    $region67: #{_lambda_.1} parent=5 // pred_region
      %s4516 = ssub.s32 %s16, 2
      // Predicated region
      $region69: #{_lambda_.1} parent=67 // pred_check
        %p4517 = pneg %p260
      $region70: #{_lambda_.1} parent=67 // pred_check_branch
        %4519 = sbr.rel (%p4517) target = $region72
      $region71: #{_lambda_.1} parent=67 // pred_region
        %p4520 = scmp.lt.s32.totalorder %s22, 1
        %s4521 = scalar_select %p4520, %s22, 1
        %s4522 = smul.addr %s4521, 4
        %s4523 = smul.addr %s4522, 8
        %s4524 = scalar_lea.vmem %s10, %s4523
      $region72: #{_lambda_.1} parent=67 // pred_fallthru
        _
    $region68: #{_lambda_.1} parent=5 // pred_fallthru
      _
  $region6: #{_lambda_.1} parent=0 // loop_footer
    %s20 = sadd.s32 1, %s16
  $region7: #{_lambda_.1} parent=0 // loop_footer_branch
    %15 = sbr.rel target = $region3
  $region8: #{_lambda_.1} parent=0 // loop_exit
    _

</llo_original>
